<compile_context>
chip_gen: v7x
topology: tpu7x:2x2x1
jax: 0.10.0
libtpu: 0.0.40
codegen_flags: <defaults>
</compile_context>

<pallas_src>
import math
from functools import partial

import jax
import jax.numpy as jnp
from jax.experimental import pallas as pl
from jax.experimental.pallas import tpu as pltpu

EPS_LN = 1e-12          # espnet LayerNorm eps
MASK_BIAS = -1e9        # additive key-padding mask value


def _layer_norm(x, g, b):
    mu = jnp.mean(x, axis=-1, keepdims=True)
    var = jnp.mean((x - mu) ** 2, axis=-1, keepdims=True)
    return (x - mu) * jax.lax.rsqrt(var + EPS_LN) * g + b


def _block_spec(shape, index_map, buffers=None):
    """BlockSpec helper; optionally requests a specific buffer count."""
    if buffers is None:
        return pl.BlockSpec(shape, index_map)
    try:
        return pl.BlockSpec(shape, index_map, pipeline_mode=pl.Buffered(buffers))
    except (TypeError, AttributeError):          # older API: fall back to default
        return pl.BlockSpec(shape, index_map)


# ---------------------------------------------------------------------------
# Row-tiled dense kernel (conv front-end + embed projection)
# ---------------------------------------------------------------------------

def dense_kernel(x_ref, w_ref, b_ref, o_ref, *, relu):
    y = jnp.dot(x_ref[...], w_ref[...], preferred_element_type=jnp.float32) + b_ref[...]
    if relu:
        y = jnp.maximum(y, 0.0)
    o_ref[...] = y.astype(o_ref.dtype)


def dense_tiled(x, w, b, relu=False, bm=512, out_dtype=jnp.float32):
    """(M,K) @ (K,N) + b with optional ReLU, tiled over M rows.

    x is cast to bf16; w is expected bf16; accumulation in f32, output in
    out_dtype. The weight / bias blocks are grid-invariant -> single-buffered.
    """
    M, K = x.shape
    N = w.shape[1]
    bm = min(bm, ((M + 7) // 8) * 8)          # block rows: multiple of 8
    Mp = ((M + bm - 1) // bm) * bm
    xb = x.astype(jnp.bfloat16)
    if Mp != M:
        xb = jnp.pad(xb, ((0, Mp - M), (0, 0)))
    out = pl.pallas_call(
        partial(dense_kernel, relu=relu),
        grid=(Mp // bm,),
        in_specs=[_block_spec((bm, K), lambda i: (i, 0)),
                  _block_spec((K, N), lambda i: (0, 0), buffers=1),
                  _block_spec((1, N), lambda i: (0, 0), buffers=1)],
        out_specs=pl.BlockSpec((bm, N), lambda i: (i, 0)),
        out_shape=jax.ShapeDtypeStruct((Mp, N), out_dtype),
        compiler_params=pltpu.CompilerParams(dimension_semantics=("parallel",)),
    )(xb, w, b.reshape(1, N).astype(jnp.float32))
    return out[:M]


# ---------------------------------------------------------------------------
# Conv2dSubsampling front-end (3x3 stride-2 conv + ReLU, twice)
# ---------------------------------------------------------------------------

def conv1_patches(x):
    """x: (B, T, W) -> P: (B*Ho, 3*W), P[(b,ho), kh*W + w] = x[b, 2*ho+kh, w]."""
    B, T, W = x.shape
    Ho = (T - 3) // 2 + 1
    rows = [x[:, kh:kh + 2 * Ho:2, :] for kh in range(3)]       # each (B, Ho, W)
    return jnp.concatenate(rows, axis=-1).reshape(B * Ho, 3 * W), Ho


def conv1_as_matmul_weights(w, W, Wo):
    """w: (Cout, 1, 3, 3) -> (3*W, Wo*Cout) matrix folding frequency into lanes.

    Wmat[kh*W + (2*wo + kw), wo*Cout + co] = w[co, 0, kh, kw]
    """
    Cout = w.shape[0]
    w_idx = jnp.arange(W)[:, None, None]                        # (W,1,1)
    wo_idx = jnp.arange(Wo)[None, :, None]                      # (1,Wo,1)
    kw_idx = jnp.arange(3)[None, None, :]                       # (1,1,3)
    sel = (w_idx == 2 * wo_idx + kw_idx).astype(w.dtype)        # (W, Wo, 3)
    wk = jnp.transpose(w[:, 0], (1, 2, 0))                      # (3, 3, Cout)
    wmat = jnp.einsum("wok,hkc->hwoc", sel, wk)                 # (3, W, Wo, Cout)
    return wmat.reshape(3 * W, Wo * Cout)


def _im2col_3x3_s2(x):
    """x: (B, C, H, W) -> (B*Ho*Wo, C*9), flatten order (C, kh, kw)."""
    B, C, H, W = x.shape
    Ho = (H - 3) // 2 + 1
    Wo = (W - 3) // 2 + 1
    cols = []
    for kh in range(3):
        for kw in range(3):
            cols.append(x[:, :, kh:kh + 2 * Ho:2, kw:kw + 2 * Wo:2])   # (B,C,Ho,Wo)
    cols = jnp.stack(cols, axis=-1)                                    # (B,C,Ho,Wo,9)
    cols = jnp.transpose(cols, (0, 2, 3, 1, 4)).reshape(B * Ho * Wo, C * 9)
    return cols, Ho, Wo


def positional_encoding(T, D):
    pos = jnp.arange(T, dtype=jnp.float32)[:, None]
    div = jnp.exp(jnp.arange(0, D, 2, dtype=jnp.float32) * -(math.log(10000.0) / D))
    pe = jnp.zeros((T, D), jnp.float32)
    pe = pe.at[:, 0::2].set(jnp.sin(pos * div))
    pe = pe.at[:, 1::2].set(jnp.cos(pos * div))
    return pe


# ---------------------------------------------------------------------------
# Fused encoder stack kernel: L encoder layers + after_norm
# Grid = (B // bb, L); the (bb, Tp, D) activation is VMEM-resident across L.
# ---------------------------------------------------------------------------

def encoder_stack_kernel(x0_ref, bias_ref,
                         ln1g_ref, ln1b_ref, wqkv_ref, bqkv_ref, wo_ref, bo_ref,
                         ln2g_ref, ln2b_ref, w1_ref, b1_ref, w2_ref, b2_ref,
                         afg_ref, afb_ref, o_ref, *, n_heads, num_layers):
    l = pl.program_id(1)

    # ---- first layer step: seed the resident activation ----
    @pl.when(l == 0)
    def _():
        o_ref[...] = x0_ref[...]

    bb, Tp, D = o_ref.shape
    H = n_heads
    dk = D // H
    M = bb * Tp

    x = o_ref[...].reshape(M, D)                     # (bb*Tp, D) f32, VMEM-resident
    bias = bias_ref[...].reshape(bb, 1, 1, Tp)       # 0 valid / -1e9 masked keys

    # --------------- self-attention sub-layer (pre-norm, residual) ---------------
    xn = _layer_norm(x, ln1g_ref[0], ln1b_ref[0]).astype(jnp.bfloat16)
    qkv = jnp.dot(xn, wqkv_ref[0], preferred_element_type=jnp.float32) + bqkv_ref[0]

    def to_heads(t):                                 # (M, D) -> (bb*H, Tp, dk)
        return (t.reshape(bb, Tp, H, dk)
                 .transpose(0, 2, 1, 3)
                 .reshape(bb * H, Tp, dk)
                 .astype(jnp.bfloat16))

    qh = to_heads(qkv[:, :D])                        # 1/sqrt(dk) folded into wq/bq
    kh = to_heads(qkv[:, D:2 * D])
    vh = to_heads(qkv[:, 2 * D:])

    s = jnp.einsum("nqd,nkd->nqk", qh, kh, preferred_element_type=jnp.float32)
    s = s.reshape(bb, H, Tp, Tp) + bias              # key-padding mask per batch elt
    s = s - jnp.max(s, axis=-1, keepdims=True)
    e = jnp.exp(s)
    p = (e / jnp.sum(e, axis=-1, keepdims=True)).reshape(bb * H, Tp, Tp)

    ctx = jnp.einsum("nqk,nkd->nqd", p.astype(jnp.bfloat16), vh,
                     preferred_element_type=jnp.float32)          # (bb*H, Tp, dk)
    ctx = ctx.reshape(bb, H, Tp, dk).transpose(0, 2, 1, 3).reshape(M, D)

    att = jnp.dot(ctx.astype(jnp.bfloat16), wo_ref[0],
                  preferred_element_type=jnp.float32) + bo_ref[0]
    x = x + att                                      # dropout == identity (eval)

    # --------------- position-wise FFN sub-layer (pre-norm, residual) ---------------
    xn2 = _layer_norm(x, ln2g_ref[0], ln2b_ref[0]).astype(jnp.bfloat16)
    h1 = jnp.maximum(jnp.dot(xn2, w1_ref[0],
                             preferred_element_type=jnp.float32) + b1_ref[0], 0.0)
    ff = jnp.dot(h1.astype(jnp.bfloat16), w2_ref[0],
                 preferred_element_type=jnp.float32) + b2_ref[0]
    x = x + ff

    # ---- single store; fold in the final LayerNorm on the last layer step ----
    @pl.when(l < num_layers - 1)
    def _():
        o_ref[...] = x.reshape(bb, Tp, D)

    @pl.when(l == num_layers - 1)
    def _():
        o_ref[...] = _layer_norm(x, afg_ref[...], afb_ref[...]).reshape(bb, Tp, D)


def encoder_stack(x0, bias, prep, n_heads, batch_block=None):
    B, Tp, D = x0.shape
    L = prep["wqkv"].shape[0]
    FF = prep["w1"].shape[2]
    bb = B if batch_block is None else batch_block
    assert B % bb == 0
    G = B // bb

    per_g = lambda shape: _block_spec(shape, lambda g, l: (g, 0, 0), buffers=1)
    cst2 = lambda shape: _block_spec(shape, lambda g, l: (0, 0), buffers=1)
    per_l = lambda shape: _block_spec(shape, lambda g, l: (l, 0, 0))

    in_specs = [
        per_g((bb, Tp, D)),                                 # x0 (embed + PE, padded)
        per_g((bb, 1, Tp)),                                 # additive mask bias
        per_l((1, 1, D)), per_l((1, 1, D)),                 # ln1 g / b
        per_l((1, D, 3 * D)), per_l((1, 1, 3 * D)),         # wqkv, bqkv
        per_l((1, D, D)), per_l((1, 1, D)),                 # wo, bo
        per_l((1, 1, D)), per_l((1, 1, D)),                 # ln2 g / b
        per_l((1, D, FF)), per_l((1, 1, FF)),               # w1, b1
        per_l((1, FF, D)), per_l((1, 1, D)),                # w2, b2
        cst2((1, D)), cst2((1, D)),                         # after_norm g / b
    ]
    args = [x0, bias,
            prep["ln1_g"], prep["ln1_b"], prep["wqkv"], prep["bqkv"],
            prep["wo"], prep["bo"], prep["ln2_g"], prep["ln2_b"],
            prep["w1"], prep["b1"], prep["w2"], prep["b2"],
            prep["after_g"], prep["after_b"]]

    return pl.pallas_call(
        partial(encoder_stack_kernel, n_heads=n_heads, num_layers=L),
        grid=(G, L),
        in_specs=in_specs,
        out_specs=pl.BlockSpec((bb, Tp, D), lambda g, l: (g, 0, 0)),
        out_shape=jax.ShapeDtypeStruct((B, Tp, D), jnp.float32),
        compiler_params=pltpu.CompilerParams(
            dimension_semantics=("parallel", "arbitrary"),
            vmem_limit_bytes=48 * 1024 * 1024),
    )(*args)


# ---------------------------------------------------------------------------
# Parameter preparation (runs ONCE, outside the jitted forward) / full forward
# ---------------------------------------------------------------------------

def prepare_params(params, idim, n_heads):
    """Repack weights: conv->matmul form, fold sqrt(D) / 1/sqrt(dk) scales."""
    f32, bf16 = jnp.float32, jnp.bfloat16
    D = params["proj_w"].shape[1]
    dk = D // n_heads
    F1 = (idim - 3) // 2 + 1
    emb_scale = math.sqrt(D)
    q_scale = 1.0 / math.sqrt(dk)

    C2 = params["conv2_w"].shape[0]
    layers = params["layers"]

    def stack(name, dtype):
        return jnp.stack([ly[name] for ly in layers]).astype(dtype)

    wqkv = jnp.stack([jnp.concatenate([ly["wq"] * q_scale, ly["wk"], ly["wv"]], axis=1)
                      for ly in layers]).astype(bf16)
    bqkv = jnp.stack([jnp.concatenate([ly["bq"] * q_scale, ly["bk"], ly["bv"]], axis=1)
                      for ly in layers]).astype(f32)
    return {
        "conv1_wm": conv1_as_matmul_weights(params["conv1_w"], idim, F1).astype(bf16),
        "conv1_bv": jnp.tile(params["conv1_b"], F1).astype(f32),
        "conv2_wm": params["conv2_w"].reshape(C2, -1).T.astype(bf16),
        "conv2_bv": params["conv2_b"].astype(f32),
        "proj_w": (params["proj_w"] * emb_scale).astype(bf16),
        "proj_b": (params["proj_b"] * emb_scale).reshape(1, D).astype(f32),
        "after_g": params["after_g"].astype(f32),
        "after_b": params["after_b"].astype(f32),
        "ln1_g": stack("ln1_g", f32), "ln1_b": stack("ln1_b", f32),
        "wqkv": wqkv, "bqkv": bqkv,
        "wo": stack("wo", bf16), "bo": stack("bo", f32),
        "ln2_g": stack("ln2_g", f32), "ln2_b": stack("ln2_b", f32),
        "w1": stack("w1", bf16), "b1": stack("b1", f32),
        "w2": stack("w2", bf16), "b2": stack("b2", f32),
    }


def encoder_forward(xs, masks, prep, n_heads):
    B, T, W = xs.shape
    D = prep["proj_w"].shape[1]

    # ---- Conv2dSubsampling (two 3x3 stride-2 convs + ReLU), bf16 intermediates ----
    P, Ho = conv1_patches(xs)
    Wo = (W - 3) // 2 + 1
    y1 = dense_tiled(P, prep["conv1_wm"], prep["conv1_bv"], relu=True,
                     out_dtype=jnp.bfloat16)                        # (B*Ho, Wo*C)
    C = prep["conv1_wm"].shape[1] // Wo
    y1 = y1.reshape(B, Ho, Wo, C).transpose(0, 3, 1, 2)             # NCHW

    cols, T2, F2 = _im2col_3x3_s2(y1)
    y2 = dense_tiled(cols, prep["conv2_wm"], prep["conv2_bv"], relu=True,
                     out_dtype=jnp.bfloat16)                        # (B*T2*F2, C2)
    C2 = prep["conv2_wm"].shape[1]
    conv_flat = (y2.reshape(B, T2, F2, C2).transpose(0, 1, 3, 2)
                   .reshape(B, T2, C2 * F2))                        # (B, T2, C2*F2)

    # ---- embed Linear + scaled positional encoding (hoisted out of the stack) ----
    x0 = dense_tiled(conv_flat.reshape(B * T2, C2 * F2), prep["proj_w"],
                     prep["proj_b"], out_dtype=jnp.float32).reshape(B, T2, D)
    x0 = x0 + positional_encoding(T2, D)[None]

    # ---- subsampled mask + additive bias; pad time axis to a multiple of 8 ----
    m_sub = masks[:, :, :-2:2][:, :, :-2:2]                         # (B, 1, T2)
    Tp = ((T2 + 7) // 8) * 8
    pad = Tp - T2
    x0 = jnp.pad(x0, ((0, 0), (0, pad), (0, 0)))
    bias = jnp.where(m_sub, 0.0, MASK_BIAS).astype(jnp.float32)
    bias = jnp.pad(bias, ((0, 0), (0, 0), (0, pad)), constant_values=MASK_BIAS)

    out = encoder_stack(x0, bias, prep, n_heads)                    # (B, Tp, D)
    return out[:, :T2], m_sub


def init_params(key, idim, D, FF, num_blocks):
    keys = iter(jax.random.split(key, 12 * num_blocks + 8))

    def nrm(shape, scale=0.05):
        return jax.random.normal(next(keys), shape, jnp.float32) * scale

    F1 = (idim - 3) // 2 + 1
    F2 = (F1 - 3) // 2 + 1
    params = {
        "conv1_w": nrm((D, 1, 3, 3)),
        "conv1_b": nrm((D,)),
        "conv2_w": nrm((D, D, 3, 3)),
        "conv2_b": nrm((D,)),
        "proj_w": nrm((D * F2, D)),     # stored as (in, out)
        "proj_b": nrm((D,)),
        "after_g": jnp.ones((1, D), jnp.float32),
        "after_b": jnp.zeros((1, D), jnp.float32),
        "layers": [],
    }
    for _ in range(num_blocks):
        params["layers"].append({
            "ln1_g": jnp.ones((1, D), jnp.float32), "ln1_b": jnp.zeros((1, D), jnp.float32),
            "wq": nrm((D, D)), "bq": nrm((1, D)),
            "wk": nrm((D, D)), "bk": nrm((1, D)),
            "wv": nrm((D, D)), "bv": nrm((1, D)),
            "wo": nrm((D, D)), "bo": nrm((1, D)),
            "ln2_g": jnp.ones((1, D), jnp.float32), "ln2_b": jnp.zeros((1, D), jnp.float32),
            "w1": nrm((D, FF)), "b1": nrm((1, FF)),
            "w2": nrm((FF, D)), "b2": nrm((1, D)),
        })
    return params


if __name__ == "__main__":
    B, T, idim = 2, 32, 16
    D, H, FF, num_blocks = 128, 4, 256, 2

    key = jax.random.PRNGKey(0)
    kx, kp = jax.random.split(key)
    xs = jax.random.normal(kx, (B, T, idim), jnp.float32)
    masks = jnp.ones((B, 1, T), dtype=bool)
    masks = masks.at[1, 0, 24:].set(False)          # second sequence is shorter

    params = init_params(kp, idim, D, FF, num_blocks)
    prep = prepare_params(params, idim, H)          # packed once, outside jit
    fwd = jax.jit(partial(encoder_forward, n_heads=H))
    out, out_masks = fwd(xs, masks, prep)
    jax.block_until_ready(out)

    T2 = 7                                          # (32-3)//2+1=15; (15-3)//2+1=7
    assert out.shape == (B, T2, D), out.shape
    assert out_masks.shape == (B, 1, T2), out_masks.shape
    assert bool(jnp.all(jnp.isfinite(out)))
    print("KERNEL_OK")
</pallas_src>

<mosaic_0001>
module attributes {stable_mosaic.version = 11 : i64} {
  func.func @dense_kernel(%arg0: i32, %arg1: memref<32x48xbf16, #tpu.memory_space<vmem>>, %arg2: memref<48x896xbf16, #tpu.memory_space<vmem>>, %arg3: memref<1x896xf32, #tpu.memory_space<vmem>>, %arg4: memref<32x896xbf16, #tpu.memory_space<vmem>>) attributes {dimension_semantics = [#tpu.dimension_semantics<parallel>], iteration_bounds = array<i64: 1>, scalar_prefetch = 0 : i64, scratch_operands = 0 : i64, tpu.core_type = #tpu.core_type<tc>, window_params = [{transform_indices = @transform_0, window_bounds = array<i64: 32, 48>}, {pipeline_mode = #tpu.pipeline_mode<synchronous>, transform_indices = @transform_1, window_bounds = array<i64: 48, 896>}, {pipeline_mode = #tpu.pipeline_mode<synchronous>, transform_indices = @transform_2, window_bounds = array<i64: 1, 896>}, {transform_indices = @transform_3, window_bounds = array<i64: 32, 896>}]} {
    %c0 = arith.constant 0 : index
    %c0_0 = arith.constant 0 : index
    %0 = vector.load %arg1[%c0, %c0_0] : memref<32x48xbf16, #tpu.memory_space<vmem>>, vector<32x48xbf16>
    %c0_1 = arith.constant 0 : index
    %c0_2 = arith.constant 0 : index
    %1 = vector.load %arg2[%c0_1, %c0_2] : memref<48x896xbf16, #tpu.memory_space<vmem>>, vector<48x896xbf16>
    %cst = arith.constant dense<0.000000e+00> : vector<32x896xf32>
    %2 = tpu.matmul %0, %1, %cst {dimension_numbers = #tpu.dot_dimension_numbers<[1], [0], [0], [1], [0, 0, 1, 1], [], []>} : vector<32x48xbf16>, vector<48x896xbf16>, vector<32x896xf32> -> vector<32x896xf32>
    %c0_3 = arith.constant 0 : index
    %c0_4 = arith.constant 0 : index
    %3 = vector.load %arg3[%c0_3, %c0_4] : memref<1x896xf32, #tpu.memory_space<vmem>>, vector<1x896xf32>
    %4 = vector.broadcast %3 : vector<1x896xf32> to vector<32x896xf32>
    %5 = arith.addf %2, %4 : vector<32x896xf32>
    %cst_5 = arith.constant 0.000000e+00 : f32
    %6 = vector.broadcast %cst_5 : f32 to vector<32x896xf32>
    %7 = arith.maximumf %5, %6 : vector<32x896xf32>
    %8 = arith.truncf %7 : vector<32x896xf32> to vector<32x896xbf16>
    %c0_6 = arith.constant 0 : index
    %c0_7 = arith.constant 0 : index
    %9 = vector.load %arg4[%c0_6, %c0_7] : memref<32x896xbf16, #tpu.memory_space<vmem>>, vector<32x896xbf16>
    tpu.vector_store %arg4[%c0_6, %c0_7], %8 {strides = array<i32>} : memref<32x896xbf16, #tpu.memory_space<vmem>>, vector<32x896xbf16>,
    return
  }
  func.func @transform_0(%arg0: i32) -> (i32, i32) {
    %c0_i32 = arith.constant 0 : i32
    %c0_i32_0 = arith.constant 0 : i32
    return %arg0, %c0_i32 : i32, i32
  }
  func.func @transform_1(%arg0: i32) -> (i32, i32) {
    %c0_i32 = arith.constant 0 : i32
    %c0_i32_0 = arith.constant 0 : i32
    %c0_i32_1 = arith.constant 0 : i32
    return %c0_i32, %c0_i32_0 : i32, i32
  }
  func.func @transform_2(%arg0: i32) -> (i32, i32) {
    %c0_i32 = arith.constant 0 : i32
    %c0_i32_0 = arith.constant 0 : i32
    %c0_i32_1 = arith.constant 0 : i32
    return %c0_i32, %c0_i32_0 : i32, i32
  }
  func.func @transform_3(%arg0: i32) -> (i32, i32) {
    %c0_i32 = arith.constant 0 : i32
    %c0_i32_0 = arith.constant 0 : i32
    return %arg0, %c0_i32 : i32, i32
  }
}

module attributes {stable_mosaic.version = 11 : i64} {
  func.func @dense_kernel(%arg0: i32, %arg1: memref<48x1152xbf16, #tpu.memory_space<vmem>>, %arg2: memref<1152x128xbf16, #tpu.memory_space<vmem>>, %arg3: memref<1x128xf32, #tpu.memory_space<vmem>>, %arg4: memref<48x128xbf16, #tpu.memory_space<vmem>>) attributes {dimension_semantics = [#tpu.dimension_semantics<parallel>], iteration_bounds = array<i64: 1>, scalar_prefetch = 0 : i64, scratch_operands = 0 : i64, tpu.core_type = #tpu.core_type<tc>, window_params = [{transform_indices = @transform_0, window_bounds = array<i64: 48, 1152>}, {pipeline_mode = #tpu.pipeline_mode<synchronous>, transform_indices = @transform_1, window_bounds = array<i64: 1152, 128>}, {pipeline_mode = #tpu.pipeline_mode<synchronous>, transform_indices = @transform_2, window_bounds = array<i64: 1, 128>}, {transform_indices = @transform_3, window_bounds = array<i64: 48, 128>}]} {
    %c0 = arith.constant 0 : index
    %c0_0 = arith.constant 0 : index
    %0 = vector.load %arg1[%c0, %c0_0] : memref<48x1152xbf16, #tpu.memory_space<vmem>>, vector<48x1152xbf16>
    %c0_1 = arith.constant 0 : index
    %c0_2 = arith.constant 0 : index
    %1 = vector.load %arg2[%c0_1, %c0_2] : memref<1152x128xbf16, #tpu.memory_space<vmem>>, vector<1152x128xbf16>
    %cst = arith.constant dense<0.000000e+00> : vector<48x128xf32>
    %2 = tpu.matmul %0, %1, %cst {dimension_numbers = #tpu.dot_dimension_numbers<[1], [0], [0], [1], [0, 0, 1, 1], [], []>} : vector<48x1152xbf16>, vector<1152x128xbf16>, vector<48x128xf32> -> vector<48x128xf32>
    %c0_3 = arith.constant 0 : index
    %c0_4 = arith.constant 0 : index
    %3 = vector.load %arg3[%c0_3, %c0_4] : memref<1x128xf32, #tpu.memory_space<vmem>>, vector<1x128xf32>
    %4 = vector.broadcast %3 : vector<1x128xf32> to vector<48x128xf32>
    %5 = arith.addf %2, %4 : vector<48x128xf32>
    %cst_5 = arith.constant 0.000000e+00 : f32
    %6 = vector.broadcast %cst_5 : f32 to vector<48x128xf32>
    %7 = arith.maximumf %5, %6 : vector<48x128xf32>
    %8 = arith.truncf %7 : vector<48x128xf32> to vector<48x128xbf16>
    %c0_6 = arith.constant 0 : index
    %c0_7 = arith.constant 0 : index
    %9 = vector.load %arg4[%c0_6, %c0_7] : memref<48x128xbf16, #tpu.memory_space<vmem>>, vector<48x128xbf16>
    tpu.vector_store %arg4[%c0_6, %c0_7], %8 {strides = array<i32>} : memref<48x128xbf16, #tpu.memory_space<vmem>>, vector<48x128xbf16>,
    return
  }
  func.func @transform_0(%arg0: i32) -> (i32, i32) {
    %c0_i32 = arith.constant 0 : i32
    %c0_i32_0 = arith.constant 0 : i32
    return %arg0, %c0_i32 : i32, i32
  }
  func.func @transform_1(%arg0: i32) -> (i32, i32) {
    %c0_i32 = arith.constant 0 : i32
    %c0_i32_0 = arith.constant 0 : i32
    %c0_i32_1 = arith.constant 0 : i32
    return %c0_i32, %c0_i32_0 : i32, i32
  }
  func.func @transform_2(%arg0: i32) -> (i32, i32) {
    %c0_i32 = arith.constant 0 : i32
    %c0_i32_0 = arith.constant 0 : i32
    %c0_i32_1 = arith.constant 0 : i32
    return %c0_i32, %c0_i32_0 : i32, i32
  }
  func.func @transform_3(%arg0: i32) -> (i32, i32) {
    %c0_i32 = arith.constant 0 : i32
    %c0_i32_0 = arith.constant 0 : i32
    return %arg0, %c0_i32 : i32, i32
  }
}

module attributes {stable_mosaic.version = 11 : i64} {
  func.func @dense_kernel(%arg0: i32, %arg1: memref<16x384xbf16, #tpu.memory_space<vmem>>, %arg2: memref<384x128xbf16, #tpu.memory_space<vmem>>, %arg3: memref<1x128xf32, #tpu.memory_space<vmem>>, %arg4: memref<16x128xf32, #tpu.memory_space<vmem>>) attributes {dimension_semantics = [#tpu.dimension_semantics<parallel>], iteration_bounds = array<i64: 1>, scalar_prefetch = 0 : i64, scratch_operands = 0 : i64, tpu.core_type = #tpu.core_type<tc>, window_params = [{transform_indices = @transform_0, window_bounds = array<i64: 16, 384>}, {pipeline_mode = #tpu.pipeline_mode<synchronous>, transform_indices = @transform_1, window_bounds = array<i64: 384, 128>}, {pipeline_mode = #tpu.pipeline_mode<synchronous>, transform_indices = @transform_2, window_bounds = array<i64: 1, 128>}, {transform_indices = @transform_3, window_bounds = array<i64: 16, 128>}]} {
    %c0 = arith.constant 0 : index
    %c0_0 = arith.constant 0 : index
    %0 = vector.load %arg1[%c0, %c0_0] : memref<16x384xbf16, #tpu.memory_space<vmem>>, vector<16x384xbf16>
    %c0_1 = arith.constant 0 : index
    %c0_2 = arith.constant 0 : index
    %1 = vector.load %arg2[%c0_1, %c0_2] : memref<384x128xbf16, #tpu.memory_space<vmem>>, vector<384x128xbf16>
    %cst = arith.constant dense<0.000000e+00> : vector<16x128xf32>
    %2 = tpu.matmul %0, %1, %cst {dimension_numbers = #tpu.dot_dimension_numbers<[1], [0], [0], [1], [0, 0, 1, 1], [], []>} : vector<16x384xbf16>, vector<384x128xbf16>, vector<16x128xf32> -> vector<16x128xf32>
    %c0_3 = arith.constant 0 : index
    %c0_4 = arith.constant 0 : index
    %3 = vector.load %arg3[%c0_3, %c0_4] : memref<1x128xf32, #tpu.memory_space<vmem>>, vector<1x128xf32>
    %4 = vector.broadcast %3 : vector<1x128xf32> to vector<16x128xf32>
    %5 = arith.addf %2, %4 : vector<16x128xf32>
    %c0_5 = arith.constant 0 : index
    %c0_6 = arith.constant 0 : index
    %6 = vector.load %arg4[%c0_5, %c0_6] : memref<16x128xf32, #tpu.memory_space<vmem>>, vector<16x128xf32>
    tpu.vector_store %arg4[%c0_5, %c0_6], %5 {strides = array<i32>} : memref<16x128xf32, #tpu.memory_space<vmem>>, vector<16x128xf32>,
    return
  }
  func.func @transform_0(%arg0: i32) -> (i32, i32) {
    %c0_i32 = arith.constant 0 : i32
    %c0_i32_0 = arith.constant 0 : i32
    return %arg0, %c0_i32 : i32, i32
  }
  func.func @transform_1(%arg0: i32) -> (i32, i32) {
    %c0_i32 = arith.constant 0 : i32
    %c0_i32_0 = arith.constant 0 : i32
    %c0_i32_1 = arith.constant 0 : i32
    return %c0_i32, %c0_i32_0 : i32, i32
  }
  func.func @transform_2(%arg0: i32) -> (i32, i32) {
    %c0_i32 = arith.constant 0 : i32
    %c0_i32_0 = arith.constant 0 : i32
    %c0_i32_1 = arith.constant 0 : i32
    return %c0_i32, %c0_i32_0 : i32, i32
  }
  func.func @transform_3(%arg0: i32) -> (i32, i32) {
    %c0_i32 = arith.constant 0 : i32
    %c0_i32_0 = arith.constant 0 : i32
    return %arg0, %c0_i32 : i32, i32
  }
}

module attributes {stable_mosaic.version = 11 : i64} {
  func.func @encoder_stack_kernel(%arg0: i32, %arg1: i32, %arg2: memref<2x8x128xf32, #tpu.memory_space<vmem>>, %arg3: memref<2x1x8xf32, #tpu.memory_space<vmem>>, %arg4: memref<1x1x128xf32, #tpu.memory_space<vmem>>, %arg5: memref<1x1x128xf32, #tpu.memory_space<vmem>>, %arg6: memref<1x128x384xbf16, #tpu.memory_space<vmem>>, %arg7: memref<1x1x384xf32, #tpu.memory_space<vmem>>, %arg8: memref<1x128x128xbf16, #tpu.memory_space<vmem>>, %arg9: memref<1x1x128xf32, #tpu.memory_space<vmem>>, %arg10: memref<1x1x128xf32, #tpu.memory_space<vmem>>, %arg11: memref<1x1x128xf32, #tpu.memory_space<vmem>>, %arg12: memref<1x128x256xbf16, #tpu.memory_space<vmem>>, %arg13: memref<1x1x256xf32, #tpu.memory_space<vmem>>, %arg14: memref<1x256x128xbf16, #tpu.memory_space<vmem>>, %arg15: memref<1x1x128xf32, #tpu.memory_space<vmem>>, %arg16: memref<1x128xf32, #tpu.memory_space<vmem>>, %arg17: memref<1x128xf32, #tpu.memory_space<vmem>>, %arg18: memref<2x8x128xf32, #tpu.memory_space<vmem>>) attributes {dimension_semantics = [#tpu.dimension_semantics<parallel>, #tpu.dimension_semantics<arbitrary>], iteration_bounds = array<i64: 1, 2>, scalar_prefetch = 0 : i64, scratch_operands = 0 : i64, tpu.core_type = #tpu.core_type<tc>, window_params = [{pipeline_mode = #tpu.pipeline_mode<synchronous>, transform_indices = @transform_0, window_bounds = array<i64: 2, 8, 128>}, {pipeline_mode = #tpu.pipeline_mode<synchronous>, transform_indices = @transform_1, window_bounds = array<i64: 2, 1, 8>}, {transform_indices = @transform_2, window_bounds = array<i64: 1, 1, 128>}, {transform_indices = @transform_3, window_bounds = array<i64: 1, 1, 128>}, {transform_indices = @transform_4, window_bounds = array<i64: 1, 128, 384>}, {transform_indices = @transform_5, window_bounds = array<i64: 1, 1, 384>}, {transform_indices = @transform_6, window_bounds = array<i64: 1, 128, 128>}, {transform_indices = @transform_7, window_bounds = array<i64: 1, 1, 128>}, {transform_indices = @transform_8, window_bounds = array<i64: 1, 1, 128>}, {transform_indices = @transform_9, window_bounds = array<i64: 1, 1, 128>}, {transform_indices = @transform_10, window_bounds = array<i64: 1, 128, 256>}, {transform_indices = @transform_11, window_bounds = array<i64: 1, 1, 256>}, {transform_indices = @transform_12, window_bounds = array<i64: 1, 256, 128>}, {transform_indices = @transform_13, window_bounds = array<i64: 1, 1, 128>}, {pipeline_mode = #tpu.pipeline_mode<synchronous>, transform_indices = @transform_14, window_bounds = array<i64: 1, 128>}, {pipeline_mode = #tpu.pipeline_mode<synchronous>, transform_indices = @transform_15, window_bounds = array<i64: 1, 128>}, {transform_indices = @transform_16, window_bounds = array<i64: 2, 8, 128>}]} {
    %c0_i32 = arith.constant 0 : i32
    %0 = arith.cmpi eq, %arg1, %c0_i32 : i32
    %1 = arith.extui %0 : i1 to i32
    %c0_i32_0 = arith.constant 0 : i32
    %2 = arith.cmpi ne, %1, %c0_i32_0 : i32
    scf.if %2 {
      %c0_63 = arith.constant 0 : index
      %c0_64 = arith.constant 0 : index
      %c0_65 = arith.constant 0 : index
      %135 = vector.load %arg2[%c0_63, %c0_64, %c0_65] : memref<2x8x128xf32, #tpu.memory_space<vmem>>, vector<2x8x128xf32>
      %c0_66 = arith.constant 0 : index
      %c0_67 = arith.constant 0 : index
      %c0_68 = arith.constant 0 : index
      %136 = vector.load %arg18[%c0_66, %c0_67, %c0_68] : memref<2x8x128xf32, #tpu.memory_space<vmem>>, vector<2x8x128xf32>
      tpu.vector_store %arg18[%c0_66, %c0_67, %c0_68], %135 {strides = array<i32>} : memref<2x8x128xf32, #tpu.memory_space<vmem>>, vector<2x8x128xf32>,
    } else {
    }
    %c0 = arith.constant 0 : index
    %c0_1 = arith.constant 0 : index
    %c0_2 = arith.constant 0 : index
    %3 = vector.load %arg18[%c0, %c0_1, %c0_2] : memref<2x8x128xf32, #tpu.memory_space<vmem>>, vector<2x8x128xf32>
    %4 = vector.shape_cast %3 : vector<2x8x128xf32> to vector<16x128xf32>
    %c0_3 = arith.constant 0 : index
    %c0_4 = arith.constant 0 : index
    %c0_5 = arith.constant 0 : index
    %5 = vector.load %arg3[%c0_3, %c0_4, %c0_5] : memref<2x1x8xf32, #tpu.memory_space<vmem>>, vector<2x1x8xf32>
    %6 = vector.shape_cast %5 : vector<2x1x8xf32> to vector<2x1x1x8xf32>
    %c0_6 = arith.constant 0 : index
    %c0_7 = arith.constant 0 : index
    %c0_8 = arith.constant 0 : index
    %7 = vector.load %arg4[%c0_6, %c0_7, %c0_8] : memref<1x1x128xf32, #tpu.memory_space<vmem>>, vector<1x1x128xf32>
    %8 = vector.shape_cast %7 : vector<1x1x128xf32> to vector<1x128xf32>
    %c0_9 = arith.constant 0 : index
    %c0_10 = arith.constant 0 : index
    %c0_11 = arith.constant 0 : index
    %9 = vector.load %arg5[%c0_9, %c0_10, %c0_11] : memref<1x1x128xf32, #tpu.memory_space<vmem>>, vector<1x1x128xf32>
    %10 = vector.shape_cast %9 : vector<1x1x128xf32> to vector<1x128xf32>
    %cst = arith.constant dense<0.000000e+00> : vector<16xf32>
    %11 = vector.multi_reduction <add>, %4, %cst [1] : vector<16x128xf32> to vector<16xf32>
    %12 = vector.shape_cast %11 : vector<16xf32> to vector<16x1xf32>
    %cst_12 = arith.constant 1.280000e+02 : f32
    %13 = vector.broadcast %cst_12 : f32 to vector<16x1xf32>
    %14 = arith.divf %12, %13 : vector<16x1xf32>
    %15 = vector.broadcast %14 : vector<16x1xf32> to vector<16x128xf32>
    %16 = arith.subf %4, %15 : vector<16x128xf32>
    %17 = arith.mulf %16, %16 : vector<16x128xf32>
    %cst_13 = arith.constant dense<0.000000e+00> : vector<16xf32>
    %18 = vector.multi_reduction <add>, %17, %cst_13 [1] : vector<16x128xf32> to vector<16xf32>
    %19 = vector.shape_cast %18 : vector<16xf32> to vector<16x1xf32>
    %cst_14 = arith.constant 1.280000e+02 : f32
    %20 = vector.broadcast %cst_14 : f32 to vector<16x1xf32>
    %21 = arith.divf %19, %20 : vector<16x1xf32>
    %22 = vector.broadcast %14 : vector<16x1xf32> to vector<16x128xf32>
    %23 = arith.subf %4, %22 : vector<16x128xf32>
    %cst_15 = arith.constant 9.99999996E-13 : f32
    %24 = vector.broadcast %cst_15 : f32 to vector<16x1xf32>
    %25 = arith.addf %21, %24 : vector<16x1xf32>
    %26 = math.rsqrt %25 : vector<16x1xf32>
    %27 = vector.broadcast %26 : vector<16x1xf32> to vector<16x128xf32>
    %28 = arith.mulf %23, %27 : vector<16x128xf32>
    %29 = vector.broadcast %8 : vector<1x128xf32> to vector<16x128xf32>
    %30 = arith.mulf %28, %29 : vector<16x128xf32>
    %31 = vector.broadcast %10 : vector<1x128xf32> to vector<16x128xf32>
    %32 = arith.addf %30, %31 : vector<16x128xf32>
    %33 = arith.truncf %32 : vector<16x128xf32> to vector<16x128xbf16>
    %c0_16 = arith.constant 0 : index
    %c0_17 = arith.constant 0 : index
    %c0_18 = arith.constant 0 : index
    %34 = vector.load %arg6[%c0_16, %c0_17, %c0_18] : memref<1x128x384xbf16, #tpu.memory_space<vmem>>, vector<1x128x384xbf16>
    %35 = vector.shape_cast %34 : vector<1x128x384xbf16> to vector<128x384xbf16>
    %cst_19 = arith.constant dense<0.000000e+00> : vector<16x384xf32>
    %36 = tpu.matmul %33, %35, %cst_19 {dimension_numbers = #tpu.dot_dimension_numbers<[1], [0], [0], [1], [0, 0, 1, 1], [], []>} : vector<16x128xbf16>, vector<128x384xbf16>, vector<16x384xf32> -> vector<16x384xf32>
    %c0_20 = arith.constant 0 : index
    %c0_21 = arith.constant 0 : index
    %c0_22 = arith.constant 0 : index
    %37 = vector.load %arg7[%c0_20, %c0_21, %c0_22] : memref<1x1x384xf32, #tpu.memory_space<vmem>>, vector<1x1x384xf32>
    %38 = vector.shape_cast %37 : vector<1x1x384xf32> to vector<1x384xf32>
    %39 = vector.broadcast %38 : vector<1x384xf32> to vector<16x384xf32>
    %40 = arith.addf %36, %39 : vector<16x384xf32>
    %41 = vector.extract_strided_slice %40 {offsets = [0, 0], sizes = [16, 128], strides = [1, 1]} : vector<16x384xf32> to vector<16x128xf32>
    %42 = vector.shape_cast %41 : vector<16x128xf32> to vector<2x8x4x32xf32>
    %43 = tpu.transpose %42, [0, 2, 1, 3] : vector<2x8x4x32xf32> -> vector<2x4x8x32xf32>
    %44 = vector.shape_cast %43 : vector<2x4x8x32xf32> to vector<8x8x32xf32>
    %45 = arith.truncf %44 : vector<8x8x32xf32> to vector<8x8x32xbf16>
    %46 = vector.extract_strided_slice %40 {offsets = [0, 128], sizes = [16, 128], strides = [1, 1]} : vector<16x384xf32> to vector<16x128xf32>
    %47 = vector.shape_cast %46 : vector<16x128xf32> to vector<2x8x4x32xf32>
    %48 = tpu.transpose %47, [0, 2, 1, 3] : vector<2x8x4x32xf32> -> vector<2x4x8x32xf32>
    %49 = vector.shape_cast %48 : vector<2x4x8x32xf32> to vector<8x8x32xf32>
    %50 = arith.truncf %49 : vector<8x8x32xf32> to vector<8x8x32xbf16>
    %51 = vector.extract_strided_slice %40 {offsets = [0, 256], sizes = [16, 128], strides = [1, 1]} : vector<16x384xf32> to vector<16x128xf32>
    %52 = vector.shape_cast %51 : vector<16x128xf32> to vector<2x8x4x32xf32>
    %53 = tpu.transpose %52, [0, 2, 1, 3] : vector<2x8x4x32xf32> -> vector<2x4x8x32xf32>
    %54 = vector.shape_cast %53 : vector<2x4x8x32xf32> to vector<8x8x32xf32>
    %55 = arith.truncf %54 : vector<8x8x32xf32> to vector<8x8x32xbf16>
    "tpu.trace_start"() <{level = 10 : i32, message = "nqd,nkd->nqk"}> : () -> ()
    %cst_23 = arith.constant dense<0.000000e+00> : vector<8x8x8xf32>
    %56 = tpu.matmul %45, %50, %cst_23 {dimension_numbers = #tpu.dot_dimension_numbers<[2], [2], [1], [1], [0, 0, 0, 1, 1, 1], [0], [0]>} : vector<8x8x32xbf16>, vector<8x8x32xbf16>, vector<8x8x8xf32> -> vector<8x8x8xf32>
    "tpu.trace_stop"() : () -> ()
    %57 = vector.shape_cast %56 : vector<8x8x8xf32> to vector<2x4x8x8xf32>
    %58 = vector.broadcast %6 : vector<2x1x1x8xf32> to vector<2x4x8x8xf32>
    %59 = arith.addf %57, %58 : vector<2x4x8x8xf32>
    %cst_24 = arith.constant dense<0xFF800000> : vector<2x4x8xf32>
    %60 = vector.multi_reduction <maximumf>, %59, %cst_24 [3] : vector<2x4x8x8xf32> to vector<2x4x8xf32>
    %61 = vector.shape_cast %60 : vector<2x4x8xf32> to vector<2x4x8x1xf32>
    %62 = vector.broadcast %61 : vector<2x4x8x1xf32> to vector<2x4x8x8xf32>
    %63 = arith.subf %59, %62 : vector<2x4x8x8xf32>
    %64 = math.exp %63 : vector<2x4x8x8xf32>
    %cst_25 = arith.constant dense<0.000000e+00> : vector<2x4x8xf32>
    %65 = vector.multi_reduction <add>, %64, %cst_25 [3] : vector<2x4x8x8xf32> to vector<2x4x8xf32>
    %66 = vector.shape_cast %65 : vector<2x4x8xf32> to vector<2x4x8x1xf32>
    %67 = vector.broadcast %66 : vector<2x4x8x1xf32> to vector<2x4x8x8xf32>
    %68 = arith.divf %64, %67 : vector<2x4x8x8xf32>
    %69 = vector.shape_cast %68 : vector<2x4x8x8xf32> to vector<8x8x8xf32>
    %70 = arith.truncf %69 : vector<8x8x8xf32> to vector<8x8x8xbf16>
    "tpu.trace_start"() <{level = 10 : i32, message = "nqk,nkd->nqd"}> : () -> ()
    %cst_26 = arith.constant dense<0.000000e+00> : vector<8x8x32xf32>
    %71 = tpu.matmul %70, %55, %cst_26 {dimension_numbers = #tpu.dot_dimension_numbers<[2], [1], [1], [2], [0, 0, 0, 1, 1, 2], [0], [0]>} : vector<8x8x8xbf16>, vector<8x8x32xbf16>, vector<8x8x32xf32> -> vector<8x8x32xf32>
    "tpu.trace_stop"() : () -> ()
    %72 = vector.shape_cast %71 : vector<8x8x32xf32> to vector<2x4x8x32xf32>
    %73 = tpu.transpose %72, [0, 2, 1, 3] : vector<2x4x8x32xf32> -> vector<2x8x4x32xf32>
    %74 = vector.shape_cast %73 : vector<2x8x4x32xf32> to vector<16x128xf32>
    %75 = arith.truncf %74 : vector<16x128xf32> to vector<16x128xbf16>
    %c0_27 = arith.constant 0 : index
    %c0_28 = arith.constant 0 : index
    %c0_29 = arith.constant 0 : index
    %76 = vector.load %arg8[%c0_27, %c0_28, %c0_29] : memref<1x128x128xbf16, #tpu.memory_space<vmem>>, vector<1x128x128xbf16>
    %77 = vector.shape_cast %76 : vector<1x128x128xbf16> to vector<128x128xbf16>
    %cst_30 = arith.constant dense<0.000000e+00> : vector<16x128xf32>
    %78 = tpu.matmul %75, %77, %cst_30 {dimension_numbers = #tpu.dot_dimension_numbers<[1], [0], [0], [1], [0, 0, 1, 1], [], []>} : vector<16x128xbf16>, vector<128x128xbf16>, vector<16x128xf32> -> vector<16x128xf32>
    %c0_31 = arith.constant 0 : index
    %c0_32 = arith.constant 0 : index
    %c0_33 = arith.constant 0 : index
    %79 = vector.load %arg9[%c0_31, %c0_32, %c0_33] : memref<1x1x128xf32, #tpu.memory_space<vmem>>, vector<1x1x128xf32>
    %80 = vector.shape_cast %79 : vector<1x1x128xf32> to vector<1x128xf32>
    %81 = vector.broadcast %80 : vector<1x128xf32> to vector<16x128xf32>
    %82 = arith.addf %78, %81 : vector<16x128xf32>
    %83 = arith.addf %4, %82 : vector<16x128xf32>
    %c0_34 = arith.constant 0 : index
    %c0_35 = arith.constant 0 : index
    %c0_36 = arith.constant 0 : index
    %84 = vector.load %arg10[%c0_34, %c0_35, %c0_36] : memref<1x1x128xf32, #tpu.memory_space<vmem>>, vector<1x1x128xf32>
    %85 = vector.shape_cast %84 : vector<1x1x128xf32> to vector<1x128xf32>
    %c0_37 = arith.constant 0 : index
    %c0_38 = arith.constant 0 : index
    %c0_39 = arith.constant 0 : index
    %86 = vector.load %arg11[%c0_37, %c0_38, %c0_39] : memref<1x1x128xf32, #tpu.memory_space<vmem>>, vector<1x1x128xf32>
    %87 = vector.shape_cast %86 : vector<1x1x128xf32> to vector<1x128xf32>
    %cst_40 = arith.constant dense<0.000000e+00> : vector<16xf32>
    %88 = vector.multi_reduction <add>, %83, %cst_40 [1] : vector<16x128xf32> to vector<16xf32>
    %89 = vector.shape_cast %88 : vector<16xf32> to vector<16x1xf32>
    %cst_41 = arith.constant 1.280000e+02 : f32
    %90 = vector.broadcast %cst_41 : f32 to vector<16x1xf32>
    %91 = arith.divf %89, %90 : vector<16x1xf32>
    %92 = vector.broadcast %91 : vector<16x1xf32> to vector<16x128xf32>
    %93 = arith.subf %83, %92 : vector<16x128xf32>
    %94 = arith.mulf %93, %93 : vector<16x128xf32>
    %cst_42 = arith.constant dense<0.000000e+00> : vector<16xf32>
    %95 = vector.multi_reduction <add>, %94, %cst_42 [1] : vector<16x128xf32> to vector<16xf32>
    %96 = vector.shape_cast %95 : vector<16xf32> to vector<16x1xf32>
    %cst_43 = arith.constant 1.280000e+02 : f32
    %97 = vector.broadcast %cst_43 : f32 to vector<16x1xf32>
    %98 = arith.divf %96, %97 : vector<16x1xf32>
    %99 = vector.broadcast %91 : vector<16x1xf32> to vector<16x128xf32>
    %100 = arith.subf %83, %99 : vector<16x128xf32>
    %cst_44 = arith.constant 9.99999996E-13 : f32
    %101 = vector.broadcast %cst_44 : f32 to vector<16x1xf32>
    %102 = arith.addf %98, %101 : vector<16x1xf32>
    %103 = math.rsqrt %102 : vector<16x1xf32>
    %104 = vector.broadcast %103 : vector<16x1xf32> to vector<16x128xf32>
    %105 = arith.mulf %100, %104 : vector<16x128xf32>
    %106 = vector.broadcast %85 : vector<1x128xf32> to vector<16x128xf32>
    %107 = arith.mulf %105, %106 : vector<16x128xf32>
    %108 = vector.broadcast %87 : vector<1x128xf32> to vector<16x128xf32>
    %109 = arith.addf %107, %108 : vector<16x128xf32>
    %110 = arith.truncf %109 : vector<16x128xf32> to vector<16x128xbf16>
    %c0_45 = arith.constant 0 : index
    %c0_46 = arith.constant 0 : index
    %c0_47 = arith.constant 0 : index
    %111 = vector.load %arg12[%c0_45, %c0_46, %c0_47] : memref<1x128x256xbf16, #tpu.memory_space<vmem>>, vector<1x128x256xbf16>
    %112 = vector.shape_cast %111 : vector<1x128x256xbf16> to vector<128x256xbf16>
    %cst_48 = arith.constant dense<0.000000e+00> : vector<16x256xf32>
    %113 = tpu.matmul %110, %112, %cst_48 {dimension_numbers = #tpu.dot_dimension_numbers<[1], [0], [0], [1], [0, 0, 1, 1], [], []>} : vector<16x128xbf16>, vector<128x256xbf16>, vector<16x256xf32> -> vector<16x256xf32>
    %c0_49 = arith.constant 0 : index
    %c0_50 = arith.constant 0 : index
    %c0_51 = arith.constant 0 : index
    %114 = vector.load %arg13[%c0_49, %c0_50, %c0_51] : memref<1x1x256xf32, #tpu.memory_space<vmem>>, vector<1x1x256xf32>
    %115 = vector.shape_cast %114 : vector<1x1x256xf32> to vector<1x256xf32>
    %116 = vector.broadcast %115 : vector<1x256xf32> to vector<16x256xf32>
    %117 = arith.addf %113, %116 : vector<16x256xf32>
    %cst_52 = arith.constant 0.000000e+00 : f32
    %118 = vector.broadcast %cst_52 : f32 to vector<16x256xf32>
    %119 = arith.maximumf %117, %118 : vector<16x256xf32>
    %120 = arith.truncf %119 : vector<16x256xf32> to vector<16x256xbf16>
    %c0_53 = arith.constant 0 : index
    %c0_54 = arith.constant 0 : index
    %c0_55 = arith.constant 0 : index
    %121 = vector.load %arg14[%c0_53, %c0_54, %c0_55] : memref<1x256x128xbf16, #tpu.memory_space<vmem>>, vector<1x256x128xbf16>
    %122 = vector.shape_cast %121 : vector<1x256x128xbf16> to vector<256x128xbf16>
    %cst_56 = arith.constant dense<0.000000e+00> : vector<16x128xf32>
    %123 = tpu.matmul %120, %122, %cst_56 {dimension_numbers = #tpu.dot_dimension_numbers<[1], [0], [0], [1], [0, 0, 1, 1], [], []>} : vector<16x256xbf16>, vector<256x128xbf16>, vector<16x128xf32> -> vector<16x128xf32>
    %c0_57 = arith.constant 0 : index
    %c0_58 = arith.constant 0 : index
    %c0_59 = arith.constant 0 : index
    %124 = vector.load %arg15[%c0_57, %c0_58, %c0_59] : memref<1x1x128xf32, #tpu.memory_space<vmem>>, vector<1x1x128xf32>
    %125 = vector.shape_cast %124 : vector<1x1x128xf32> to vector<1x128xf32>
    %126 = vector.broadcast %125 : vector<1x128xf32> to vector<16x128xf32>
    %127 = arith.addf %123, %126 : vector<16x128xf32>
    %128 = arith.addf %83, %127 : vector<16x128xf32>
    %c1_i32 = arith.constant 1 : i32
    %129 = arith.cmpi slt, %arg1, %c1_i32 : i32
    %130 = arith.extui %129 : i1 to i32
    %c0_i32_60 = arith.constant 0 : i32
    %131 = arith.cmpi ne, %130, %c0_i32_60 : i32
    scf.if %131 {
      %135 = vector.shape_cast %128 : vector<16x128xf32> to vector<2x8x128xf32>
      %c0_63 = arith.constant 0 : index
      %c0_64 = arith.constant 0 : index
      %c0_65 = arith.constant 0 : index
      %136 = vector.load %arg18[%c0_63, %c0_64, %c0_65] : memref<2x8x128xf32, #tpu.memory_space<vmem>>, vector<2x8x128xf32>
      tpu.vector_store %arg18[%c0_63, %c0_64, %c0_65], %135 {strides = array<i32>} : memref<2x8x128xf32, #tpu.memory_space<vmem>>, vector<2x8x128xf32>,
    } else {
    }
    %c1_i32_61 = arith.constant 1 : i32
    %132 = arith.cmpi eq, %arg1, %c1_i32_61 : i32
    %133 = arith.extui %132 : i1 to i32
    %c0_i32_62 = arith.constant 0 : i32
    %134 = arith.cmpi ne, %133, %c0_i32_62 : i32
    scf.if %134 {
      %c0_63 = arith.constant 0 : index
      %c0_64 = arith.constant 0 : index
      %135 = vector.load %arg16[%c0_63, %c0_64] : memref<1x128xf32, #tpu.memory_space<vmem>>, vector<1x128xf32>
      %c0_65 = arith.constant 0 : index
      %c0_66 = arith.constant 0 : index
      %136 = vector.load %arg17[%c0_65, %c0_66] : memref<1x128xf32, #tpu.memory_space<vmem>>, vector<1x128xf32>
      %cst_67 = arith.constant dense<0.000000e+00> : vector<16xf32>
      %137 = vector.multi_reduction <add>, %128, %cst_67 [1] : vector<16x128xf32> to vector<16xf32>
      %138 = vector.shape_cast %137 : vector<16xf32> to vector<16x1xf32>
      %cst_68 = arith.constant 1.280000e+02 : f32
      %139 = vector.broadcast %cst_68 : f32 to vector<16x1xf32>
      %140 = arith.divf %138, %139 : vector<16x1xf32>
      %141 = vector.broadcast %140 : vector<16x1xf32> to vector<16x128xf32>
      %142 = arith.subf %128, %141 : vector<16x128xf32>
      %143 = arith.mulf %142, %142 : vector<16x128xf32>
      %cst_69 = arith.constant dense<0.000000e+00> : vector<16xf32>
      %144 = vector.multi_reduction <add>, %143, %cst_69 [1] : vector<16x128xf32> to vector<16xf32>
      %145 = vector.shape_cast %144 : vector<16xf32> to vector<16x1xf32>
      %cst_70 = arith.constant 1.280000e+02 : f32
      %146 = vector.broadcast %cst_70 : f32 to vector<16x1xf32>
      %147 = arith.divf %145, %146 : vector<16x1xf32>
      %148 = vector.broadcast %140 : vector<16x1xf32> to vector<16x128xf32>
      %149 = arith.subf %128, %148 : vector<16x128xf32>
      %cst_71 = arith.constant 9.99999996E-13 : f32
      %150 = vector.broadcast %cst_71 : f32 to vector<16x1xf32>
      %151 = arith.addf %147, %150 : vector<16x1xf32>
      %152 = math.rsqrt %151 : vector<16x1xf32>
      %153 = vector.broadcast %152 : vector<16x1xf32> to vector<16x128xf32>
      %154 = arith.mulf %149, %153 : vector<16x128xf32>
      %155 = vector.broadcast %135 : vector<1x128xf32> to vector<16x128xf32>
      %156 = arith.mulf %154, %155 : vector<16x128xf32>
      %157 = vector.broadcast %136 : vector<1x128xf32> to vector<16x128xf32>
      %158 = arith.addf %156, %157 : vector<16x128xf32>
      %159 = vector.shape_cast %158 : vector<16x128xf32> to vector<2x8x128xf32>
      %c0_72 = arith.constant 0 : index
      %c0_73 = arith.constant 0 : index
      %c0_74 = arith.constant 0 : index
      %160 = vector.load %arg18[%c0_72, %c0_73, %c0_74] : memref<2x8x128xf32, #tpu.memory_space<vmem>>, vector<2x8x128xf32>
      tpu.vector_store %arg18[%c0_72, %c0_73, %c0_74], %159 {strides = array<i32>} : memref<2x8x128xf32, #tpu.memory_space<vmem>>, vector<2x8x128xf32>,
    } else {
    }
    return
  }
  func.func @transform_0(%arg0: i32, %arg1: i32) -> (i32, i32, i32) {
    %c0_i32 = arith.constant 0 : i32
    %c0_i32_0 = arith.constant 0 : i32
    %c0_i32_1 = arith.constant 0 : i32
    return %arg0, %c0_i32, %c0_i32_0 : i32, i32, i32
  }
  func.func @transform_1(%arg0: i32, %arg1: i32) -> (i32, i32, i32) {
    %c0_i32 = arith.constant 0 : i32
    %c0_i32_0 = arith.constant 0 : i32
    %c0_i32_1 = arith.constant 0 : i32
    return %arg0, %c0_i32, %c0_i32_0 : i32, i32, i32
  }
  func.func @transform_2(%arg0: i32, %arg1: i32) -> (i32, i32, i32) {
    %c0_i32 = arith.constant 0 : i32
    %c0_i32_0 = arith.constant 0 : i32
    %c0_i32_1 = arith.constant 0 : i32
    return %arg1, %c0_i32, %c0_i32_0 : i32, i32, i32
  }
  func.func @transform_3(%arg0: i32, %arg1: i32) -> (i32, i32, i32) {
    %c0_i32 = arith.constant 0 : i32
    %c0_i32_0 = arith.constant 0 : i32
    %c0_i32_1 = arith.constant 0 : i32
    return %arg1, %c0_i32, %c0_i32_0 : i32, i32, i32
  }
  func.func @transform_4(%arg0: i32, %arg1: i32) -> (i32, i32, i32) {
    %c0_i32 = arith.constant 0 : i32
    %c0_i32_0 = arith.constant 0 : i32
    %c0_i32_1 = arith.constant 0 : i32
    return %arg1, %c0_i32, %c0_i32_0 : i32, i32, i32
  }
  func.func @transform_5(%arg0: i32, %arg1: i32) -> (i32, i32, i32) {
    %c0_i32 = arith.constant 0 : i32
    %c0_i32_0 = arith.constant 0 : i32
    %c0_i32_1 = arith.constant 0 : i32
    return %arg1, %c0_i32, %c0_i32_0 : i32, i32, i32
  }
  func.func @transform_6(%arg0: i32, %arg1: i32) -> (i32, i32, i32) {
    %c0_i32 = arith.constant 0 : i32
    %c0_i32_0 = arith.constant 0 : i32
    %c0_i32_1 = arith.constant 0 : i32
    return %arg1, %c0_i32, %c0_i32_0 : i32, i32, i32
  }
  func.func @transform_7(%arg0: i32, %arg1: i32) -> (i32, i32, i32) {
    %c0_i32 = arith.constant 0 : i32
    %c0_i32_0 = arith.constant 0 : i32
    %c0_i32_1 = arith.constant 0 : i32
    return %arg1, %c0_i32, %c0_i32_0 : i32, i32, i32
  }
  func.func @transform_8(%arg0: i32, %arg1: i32) -> (i32, i32, i32) {
    %c0_i32 = arith.constant 0 : i32
    %c0_i32_0 = arith.constant 0 : i32
    %c0_i32_1 = arith.constant 0 : i32
    return %arg1, %c0_i32, %c0_i32_0 : i32, i32, i32
  }
  func.func @transform_9(%arg0: i32, %arg1: i32) -> (i32, i32, i32) {
    %c0_i32 = arith.constant 0 : i32
    %c0_i32_0 = arith.constant 0 : i32
    %c0_i32_1 = arith.constant 0 : i32
    return %arg1, %c0_i32, %c0_i32_0 : i32, i32, i32
  }
  func.func @transform_10(%arg0: i32, %arg1: i32) -> (i32, i32, i32) {
    %c0_i32 = arith.constant 0 : i32
    %c0_i32_0 = arith.constant 0 : i32
    %c0_i32_1 = arith.constant 0 : i32
    return %arg1, %c0_i32, %c0_i32_0 : i32, i32, i32
  }
  func.func @transform_11(%arg0: i32, %arg1: i32) -> (i32, i32, i32) {
    %c0_i32 = arith.constant 0 : i32
    %c0_i32_0 = arith.constant 0 : i32
    %c0_i32_1 = arith.constant 0 : i32
    return %arg1, %c0_i32, %c0_i32_0 : i32, i32, i32
  }
  func.func @transform_12(%arg0: i32, %arg1: i32) -> (i32, i32, i32) {
    %c0_i32 = arith.constant 0 : i32
    %c0_i32_0 = arith.constant 0 : i32
    %c0_i32_1 = arith.constant 0 : i32
    return %arg1, %c0_i32, %c0_i32_0 : i32, i32, i32
  }
  func.func @transform_13(%arg0: i32, %arg1: i32) -> (i32, i32, i32) {
    %c0_i32 = arith.constant 0 : i32
    %c0_i32_0 = arith.constant 0 : i32
    %c0_i32_1 = arith.constant 0 : i32
    return %arg1, %c0_i32, %c0_i32_0 : i32, i32, i32
  }
  func.func @transform_14(%arg0: i32, %arg1: i32) -> (i32, i32) {
    %c0_i32 = arith.constant 0 : i32
    %c0_i32_0 = arith.constant 0 : i32
    %c0_i32_1 = arith.constant 0 : i32
    return %c0_i32, %c0_i32_0 : i32, i32
  }
  func.func @transform_15(%arg0: i32, %arg1: i32) -> (i32, i32) {
    %c0_i32 = arith.constant 0 : i32
    %c0_i32_0 = arith.constant 0 : i32
    %c0_i32_1 = arith.constant 0 : i32
    return %c0_i32, %c0_i32_0 : i32, i32
  }
  func.func @transform_16(%arg0: i32, %arg1: i32) -> (i32, i32, i32) {
    %c0_i32 = arith.constant 0 : i32
    %c0_i32_0 = arith.constant 0 : i32
    %c0_i32_1 = arith.constant 0 : i32
    return %arg0, %c0_i32, %c0_i32_0 : i32, i32, i32
  }
}

</mosaic_0001>

<llo_original>
// kernel: encoder_forward.4
$region0: #{encoder_forward.4}
  #allocation0 [shape = 'u32[]', space=smem, size = 0x4, offset = 0x4, fixed_abs, tag = 'smem constant byte address 0x4 - core index']
  #allocation1 [shape = 'u32[144,128]{1,0:T(1,128)}', space=vmem, size = 0x12000, scoped, tag = 'internal scratch']
  %s0 = inlined_call_operand.vmem [shape: bf16[32,48], index: 0, kind: input, shape index: {}]
  %s1 = inlined_call_operand.hbm [shape: bf16[48,896], index: 1, kind: input, shape index: {}]
  %s2 = inlined_call_operand.vmem [shape: f32[1,896], index: 2, kind: input, shape index: {}]
  %s3 = inlined_call_operand.vmem [shape: bf16[32,896], index: 3, kind: output, shape index: {}]
  %s4 = sld [smem:[#allocation0]]
  $region26: #{encoder_forward.4} parent=0
    _
  %s6 = ssub.s32 1, %s4
  %s7 = scalar_select 0, %s6, %s4
  $region1: #{encoder_forward.4} parent=0
    #allocation2 [shape = 'u8[86016]{0}', space=vmem, size = 0x15000, scoped, tag = 'input window, operand 1, single buffered']
    #allocation3 [shape = 's32[1]{0}', space=sflag, size = 0x4, scoped, tag = 'scoped memory for encoder_forward.4']
    %8 = vsyncpa [#allocation3], 0
    // Predicated region
    $region2: #{encoder_forward.4} parent=1 // pred_check
      _
    $region3: #{encoder_forward.4} parent=1 // pred_check_branch
      %10 = sbr.rel (0) target = $region5
    $region4: #{encoder_forward.4} parent=1 // pred_region
      _
    $region5: #{encoder_forward.4} parent=1 // pred_fallthru
      _
    // Predicated region
    $region6: #{encoder_forward.4} parent=1 // pred_check
      _
    $region7: #{encoder_forward.4} parent=1 // pred_check_branch
      %12 = sbr.rel (0) target = $region9
    $region8: #{encoder_forward.4} parent=1 // pred_region
      %s14 = ssub.s32 2688, 2688
      %15 = vsyncadd [#allocation3], %s14
      %s16 = sshll.u32 [#allocation2], 4
      %s17 = int_to_ptr.vmem [resolvable:$true] %s16
      %22 = dma.hbm_to_vmem [thread:$0]  %s1, 2688, %s17, [#allocation3], 448, 448, 28
    $region9: #{encoder_forward.4} parent=1 // pred_fallthru
      _
    // Predicated region
    $region10: #{encoder_forward.4} parent=1 // pred_check
      _
    $region11: #{encoder_forward.4} parent=1 // pred_check_branch
      %24 = sbr.rel (0) target = $region13
    $region12: #{encoder_forward.4} parent=1 // pred_region
      _
    $region13: #{encoder_forward.4} parent=1 // pred_fallthru
      _
    // Predicated region
    $region14: #{encoder_forward.4} parent=1 // pred_check
      _
    $region15: #{encoder_forward.4} parent=1 // pred_check_branch
      %26 = sbr.rel (0) target = $region17
    $region16: #{encoder_forward.4} parent=1 // pred_region
      %27 = dma.done [#allocation3], 2688
    $region17: #{encoder_forward.4} parent=1 // pred_fallthru
      _
    %v29 = vld [vmem:[%s0] sm:$0xf]
    %v30 = vld [vmem:[%s0 + $0x4] sm:$0xf]
    %v31 = vld [vmem:[%s0 + $0x8] sm:$0xf]
    %v32 = vld [vmem:[%s0 + $0xc] sm:$0xf]
    %v33 = vld [vmem:[#allocation2] sm:$0xff]
    %v34 = vld [vmem:[#allocation2 + $0x8] sm:$0xff]
    %v35 = vld [vmem:[#allocation2 + $0x10] sm:$0xff]
    %v36 = vld [vmem:[#allocation2 + $0x18] sm:$0xf]
    %v37 = vld [vmem:[#allocation2 + $0x1c] sm:$0xff]
    %v38 = vld [vmem:[#allocation2 + $0x24] sm:$0xff]
    %v39 = vld [vmem:[#allocation2 + $0x2c] sm:$0xff]
    %v40 = vld [vmem:[#allocation2 + $0x34] sm:$0xf]
    %v41 = vld [vmem:[#allocation2 + $0x38] sm:$0xff]
    %v42 = vld [vmem:[#allocation2 + $0x40] sm:$0xff]
    %v43 = vld [vmem:[#allocation2 + $0x48] sm:$0xff]
    %v44 = vld [vmem:[#allocation2 + $0x50] sm:$0xf]
    %v45 = vld [vmem:[#allocation2 + $0x54] sm:$0xff]
    %v46 = vld [vmem:[#allocation2 + $0x5c] sm:$0xff]
    %v47 = vld [vmem:[#allocation2 + $0x64] sm:$0xff]
    %v48 = vld [vmem:[#allocation2 + $0x6c] sm:$0xf]
    %v49 = vld [vmem:[#allocation2 + $0x70] sm:$0xff]
    %v50 = vld [vmem:[#allocation2 + $0x78] sm:$0xff]
    %v51 = vld [vmem:[#allocation2 + $0x80] sm:$0xff]
    %v52 = vld [vmem:[#allocation2 + $0x88] sm:$0xf]
    %v53 = vld [vmem:[#allocation2 + $0x8c] sm:$0xff]
    %v54 = vld [vmem:[#allocation2 + $0x94] sm:$0xff]
    %v55 = vld [vmem:[#allocation2 + $0x9c] sm:$0xff]
    %v56 = vld [vmem:[#allocation2 + $0xa4] sm:$0xf]
    %v57 = vld [vmem:[%s2] sm:$0xff]
    %v59 = vlaneseq
    %v60 = vshrl.u32 %v59, 7
    %v61 = vsub.s32 0, %v60
    %v62 = vrot.slane %v57, %v61
    %v63 = vlaneseq
    %v64 = vshrl.u32 %v63, 7
    %v65 = vsub.s32 1, %v64
    %v66 = vrot.slane %v57, %v65
    %v67 = vlaneseq
    %v68 = vshrl.u32 %v67, 7
    %v69 = vsub.s32 2, %v68
    %v70 = vrot.slane %v57, %v69
    %v71 = vlaneseq
    %v72 = vshrl.u32 %v71, 7
    %v73 = vsub.s32 3, %v72
    %v74 = vrot.slane %v57, %v73
    %v75 = vlaneseq
    %v76 = vshrl.u32 %v75, 7
    %v77 = vsub.s32 4, %v76
    %v78 = vrot.slane %v57, %v77
    %v79 = vlaneseq
    %v80 = vshrl.u32 %v79, 7
    %v81 = vsub.s32 5, %v80
    %v82 = vrot.slane %v57, %v81
    %v83 = vlaneseq
    %v84 = vshrl.u32 %v83, 7
    %v85 = vsub.s32 6, %v84
    %v86 = vrot.slane %v57, %v85
    %v98 = vunpack.c.l.b16 %v29
    %v99 = vunpack.c.l.b16 %v30
    %v100 = vunpack.c.l.b16 %v31
    %v101 = vunpack.c.l.b16 %v32
    %v102 = vpack.c.b16 %v99, %v98
    %v103 = vpack.c.b16 %v101, %v100
    %v128 = vunpack.c.l.b16 %v33
    %v129 = vunpack.c.h.b16 %v33
    %v130 = vunpack.c.l.b16 %v34
    %v131 = vunpack.c.h.b16 %v34
    %v132 = vunpack.c.l.b16 %v35
    %v133 = vunpack.c.h.b16 %v35
    %v134 = vunpack.c.l.b16 %v36
    %v135 = vunpack.c.l.b16 %v37
    %v136 = vunpack.c.h.b16 %v37
    %v137 = vunpack.c.l.b16 %v38
    %v138 = vunpack.c.h.b16 %v38
    %v139 = vunpack.c.l.b16 %v39
    %v140 = vunpack.c.h.b16 %v39
    %v141 = vunpack.c.l.b16 %v40
    %v142 = vunpack.c.l.b16 %v41
    %v143 = vunpack.c.h.b16 %v41
    %v144 = vunpack.c.l.b16 %v42
    %v145 = vunpack.c.h.b16 %v42
    %v146 = vunpack.c.l.b16 %v43
    %v147 = vunpack.c.h.b16 %v43
    %v148 = vunpack.c.l.b16 %v44
    %v149 = vunpack.c.l.b16 %v45
    %v150 = vunpack.c.h.b16 %v45
    %v151 = vunpack.c.l.b16 %v46
    %v152 = vunpack.c.h.b16 %v46
    %v153 = vunpack.c.l.b16 %v47
    %v154 = vunpack.c.h.b16 %v47
    %v155 = vunpack.c.l.b16 %v48
    %v156 = vunpack.c.l.b16 %v49
    %v157 = vunpack.c.h.b16 %v49
    %v158 = vunpack.c.l.b16 %v50
    %v159 = vunpack.c.h.b16 %v50
    %v160 = vunpack.c.l.b16 %v51
    %v161 = vunpack.c.h.b16 %v51
    %v162 = vunpack.c.l.b16 %v52
    %v163 = vunpack.c.l.b16 %v53
    %v164 = vunpack.c.h.b16 %v53
    %v165 = vunpack.c.l.b16 %v54
    %v166 = vunpack.c.h.b16 %v54
    %v167 = vunpack.c.l.b16 %v55
    %v168 = vunpack.c.h.b16 %v55
    %v169 = vunpack.c.l.b16 %v56
    %v170 = vpack.c.b16 %v135, %v128
    %v171 = vpack.c.b16 %v136, %v129
    %v172 = vpack.c.b16 %v137, %v130
    %v173 = vpack.c.b16 %v138, %v131
    %v174 = vpack.c.b16 %v139, %v132
    %v175 = vpack.c.b16 %v140, %v133
    %v176 = vpack.c.b16 %v141, %v134
    %v177 = vpack.c.b16 %v149, %v142
    %v178 = vpack.c.b16 %v150, %v143
    %v179 = vpack.c.b16 %v151, %v144
    %v180 = vpack.c.b16 %v152, %v145
    %v181 = vpack.c.b16 %v153, %v146
    %v182 = vpack.c.b16 %v154, %v147
    %v183 = vpack.c.b16 %v155, %v148
    %v184 = vpack.c.b16 %v163, %v156
    %v185 = vpack.c.b16 %v164, %v157
    %v186 = vpack.c.b16 %v165, %v158
    %v187 = vpack.c.b16 %v166, %v159
    %v188 = vpack.c.b16 %v167, %v160
    %v189 = vpack.c.b16 %v168, %v161
    %v190 = vpack.c.b16 %v169, %v162
    %vm212 = vcmask 392192
    %v214 = vsel %vm212, %v102, 0
    %v217 = vsel %vm212, %v103, 0
    %219 = vmatprep.subr.bf16.mxu0 %v171
    %220 = vmatpush1.bf16.msra.mxu0 %v170
    %221 = vmatprep.subr.bf16.mxu0 %v178
    %222 = vmatpush1.bf16.msra.mxu0 %v177
    %223 = vmatprep.subr.bf16.mxu0 %v185
    %224 = vmatpush1.bf16.msra.mxu0 %v184
    %225 = vmatprep.subr.bf16.mxu0 0
    %226 = vmatpush1.bf16.msra.mxu0 0
    %227 = vmatprep.subr.bf16.mxu0 0
    %228 = vmatpush1.bf16.msra.mxu0 0
    %229 = vmatprep.subr.bf16.mxu0 0
    %230 = vmatpush1.bf16.msra.mxu0 0
    %231 = vmatprep.subr.bf16.mxu0 0
    %232 = vmatpush1.bf16.msra.mxu0 0
    %233 = vmatprep.subr.bf16.mxu0 0
    %234 = vmatpush1.bf16.msra.mxu0 0
    %235 = vmatprep.subr.bf16.mxu0 0
    %236 = vmatpush1.bf16.msra.mxu0 0
    %237 = vmatprep.subr.bf16.mxu0 0
    %238 = vmatpush1.bf16.msra.mxu0 0
    %239 = vmatprep.subr.bf16.mxu0 0
    %240 = vmatpush1.bf16.msra.mxu0 0
    %241 = vmatprep.subr.bf16.mxu0 0
    %242 = vmatpush1.bf16.msra.mxu0 0
    %243 = vmatprep.subr.bf16.mxu0 0
    %244 = vmatpush1.bf16.msra.mxu0 0
    %245 = vmatprep.subr.bf16.mxu0 0
    %246 = vmatpush1.bf16.msra.mxu0 0
    %247 = vmatprep.subr.bf16.mxu0 0
    %248 = vmatpush1.bf16.msra.mxu0 0
    %249 = vmatprep.subr.bf16.mxu0 0
    %250 = vmatpush1.bf16.msra.mxu0 0
    %251 = vmatprep.mubr.bf16.mxu0 0
    %252 = vmatmul.mubr.bf16.gmra.mrb[0].mxu0 %v214
    %v253 = vpop.f32.mrb[0].mxu0
    %v254 = vadd.f32 %v62, %v253
    %v255 = vpop.f32.mrb[0].mxu0
    %v256 = vadd.f32 %v66, %v255
    %v257 = vpop.f32.mrb[0].mxu0
    %v258 = vadd.f32 %v62, %v257
    %v259 = vpop.f32.mrb[0].mxu0
    %v260 = vadd.f32 %v66, %v259
    %261 = vmatprep.mubr.bf16.mxu0 0
    %262 = vmatmul.mubr.bf16.gmra.mrb[0].mxu0 %v217
    %v263 = vpop.f32.mrb[0].mxu0
    %v264 = vadd.f32 %v62, %v263
    %v265 = vpop.f32.mrb[0].mxu0
    %v266 = vadd.f32 %v66, %v265
    %v267 = vpop.f32.mrb[0].mxu0
    %v268 = vadd.f32 %v62, %v267
    %v269 = vpop.f32.mrb[0].mxu0
    %v270 = vadd.f32 %v66, %v269
    %271 = vdwg.mxu0
    %272 = vmatprep.subr.bf16.mxu0 %v173
    %273 = vmatpush1.bf16.msra.mxu0 %v172
    %274 = vmatprep.subr.bf16.mxu0 %v180
    %275 = vmatpush1.bf16.msra.mxu0 %v179
    %276 = vmatprep.subr.bf16.mxu0 %v187
    %277 = vmatpush1.bf16.msra.mxu0 %v186
    %278 = vmatprep.subr.bf16.mxu0 0
    %279 = vmatpush1.bf16.msra.mxu0 0
    %280 = vmatprep.subr.bf16.mxu0 0
    %281 = vmatpush1.bf16.msra.mxu0 0
    %282 = vmatprep.subr.bf16.mxu0 0
    %283 = vmatpush1.bf16.msra.mxu0 0
    %284 = vmatprep.subr.bf16.mxu0 0
    %285 = vmatpush1.bf16.msra.mxu0 0
    %286 = vmatprep.subr.bf16.mxu0 0
    %287 = vmatpush1.bf16.msra.mxu0 0
    %288 = vmatprep.subr.bf16.mxu0 0
    %289 = vmatpush1.bf16.msra.mxu0 0
    %290 = vmatprep.subr.bf16.mxu0 0
    %291 = vmatpush1.bf16.msra.mxu0 0
    %292 = vmatprep.subr.bf16.mxu0 0
    %293 = vmatpush1.bf16.msra.mxu0 0
    %294 = vmatprep.subr.bf16.mxu0 0
    %295 = vmatpush1.bf16.msra.mxu0 0
    %296 = vmatprep.subr.bf16.mxu0 0
    %297 = vmatpush1.bf16.msra.mxu0 0
    %298 = vmatprep.subr.bf16.mxu0 0
    %299 = vmatpush1.bf16.msra.mxu0 0
    %300 = vmatprep.subr.bf16.mxu0 0
    %301 = vmatpush1.bf16.msra.mxu0 0
    %302 = vmatprep.subr.bf16.mxu0 0
    %303 = vmatpush1.bf16.msra.mxu0 0
    %304 = vmatprep.mubr.bf16.mxu0 0
    %305 = vmatmul.mubr.bf16.gmra.mrb[0].mxu0 %v214
    %v306 = vpop.f32.mrb[0].mxu0
    %v307 = vadd.f32 %v70, %v306
    %v308 = vpop.f32.mrb[0].mxu0
    %v309 = vadd.f32 %v74, %v308
    %v310 = vpop.f32.mrb[0].mxu0
    %v311 = vadd.f32 %v70, %v310
    %v312 = vpop.f32.mrb[0].mxu0
    %v313 = vadd.f32 %v74, %v312
    %314 = vmatprep.mubr.bf16.mxu0 0
    %315 = vmatmul.mubr.bf16.gmra.mrb[0].mxu0 %v217
    %v316 = vpop.f32.mrb[0].mxu0
    %v317 = vadd.f32 %v70, %v316
    %v318 = vpop.f32.mrb[0].mxu0
    %v319 = vadd.f32 %v74, %v318
    %v320 = vpop.f32.mrb[0].mxu0
    %v321 = vadd.f32 %v70, %v320
    %v322 = vpop.f32.mrb[0].mxu0
    %v323 = vadd.f32 %v74, %v322
    %324 = vdwg.mxu0
    %325 = vmatprep.subr.bf16.mxu0 %v175
    %326 = vmatpush1.bf16.msra.mxu0 %v174
    %327 = vmatprep.subr.bf16.mxu0 %v182
    %328 = vmatpush1.bf16.msra.mxu0 %v181
    %329 = vmatprep.subr.bf16.mxu0 %v189
    %330 = vmatpush1.bf16.msra.mxu0 %v188
    %331 = vmatprep.subr.bf16.mxu0 0
    %332 = vmatpush1.bf16.msra.mxu0 0
    %333 = vmatprep.subr.bf16.mxu0 0
    %334 = vmatpush1.bf16.msra.mxu0 0
    %335 = vmatprep.subr.bf16.mxu0 0
    %336 = vmatpush1.bf16.msra.mxu0 0
    %337 = vmatprep.subr.bf16.mxu0 0
    %338 = vmatpush1.bf16.msra.mxu0 0
    %339 = vmatprep.subr.bf16.mxu0 0
    %340 = vmatpush1.bf16.msra.mxu0 0
    %341 = vmatprep.subr.bf16.mxu0 0
    %342 = vmatpush1.bf16.msra.mxu0 0
    %343 = vmatprep.subr.bf16.mxu0 0
    %344 = vmatpush1.bf16.msra.mxu0 0
    %345 = vmatprep.subr.bf16.mxu0 0
    %346 = vmatpush1.bf16.msra.mxu0 0
    %347 = vmatprep.subr.bf16.mxu0 0
    %348 = vmatpush1.bf16.msra.mxu0 0
    %349 = vmatprep.subr.bf16.mxu0 0
    %350 = vmatpush1.bf16.msra.mxu0 0
    %351 = vmatprep.subr.bf16.mxu0 0
    %352 = vmatpush1.bf16.msra.mxu0 0
    %353 = vmatprep.subr.bf16.mxu0 0
    %354 = vmatpush1.bf16.msra.mxu0 0
    %355 = vmatprep.subr.bf16.mxu0 0
    %356 = vmatpush1.bf16.msra.mxu0 0
    %357 = vmatprep.mubr.bf16.mxu0 0
    %358 = vmatmul.mubr.bf16.gmra.mrb[0].mxu0 %v214
    %v359 = vpop.f32.mrb[0].mxu0
    %v360 = vadd.f32 %v78, %v359
    %v361 = vpop.f32.mrb[0].mxu0
    %v362 = vadd.f32 %v82, %v361
    %v363 = vpop.f32.mrb[0].mxu0
    %v364 = vadd.f32 %v78, %v363
    %v365 = vpop.f32.mrb[0].mxu0
    %v366 = vadd.f32 %v82, %v365
    %367 = vmatprep.mubr.bf16.mxu0 0
    %368 = vmatmul.mubr.bf16.gmra.mrb[0].mxu0 %v217
    %v369 = vpop.f32.mrb[0].mxu0
    %v370 = vadd.f32 %v78, %v369
    %v371 = vpop.f32.mrb[0].mxu0
    %v372 = vadd.f32 %v82, %v371
    %v373 = vpop.f32.mrb[0].mxu0
    %v374 = vadd.f32 %v78, %v373
    %v375 = vpop.f32.mrb[0].mxu0
    %v376 = vadd.f32 %v82, %v375
    %377 = vdwg.mxu0
    %378 = vmatprep.subr.bf16.mxu0 0
    %379 = vmatpush1.bf16.msra.mxu0 %v176
    %380 = vmatprep.subr.bf16.mxu0 0
    %381 = vmatpush1.bf16.msra.mxu0 %v183
    %382 = vmatprep.subr.bf16.mxu0 0
    %383 = vmatpush1.bf16.msra.mxu0 %v190
    %384 = vmatprep.subr.bf16.mxu0 0
    %385 = vmatpush1.bf16.msra.mxu0 0
    %386 = vmatprep.subr.bf16.mxu0 0
    %387 = vmatpush1.bf16.msra.mxu0 0
    %388 = vmatprep.subr.bf16.mxu0 0
    %389 = vmatpush1.bf16.msra.mxu0 0
    %390 = vmatprep.subr.bf16.mxu0 0
    %391 = vmatpush1.bf16.msra.mxu0 0
    %392 = vmatprep.subr.bf16.mxu0 0
    %393 = vmatpush1.bf16.msra.mxu0 0
    %394 = vmatprep.subr.bf16.mxu0 0
    %395 = vmatpush1.bf16.msra.mxu0 0
    %396 = vmatprep.subr.bf16.mxu0 0
    %397 = vmatpush1.bf16.msra.mxu0 0
    %398 = vmatprep.subr.bf16.mxu0 0
    %399 = vmatpush1.bf16.msra.mxu0 0
    %400 = vmatprep.subr.bf16.mxu0 0
    %401 = vmatpush1.bf16.msra.mxu0 0
    %402 = vmatprep.subr.bf16.mxu0 0
    %403 = vmatpush1.bf16.msra.mxu0 0
    %404 = vmatprep.subr.bf16.mxu0 0
    %405 = vmatpush1.bf16.msra.mxu0 0
    %406 = vmatprep.subr.bf16.mxu0 0
    %407 = vmatpush1.bf16.msra.mxu0 0
    %408 = vmatprep.subr.bf16.mxu0 0
    %409 = vmatpush1.bf16.msra.mxu0 0
    %410 = vmatprep.mubr.bf16.mxu0 0
    %411 = vmatmul.mubr.bf16.gmra.mrb[0].mxu0 %v214
    %v412 = vpop.f32.mrb[0].mxu0
    %v413 = vadd.f32 %v86, %v412
    %v414 = vpop.f32.mrb[0].mxu0
    %v415 = vpop.f32.mrb[0].mxu0
    %v416 = vadd.f32 %v86, %v415
    %v417 = vpop.f32.mrb[0].mxu0
    %418 = vmatprep.mubr.bf16.mxu0 0
    %419 = vmatmul.mubr.bf16.gmra.mrb[0].mxu0 %v217
    %v420 = vpop.f32.mrb[0].mxu0
    %v421 = vadd.f32 %v86, %v420
    %v422 = vpop.f32.mrb[0].mxu0
    %v423 = vpop.f32.mrb[0].mxu0
    %v424 = vadd.f32 %v86, %v423
    %v425 = vpop.f32.mrb[0].mxu0
    %426 = vdwg.mxu0
    %v427 = vmax.f32 %v254, 0.0
    %v428 = vmax.f32 %v256, 0.0
    %v429 = vmax.f32 %v307, 0.0
    %v430 = vmax.f32 %v309, 0.0
    %v431 = vmax.f32 %v360, 0.0
    %v432 = vmax.f32 %v362, 0.0
    %v433 = vmax.f32 %v413, 0.0
    %v434 = vmax.f32 %v258, 0.0
    %v435 = vmax.f32 %v260, 0.0
    %v436 = vmax.f32 %v311, 0.0
    %v437 = vmax.f32 %v313, 0.0
    %v438 = vmax.f32 %v364, 0.0
    %v439 = vmax.f32 %v366, 0.0
    %v440 = vmax.f32 %v416, 0.0
    %v441 = vmax.f32 %v264, 0.0
    %v442 = vmax.f32 %v266, 0.0
    %v443 = vmax.f32 %v317, 0.0
    %v444 = vmax.f32 %v319, 0.0
    %v445 = vmax.f32 %v370, 0.0
    %v446 = vmax.f32 %v372, 0.0
    %v447 = vmax.f32 %v421, 0.0
    %v448 = vmax.f32 %v268, 0.0
    %v449 = vmax.f32 %v270, 0.0
    %v450 = vmax.f32 %v321, 0.0
    %v451 = vmax.f32 %v323, 0.0
    %v452 = vmax.f32 %v374, 0.0
    %v453 = vmax.f32 %v376, 0.0
    %v454 = vmax.f32 %v424, 0.0
    %v455 = vpack.c.bf16 %v434, %v427
    %v456 = vpack.c.bf16 %v435, %v428
    %v457 = vpack.c.bf16 %v436, %v429
    %v458 = vpack.c.bf16 %v437, %v430
    %v459 = vpack.c.bf16 %v438, %v431
    %v460 = vpack.c.bf16 %v439, %v432
    %v461 = vpack.c.bf16 %v440, %v433
    %v462 = vpack.c.bf16 %v448, %v441
    %v463 = vpack.c.bf16 %v449, %v442
    %v464 = vpack.c.bf16 %v450, %v443
    %v465 = vpack.c.bf16 %v451, %v444
    %v466 = vpack.c.bf16 %v452, %v445
    %v467 = vpack.c.bf16 %v453, %v446
    %v468 = vpack.c.bf16 %v454, %v447
    %v483 = vunpack.c.l.b16 %v455
    %v484 = vunpack.c.l.b16 %v456
    %v485 = vunpack.c.l.b16 %v457
    %v486 = vunpack.c.l.b16 %v458
    %v487 = vunpack.c.l.b16 %v459
    %v488 = vunpack.c.l.b16 %v460
    %v489 = vunpack.c.l.b16 %v461
    %v490 = vunpack.c.h.b16 %v455
    %v491 = vunpack.c.h.b16 %v456
    %v492 = vunpack.c.h.b16 %v457
    %v493 = vunpack.c.h.b16 %v458
    %v494 = vunpack.c.h.b16 %v459
    %v495 = vunpack.c.h.b16 %v460
    %v496 = vunpack.c.h.b16 %v461
    %v497 = vunpack.c.l.b16 %v462
    %v498 = vunpack.c.l.b16 %v463
    %v499 = vunpack.c.l.b16 %v464
    %v500 = vunpack.c.l.b16 %v465
    %v501 = vunpack.c.l.b16 %v466
    %v502 = vunpack.c.l.b16 %v467
    %v503 = vunpack.c.l.b16 %v468
    %v504 = vunpack.c.h.b16 %v462
    %v505 = vunpack.c.h.b16 %v463
    %v506 = vunpack.c.h.b16 %v464
    %v507 = vunpack.c.h.b16 %v465
    %v508 = vunpack.c.h.b16 %v466
    %v509 = vunpack.c.h.b16 %v467
    %v510 = vunpack.c.h.b16 %v468
    %v511 = vpack.c.b16 %v484, %v483
    %v512 = vpack.c.b16 %v486, %v485
    %v513 = vpack.c.b16 %v488, %v487
    %v514 = vpack.c.b16 %v489, %v489
    %v515 = vpack.c.b16 %v491, %v490
    %v516 = vpack.c.b16 %v493, %v492
    %v517 = vpack.c.b16 %v495, %v494
    %v518 = vpack.c.b16 %v496, %v496
    %v519 = vpack.c.b16 %v498, %v497
    %v520 = vpack.c.b16 %v500, %v499
    %v521 = vpack.c.b16 %v502, %v501
    %v522 = vpack.c.b16 %v503, %v503
    %v523 = vpack.c.b16 %v505, %v504
    %v524 = vpack.c.b16 %v507, %v506
    %v525 = vpack.c.b16 %v509, %v508
    %v526 = vpack.c.b16 %v510, %v510
    %543 = vst [vmem:[%s3] sm:$0xff] %v511
    %544 = vst [vmem:[%s3 + $0x8] sm:$0xff] %v512
    %545 = vst [vmem:[%s3 + $0x10] sm:$0xff] %v513
    %546 = vst [vmem:[%s3 + $0x18] sm:$0xf] %v514
    %547 = vst [vmem:[%s3 + $0x1c] sm:$0xff] %v515
    %548 = vst [vmem:[%s3 + $0x24] sm:$0xff] %v516
    %549 = vst [vmem:[%s3 + $0x2c] sm:$0xff] %v517
    %550 = vst [vmem:[%s3 + $0x34] sm:$0xf] %v518
    %551 = vst [vmem:[%s3 + $0x38] sm:$0xff] %v519
    %552 = vst [vmem:[%s3 + $0x40] sm:$0xff] %v520
    %553 = vst [vmem:[%s3 + $0x48] sm:$0xff] %v521
    %554 = vst [vmem:[%s3 + $0x50] sm:$0xf] %v522
    %555 = vst [vmem:[%s3 + $0x54] sm:$0xff] %v523
    %556 = vst [vmem:[%s3 + $0x5c] sm:$0xff] %v524
    %557 = vst [vmem:[%s3 + $0x64] sm:$0xff] %v525
    %558 = vst [vmem:[%s3 + $0x6c] sm:$0xf] %v526
    // Predicated region
    $region18: #{encoder_forward.4} parent=1 // pred_check
      _
    $region19: #{encoder_forward.4} parent=1 // pred_check_branch
      %560 = sbr.rel (0) target = $region21
    $region20: #{encoder_forward.4} parent=1 // pred_region
      _
    $region21: #{encoder_forward.4} parent=1 // pred_fallthru
      _
    // Predicated region
    $region22: #{encoder_forward.4} parent=1 // pred_check
      _
    $region23: #{encoder_forward.4} parent=1 // pred_check_branch
      %562 = sbr.rel (0) target = $region25
    $region24: #{encoder_forward.4} parent=1 // pred_region
      _
    $region25: #{encoder_forward.4} parent=1 // pred_fallthru
      _
    %563 = vsyncpa [#allocation3], 1

// kernel: encoder_forward.5
$region0: #{encoder_forward.5}
  #allocation0 [shape = 'u32[]', space=smem, size = 0x4, offset = 0x4, fixed_abs, tag = 'smem constant byte address 0x4 - core index']
  #allocation1 [shape = 'u32[144,128]{1,0:T(1,128)}', space=vmem, size = 0x12000, scoped, tag = 'internal scratch']
  %s0 = inlined_call_operand.vmem [shape: bf16[48,1152], index: 0, kind: input, shape index: {}]
  %s1 = inlined_call_operand.vmem [shape: bf16[1152,128], index: 1, kind: input, shape index: {}]
  %s2 = inlined_call_operand.vmem [shape: f32[1,128], index: 2, kind: input, shape index: {}]
  %s3 = inlined_call_operand.vmem [shape: bf16[48,128], index: 3, kind: output, shape index: {}]
  %s4 = sld [smem:[#allocation0]]
  $region22: #{encoder_forward.5} parent=0
    _
  %s6 = ssub.s32 1, %s4
  %s7 = scalar_select 0, %s6, %s4
  // Predicated region
  $region2: #{encoder_forward.5} parent=0 // pred_check
    _
  $region3: #{encoder_forward.5} parent=0 // pred_check_branch
    %9 = sbr.rel (0) target = $region5
  $region4: #{encoder_forward.5} parent=0 // pred_region
    _
  $region5: #{encoder_forward.5} parent=0 // pred_fallthru
    _
  // Predicated region
  $region6: #{encoder_forward.5} parent=0 // pred_check
    _
  $region7: #{encoder_forward.5} parent=0 // pred_check_branch
    %11 = sbr.rel (0) target = $region9
  $region8: #{encoder_forward.5} parent=0 // pred_region
    _
  $region9: #{encoder_forward.5} parent=0 // pred_fallthru
    _
  // Predicated region
  $region10: #{encoder_forward.5} parent=0 // pred_check
    _
  $region11: #{encoder_forward.5} parent=0 // pred_check_branch
    %13 = sbr.rel (0) target = $region13
  $region12: #{encoder_forward.5} parent=0 // pred_region
    _
  $region13: #{encoder_forward.5} parent=0 // pred_fallthru
    _
  %v15 = vld [vmem:[%s0] sm:$0xff]
  %v16 = vld [vmem:[%s0 + $0x8] sm:$0xff]
  %v17 = vld [vmem:[%s0 + $0x10] sm:$0xff]
  %v18 = vld [vmem:[%s0 + $0x18] sm:$0xff]
  %v19 = vld [vmem:[%s0 + $0x20] sm:$0xf]
  %v20 = vld [vmem:[%s0 + $0x24] sm:$0xff]
  %v21 = vld [vmem:[%s0 + $0x2c] sm:$0xff]
  %v22 = vld [vmem:[%s0 + $0x34] sm:$0xff]
  %v23 = vld [vmem:[%s0 + $0x3c] sm:$0xff]
  %v24 = vld [vmem:[%s0 + $0x44] sm:$0xf]
  %v25 = vld [vmem:[%s0 + $0x48] sm:$0xff]
  %v26 = vld [vmem:[%s0 + $0x50] sm:$0xff]
  %v27 = vld [vmem:[%s0 + $0x58] sm:$0xff]
  %v28 = vld [vmem:[%s0 + $0x60] sm:$0xff]
  %v29 = vld [vmem:[%s0 + $0x68] sm:$0xf]
  %v30 = vld [vmem:[%s0 + $0x6c] sm:$0xff]
  %v31 = vld [vmem:[%s0 + $0x74] sm:$0xff]
  %v32 = vld [vmem:[%s0 + $0x7c] sm:$0xff]
  %v33 = vld [vmem:[%s0 + $0x84] sm:$0xff]
  %v34 = vld [vmem:[%s0 + $0x8c] sm:$0xf]
  %v35 = vld [vmem:[%s0 + $0x90] sm:$0xff]
  %v36 = vld [vmem:[%s0 + $0x98] sm:$0xff]
  %v37 = vld [vmem:[%s0 + $0xa0] sm:$0xff]
  %v38 = vld [vmem:[%s0 + $0xa8] sm:$0xff]
  %v39 = vld [vmem:[%s0 + $0xb0] sm:$0xf]
  %v40 = vld [vmem:[%s0 + $0xb4] sm:$0xff]
  %v41 = vld [vmem:[%s0 + $0xbc] sm:$0xff]
  %v42 = vld [vmem:[%s0 + $0xc4] sm:$0xff]
  %v43 = vld [vmem:[%s0 + $0xcc] sm:$0xff]
  %v44 = vld [vmem:[%s0 + $0xd4] sm:$0xf]
  %v45 = vld [vmem:[%s1] sm:$0xf]
  %v46 = vld [vmem:[%s1 + $0x4] sm:$0xf]
  %v47 = vld [vmem:[%s1 + $0x8] sm:$0xf]
  %v48 = vld [vmem:[%s1 + $0xc] sm:$0xf]
  %v49 = vld [vmem:[%s1 + $0x10] sm:$0xf]
  %v50 = vld [vmem:[%s1 + $0x14] sm:$0xf]
  %v51 = vld [vmem:[%s1 + $0x18] sm:$0xf]
  %v52 = vld [vmem:[%s1 + $0x1c] sm:$0xf]
  %v53 = vld [vmem:[%s1 + $0x20] sm:$0xf]
  %v54 = vld [vmem:[%s1 + $0x24] sm:$0xf]
  %v55 = vld [vmem:[%s1 + $0x28] sm:$0xf]
  %v56 = vld [vmem:[%s1 + $0x2c] sm:$0xf]
  %v57 = vld [vmem:[%s1 + $0x30] sm:$0xf]
  %v58 = vld [vmem:[%s1 + $0x34] sm:$0xf]
  %v59 = vld [vmem:[%s1 + $0x38] sm:$0xf]
  %v60 = vld [vmem:[%s1 + $0x3c] sm:$0xf]
  %v61 = vld [vmem:[%s1 + $0x40] sm:$0xf]
  %v62 = vld [vmem:[%s1 + $0x44] sm:$0xf]
  %v63 = vld [vmem:[%s1 + $0x48] sm:$0xf]
  %v64 = vld [vmem:[%s1 + $0x4c] sm:$0xf]
  %v65 = vld [vmem:[%s1 + $0x50] sm:$0xf]
  %v66 = vld [vmem:[%s1 + $0x54] sm:$0xf]
  %v67 = vld [vmem:[%s1 + $0x58] sm:$0xf]
  %v68 = vld [vmem:[%s1 + $0x5c] sm:$0xf]
  %v69 = vld [vmem:[%s1 + $0x60] sm:$0xf]
  %v70 = vld [vmem:[%s1 + $0x64] sm:$0xf]
  %v71 = vld [vmem:[%s1 + $0x68] sm:$0xf]
  %v72 = vld [vmem:[%s1 + $0x6c] sm:$0xf]
  %v73 = vld [vmem:[%s1 + $0x70] sm:$0xf]
  %v74 = vld [vmem:[%s1 + $0x74] sm:$0xf]
  %v75 = vld [vmem:[%s1 + $0x78] sm:$0xf]
  %v76 = vld [vmem:[%s1 + $0x7c] sm:$0xf]
  %v77 = vld [vmem:[%s1 + $0x80] sm:$0xf]
  %v78 = vld [vmem:[%s1 + $0x84] sm:$0xf]
  %v79 = vld [vmem:[%s1 + $0x88] sm:$0xf]
  %v80 = vld [vmem:[%s1 + $0x8c] sm:$0xf]
  %v81 = vld [vmem:[%s1 + $0x90] sm:$0xf]
  %v82 = vld [vmem:[%s1 + $0x94] sm:$0xf]
  %v83 = vld [vmem:[%s1 + $0x98] sm:$0xf]
  %v84 = vld [vmem:[%s1 + $0x9c] sm:$0xf]
  %v85 = vld [vmem:[%s1 + $0xa0] sm:$0xf]
  %v86 = vld [vmem:[%s1 + $0xa4] sm:$0xf]
  %v87 = vld [vmem:[%s1 + $0xa8] sm:$0xf]
  %v88 = vld [vmem:[%s1 + $0xac] sm:$0xf]
  %v89 = vld [vmem:[%s1 + $0xb0] sm:$0xf]
  %v90 = vld [vmem:[%s1 + $0xb4] sm:$0xf]
  %v91 = vld [vmem:[%s1 + $0xb8] sm:$0xf]
  %v92 = vld [vmem:[%s1 + $0xbc] sm:$0xf]
  %v93 = vld [vmem:[%s1 + $0xc0] sm:$0xf]
  %v94 = vld [vmem:[%s1 + $0xc4] sm:$0xf]
  %v95 = vld [vmem:[%s1 + $0xc8] sm:$0xf]
  %v96 = vld [vmem:[%s1 + $0xcc] sm:$0xf]
  %v97 = vld [vmem:[%s1 + $0xd0] sm:$0xf]
  %v98 = vld [vmem:[%s1 + $0xd4] sm:$0xf]
  %v99 = vld [vmem:[%s1 + $0xd8] sm:$0xf]
  %v100 = vld [vmem:[%s1 + $0xdc] sm:$0xf]
  %v101 = vld [vmem:[%s1 + $0xe0] sm:$0xf]
  %v102 = vld [vmem:[%s1 + $0xe4] sm:$0xf]
  %v103 = vld [vmem:[%s1 + $0xe8] sm:$0xf]
  %v104 = vld [vmem:[%s1 + $0xec] sm:$0xf]
  %v105 = vld [vmem:[%s1 + $0xf0] sm:$0xf]
  %v106 = vld [vmem:[%s1 + $0xf4] sm:$0xf]
  %v107 = vld [vmem:[%s1 + $0xf8] sm:$0xf]
  %v108 = vld [vmem:[%s1 + $0xfc] sm:$0xf]
  %v109 = vld [vmem:[%s1 + $0x100] sm:$0xf]
  %v110 = vld [vmem:[%s1 + $0x104] sm:$0xf]
  %v111 = vld [vmem:[%s1 + $0x108] sm:$0xf]
  %v112 = vld [vmem:[%s1 + $0x10c] sm:$0xf]
  %v113 = vld [vmem:[%s1 + $0x110] sm:$0xf]
  %v114 = vld [vmem:[%s1 + $0x114] sm:$0xf]
  %v115 = vld [vmem:[%s1 + $0x118] sm:$0xf]
  %v116 = vld [vmem:[%s1 + $0x11c] sm:$0xf]
  %v117 = vld [vmem:[%s1 + $0x120] sm:$0xf]
  %v118 = vld [vmem:[%s1 + $0x124] sm:$0xf]
  %v119 = vld [vmem:[%s1 + $0x128] sm:$0xf]
  %v120 = vld [vmem:[%s1 + $0x12c] sm:$0xf]
  %v121 = vld [vmem:[%s1 + $0x130] sm:$0xf]
  %v122 = vld [vmem:[%s1 + $0x134] sm:$0xf]
  %v123 = vld [vmem:[%s1 + $0x138] sm:$0xf]
  %v124 = vld [vmem:[%s1 + $0x13c] sm:$0xf]
  %v125 = vld [vmem:[%s1 + $0x140] sm:$0xf]
  %v126 = vld [vmem:[%s1 + $0x144] sm:$0xf]
  %v127 = vld [vmem:[%s1 + $0x148] sm:$0xf]
  %v128 = vld [vmem:[%s1 + $0x14c] sm:$0xf]
  %v129 = vld [vmem:[%s1 + $0x150] sm:$0xf]
  %v130 = vld [vmem:[%s1 + $0x154] sm:$0xf]
  %v131 = vld [vmem:[%s1 + $0x158] sm:$0xf]
  %v132 = vld [vmem:[%s1 + $0x15c] sm:$0xf]
  %v133 = vld [vmem:[%s1 + $0x160] sm:$0xf]
  %v134 = vld [vmem:[%s1 + $0x164] sm:$0xf]
  %v135 = vld [vmem:[%s1 + $0x168] sm:$0xf]
  %v136 = vld [vmem:[%s1 + $0x16c] sm:$0xf]
  %v137 = vld [vmem:[%s1 + $0x170] sm:$0xf]
  %v138 = vld [vmem:[%s1 + $0x174] sm:$0xf]
  %v139 = vld [vmem:[%s1 + $0x178] sm:$0xf]
  %v140 = vld [vmem:[%s1 + $0x17c] sm:$0xf]
  %v141 = vld [vmem:[%s1 + $0x180] sm:$0xf]
  %v142 = vld [vmem:[%s1 + $0x184] sm:$0xf]
  %v143 = vld [vmem:[%s1 + $0x188] sm:$0xf]
  %v144 = vld [vmem:[%s1 + $0x18c] sm:$0xf]
  %v145 = vld [vmem:[%s1 + $0x190] sm:$0xf]
  %v146 = vld [vmem:[%s1 + $0x194] sm:$0xf]
  %v147 = vld [vmem:[%s1 + $0x198] sm:$0xf]
  %v148 = vld [vmem:[%s1 + $0x19c] sm:$0xf]
  %v149 = vld [vmem:[%s1 + $0x1a0] sm:$0xf]
  %v150 = vld [vmem:[%s1 + $0x1a4] sm:$0xf]
  %v151 = vld [vmem:[%s1 + $0x1a8] sm:$0xf]
  %v152 = vld [vmem:[%s1 + $0x1ac] sm:$0xf]
  %v153 = vld [vmem:[%s1 + $0x1b0] sm:$0xf]
  %v154 = vld [vmem:[%s1 + $0x1b4] sm:$0xf]
  %v155 = vld [vmem:[%s1 + $0x1b8] sm:$0xf]
  %v156 = vld [vmem:[%s1 + $0x1bc] sm:$0xf]
  %v157 = vld [vmem:[%s1 + $0x1c0] sm:$0xf]
  %v158 = vld [vmem:[%s1 + $0x1c4] sm:$0xf]
  %v159 = vld [vmem:[%s1 + $0x1c8] sm:$0xf]
  %v160 = vld [vmem:[%s1 + $0x1cc] sm:$0xf]
  %v161 = vld [vmem:[%s1 + $0x1d0] sm:$0xf]
  %v162 = vld [vmem:[%s1 + $0x1d4] sm:$0xf]
  %v163 = vld [vmem:[%s1 + $0x1d8] sm:$0xf]
  %v164 = vld [vmem:[%s1 + $0x1dc] sm:$0xf]
  %v165 = vld [vmem:[%s1 + $0x1e0] sm:$0xf]
  %v166 = vld [vmem:[%s1 + $0x1e4] sm:$0xf]
  %v167 = vld [vmem:[%s1 + $0x1e8] sm:$0xf]
  %v168 = vld [vmem:[%s1 + $0x1ec] sm:$0xf]
  %v169 = vld [vmem:[%s1 + $0x1f0] sm:$0xf]
  %v170 = vld [vmem:[%s1 + $0x1f4] sm:$0xf]
  %v171 = vld [vmem:[%s1 + $0x1f8] sm:$0xf]
  %v172 = vld [vmem:[%s1 + $0x1fc] sm:$0xf]
  %v173 = vld [vmem:[%s1 + $0x200] sm:$0xf]
  %v174 = vld [vmem:[%s1 + $0x204] sm:$0xf]
  %v175 = vld [vmem:[%s1 + $0x208] sm:$0xf]
  %v176 = vld [vmem:[%s1 + $0x20c] sm:$0xf]
  %v177 = vld [vmem:[%s1 + $0x210] sm:$0xf]
  %v178 = vld [vmem:[%s1 + $0x214] sm:$0xf]
  %v179 = vld [vmem:[%s1 + $0x218] sm:$0xf]
  %v180 = vld [vmem:[%s1 + $0x21c] sm:$0xf]
  %v181 = vld [vmem:[%s1 + $0x220] sm:$0xf]
  %v182 = vld [vmem:[%s1 + $0x224] sm:$0xf]
  %v183 = vld [vmem:[%s1 + $0x228] sm:$0xf]
  %v184 = vld [vmem:[%s1 + $0x22c] sm:$0xf]
  %v185 = vld [vmem:[%s1 + $0x230] sm:$0xf]
  %v186 = vld [vmem:[%s1 + $0x234] sm:$0xf]
  %v187 = vld [vmem:[%s1 + $0x238] sm:$0xf]
  %v188 = vld [vmem:[%s1 + $0x23c] sm:$0xf]
  %v189 = vld [vmem:[%s2] sm:$0x1]
  %v191 = vlaneseq
  %v192 = vshrl.u32 %v191, 7
  %v193 = vsub.s32 0, %v192
  %v194 = vrot.slane %v189, %v193
  %v226 = vunpack.c.l.b16 %v15
  %v227 = vunpack.c.h.b16 %v15
  %v228 = vunpack.c.l.b16 %v16
  %v229 = vunpack.c.h.b16 %v16
  %v230 = vunpack.c.l.b16 %v17
  %v231 = vunpack.c.h.b16 %v17
  %v232 = vunpack.c.l.b16 %v18
  %v233 = vunpack.c.h.b16 %v18
  %v234 = vunpack.c.l.b16 %v19
  %v235 = vunpack.c.l.b16 %v20
  %v236 = vunpack.c.h.b16 %v20
  %v237 = vunpack.c.l.b16 %v21
  %v238 = vunpack.c.h.b16 %v21
  %v239 = vunpack.c.l.b16 %v22
  %v240 = vunpack.c.h.b16 %v22
  %v241 = vunpack.c.l.b16 %v23
  %v242 = vunpack.c.h.b16 %v23
  %v243 = vunpack.c.l.b16 %v24
  %v244 = vunpack.c.l.b16 %v25
  %v245 = vunpack.c.h.b16 %v25
  %v246 = vunpack.c.l.b16 %v26
  %v247 = vunpack.c.h.b16 %v26
  %v248 = vunpack.c.l.b16 %v27
  %v249 = vunpack.c.h.b16 %v27
  %v250 = vunpack.c.l.b16 %v28
  %v251 = vunpack.c.h.b16 %v28
  %v252 = vunpack.c.l.b16 %v29
  %v253 = vunpack.c.l.b16 %v30
  %v254 = vunpack.c.h.b16 %v30
  %v255 = vunpack.c.l.b16 %v31
  %v256 = vunpack.c.h.b16 %v31
  %v257 = vunpack.c.l.b16 %v32
  %v258 = vunpack.c.h.b16 %v32
  %v259 = vunpack.c.l.b16 %v33
  %v260 = vunpack.c.h.b16 %v33
  %v261 = vunpack.c.l.b16 %v34
  %v262 = vunpack.c.l.b16 %v35
  %v263 = vunpack.c.h.b16 %v35
  %v264 = vunpack.c.l.b16 %v36
  %v265 = vunpack.c.h.b16 %v36
  %v266 = vunpack.c.l.b16 %v37
  %v267 = vunpack.c.h.b16 %v37
  %v268 = vunpack.c.l.b16 %v38
  %v269 = vunpack.c.h.b16 %v38
  %v270 = vunpack.c.l.b16 %v39
  %v271 = vunpack.c.l.b16 %v40
  %v272 = vunpack.c.h.b16 %v40
  %v273 = vunpack.c.l.b16 %v41
  %v274 = vunpack.c.h.b16 %v41
  %v275 = vunpack.c.l.b16 %v42
  %v276 = vunpack.c.h.b16 %v42
  %v277 = vunpack.c.l.b16 %v43
  %v278 = vunpack.c.h.b16 %v43
  %v279 = vunpack.c.l.b16 %v44
  %v280 = vpack.c.b16 %v235, %v226
  %v281 = vpack.c.b16 %v236, %v227
  %v282 = vpack.c.b16 %v237, %v228
  %v283 = vpack.c.b16 %v238, %v229
  %v284 = vpack.c.b16 %v239, %v230
  %v285 = vpack.c.b16 %v240, %v231
  %v286 = vpack.c.b16 %v241, %v232
  %v287 = vpack.c.b16 %v242, %v233
  %v288 = vpack.c.b16 %v243, %v234
  %v289 = vpack.c.b16 %v253, %v244
  %v290 = vpack.c.b16 %v254, %v245
  %v291 = vpack.c.b16 %v255, %v246
  %v292 = vpack.c.b16 %v256, %v247
  %v293 = vpack.c.b16 %v257, %v248
  %v294 = vpack.c.b16 %v258, %v249
  %v295 = vpack.c.b16 %v259, %v250
  %v296 = vpack.c.b16 %v260, %v251
  %v297 = vpack.c.b16 %v261, %v252
  %v298 = vpack.c.b16 %v271, %v262
  %v299 = vpack.c.b16 %v272, %v263
  %v300 = vpack.c.b16 %v273, %v264
  %v301 = vpack.c.b16 %v274, %v265
  %v302 = vpack.c.b16 %v275, %v266
  %v303 = vpack.c.b16 %v276, %v267
  %v304 = vpack.c.b16 %v277, %v268
  %v305 = vpack.c.b16 %v278, %v269
  %v306 = vpack.c.b16 %v279, %v270
  %v478 = vunpack.c.l.b16 %v45
  %v479 = vunpack.c.l.b16 %v46
  %v480 = vunpack.c.l.b16 %v47
  %v481 = vunpack.c.l.b16 %v48
  %v482 = vunpack.c.l.b16 %v49
  %v483 = vunpack.c.l.b16 %v50
  %v484 = vunpack.c.l.b16 %v51
  %v485 = vunpack.c.l.b16 %v52
  %v486 = vunpack.c.l.b16 %v53
  %v487 = vunpack.c.l.b16 %v54
  %v488 = vunpack.c.l.b16 %v55
  %v489 = vunpack.c.l.b16 %v56
  %v490 = vunpack.c.l.b16 %v57
  %v491 = vunpack.c.l.b16 %v58
  %v492 = vunpack.c.l.b16 %v59
  %v493 = vunpack.c.l.b16 %v60
  %v494 = vunpack.c.l.b16 %v61
  %v495 = vunpack.c.l.b16 %v62
  %v496 = vunpack.c.l.b16 %v63
  %v497 = vunpack.c.l.b16 %v64
  %v498 = vunpack.c.l.b16 %v65
  %v499 = vunpack.c.l.b16 %v66
  %v500 = vunpack.c.l.b16 %v67
  %v501 = vunpack.c.l.b16 %v68
  %v502 = vunpack.c.l.b16 %v69
  %v503 = vunpack.c.l.b16 %v70
  %v504 = vunpack.c.l.b16 %v71
  %v505 = vunpack.c.l.b16 %v72
  %v506 = vunpack.c.l.b16 %v73
  %v507 = vunpack.c.l.b16 %v74
  %v508 = vunpack.c.l.b16 %v75
  %v509 = vunpack.c.l.b16 %v76
  %v510 = vunpack.c.l.b16 %v77
  %v511 = vunpack.c.l.b16 %v78
  %v512 = vunpack.c.l.b16 %v79
  %v513 = vunpack.c.l.b16 %v80
  %v514 = vunpack.c.l.b16 %v81
  %v515 = vunpack.c.l.b16 %v82
  %v516 = vunpack.c.l.b16 %v83
  %v517 = vunpack.c.l.b16 %v84
  %v518 = vunpack.c.l.b16 %v85
  %v519 = vunpack.c.l.b16 %v86
  %v520 = vunpack.c.l.b16 %v87
  %v521 = vunpack.c.l.b16 %v88
  %v522 = vunpack.c.l.b16 %v89
  %v523 = vunpack.c.l.b16 %v90
  %v524 = vunpack.c.l.b16 %v91
  %v525 = vunpack.c.l.b16 %v92
  %v526 = vunpack.c.l.b16 %v93
  %v527 = vunpack.c.l.b16 %v94
  %v528 = vunpack.c.l.b16 %v95
  %v529 = vunpack.c.l.b16 %v96
  %v530 = vunpack.c.l.b16 %v97
  %v531 = vunpack.c.l.b16 %v98
  %v532 = vunpack.c.l.b16 %v99
  %v533 = vunpack.c.l.b16 %v100
  %v534 = vunpack.c.l.b16 %v101
  %v535 = vunpack.c.l.b16 %v102
  %v536 = vunpack.c.l.b16 %v103
  %v537 = vunpack.c.l.b16 %v104
  %v538 = vunpack.c.l.b16 %v105
  %v539 = vunpack.c.l.b16 %v106
  %v540 = vunpack.c.l.b16 %v107
  %v541 = vunpack.c.l.b16 %v108
  %v542 = vunpack.c.l.b16 %v109
  %v543 = vunpack.c.l.b16 %v110
  %v544 = vunpack.c.l.b16 %v111
  %v545 = vunpack.c.l.b16 %v112
  %v546 = vunpack.c.l.b16 %v113
  %v547 = vunpack.c.l.b16 %v114
  %v548 = vunpack.c.l.b16 %v115
  %v549 = vunpack.c.l.b16 %v116
  %v550 = vunpack.c.l.b16 %v117
  %v551 = vunpack.c.l.b16 %v118
  %v552 = vunpack.c.l.b16 %v119
  %v553 = vunpack.c.l.b16 %v120
  %v554 = vunpack.c.l.b16 %v121
  %v555 = vunpack.c.l.b16 %v122
  %v556 = vunpack.c.l.b16 %v123
  %v557 = vunpack.c.l.b16 %v124
  %v558 = vunpack.c.l.b16 %v125
  %v559 = vunpack.c.l.b16 %v126
  %v560 = vunpack.c.l.b16 %v127
  %v561 = vunpack.c.l.b16 %v128
  %v562 = vunpack.c.l.b16 %v129
  %v563 = vunpack.c.l.b16 %v130
  %v564 = vunpack.c.l.b16 %v131
  %v565 = vunpack.c.l.b16 %v132
  %v566 = vunpack.c.l.b16 %v133
  %v567 = vunpack.c.l.b16 %v134
  %v568 = vunpack.c.l.b16 %v135
  %v569 = vunpack.c.l.b16 %v136
  %v570 = vunpack.c.l.b16 %v137
  %v571 = vunpack.c.l.b16 %v138
  %v572 = vunpack.c.l.b16 %v139
  %v573 = vunpack.c.l.b16 %v140
  %v574 = vunpack.c.l.b16 %v141
  %v575 = vunpack.c.l.b16 %v142
  %v576 = vunpack.c.l.b16 %v143
  %v577 = vunpack.c.l.b16 %v144
  %v578 = vunpack.c.l.b16 %v145
  %v579 = vunpack.c.l.b16 %v146
  %v580 = vunpack.c.l.b16 %v147
  %v581 = vunpack.c.l.b16 %v148
  %v582 = vunpack.c.l.b16 %v149
  %v583 = vunpack.c.l.b16 %v150
  %v584 = vunpack.c.l.b16 %v151
  %v585 = vunpack.c.l.b16 %v152
  %v586 = vunpack.c.l.b16 %v153
  %v587 = vunpack.c.l.b16 %v154
  %v588 = vunpack.c.l.b16 %v155
  %v589 = vunpack.c.l.b16 %v156
  %v590 = vunpack.c.l.b16 %v157
  %v591 = vunpack.c.l.b16 %v158
  %v592 = vunpack.c.l.b16 %v159
  %v593 = vunpack.c.l.b16 %v160
  %v594 = vunpack.c.l.b16 %v161
  %v595 = vunpack.c.l.b16 %v162
  %v596 = vunpack.c.l.b16 %v163
  %v597 = vunpack.c.l.b16 %v164
  %v598 = vunpack.c.l.b16 %v165
  %v599 = vunpack.c.l.b16 %v166
  %v600 = vunpack.c.l.b16 %v167
  %v601 = vunpack.c.l.b16 %v168
  %v602 = vunpack.c.l.b16 %v169
  %v603 = vunpack.c.l.b16 %v170
  %v604 = vunpack.c.l.b16 %v171
  %v605 = vunpack.c.l.b16 %v172
  %v606 = vunpack.c.l.b16 %v173
  %v607 = vunpack.c.l.b16 %v174
  %v608 = vunpack.c.l.b16 %v175
  %v609 = vunpack.c.l.b16 %v176
  %v610 = vunpack.c.l.b16 %v177
  %v611 = vunpack.c.l.b16 %v178
  %v612 = vunpack.c.l.b16 %v179
  %v613 = vunpack.c.l.b16 %v180
  %v614 = vunpack.c.l.b16 %v181
  %v615 = vunpack.c.l.b16 %v182
  %v616 = vunpack.c.l.b16 %v183
  %v617 = vunpack.c.l.b16 %v184
  %v618 = vunpack.c.l.b16 %v185
  %v619 = vunpack.c.l.b16 %v186
  %v620 = vunpack.c.l.b16 %v187
  %v621 = vunpack.c.l.b16 %v188
  %v622 = vpack.c.b16 %v479, %v478
  %v623 = vpack.c.b16 %v481, %v480
  %v624 = vpack.c.b16 %v483, %v482
  %v625 = vpack.c.b16 %v485, %v484
  %v626 = vpack.c.b16 %v487, %v486
  %v627 = vpack.c.b16 %v489, %v488
  %v628 = vpack.c.b16 %v491, %v490
  %v629 = vpack.c.b16 %v493, %v492
  %v630 = vpack.c.b16 %v495, %v494
  %v631 = vpack.c.b16 %v497, %v496
  %v632 = vpack.c.b16 %v499, %v498
  %v633 = vpack.c.b16 %v501, %v500
  %v634 = vpack.c.b16 %v503, %v502
  %v635 = vpack.c.b16 %v505, %v504
  %v636 = vpack.c.b16 %v507, %v506
  %v637 = vpack.c.b16 %v509, %v508
  %v638 = vpack.c.b16 %v511, %v510
  %v639 = vpack.c.b16 %v513, %v512
  %v640 = vpack.c.b16 %v515, %v514
  %v641 = vpack.c.b16 %v517, %v516
  %v642 = vpack.c.b16 %v519, %v518
  %v643 = vpack.c.b16 %v521, %v520
  %v644 = vpack.c.b16 %v523, %v522
  %v645 = vpack.c.b16 %v525, %v524
  %v646 = vpack.c.b16 %v527, %v526
  %v647 = vpack.c.b16 %v529, %v528
  %v648 = vpack.c.b16 %v531, %v530
  %v649 = vpack.c.b16 %v533, %v532
  %v650 = vpack.c.b16 %v535, %v534
  %v651 = vpack.c.b16 %v537, %v536
  %v652 = vpack.c.b16 %v539, %v538
  %v653 = vpack.c.b16 %v541, %v540
  %v654 = vpack.c.b16 %v543, %v542
  %v655 = vpack.c.b16 %v545, %v544
  %v656 = vpack.c.b16 %v547, %v546
  %v657 = vpack.c.b16 %v549, %v548
  %v658 = vpack.c.b16 %v551, %v550
  %v659 = vpack.c.b16 %v553, %v552
  %v660 = vpack.c.b16 %v555, %v554
  %v661 = vpack.c.b16 %v557, %v556
  %v662 = vpack.c.b16 %v559, %v558
  %v663 = vpack.c.b16 %v561, %v560
  %v664 = vpack.c.b16 %v563, %v562
  %v665 = vpack.c.b16 %v565, %v564
  %v666 = vpack.c.b16 %v567, %v566
  %v667 = vpack.c.b16 %v569, %v568
  %v668 = vpack.c.b16 %v571, %v570
  %v669 = vpack.c.b16 %v573, %v572
  %v670 = vpack.c.b16 %v575, %v574
  %v671 = vpack.c.b16 %v577, %v576
  %v672 = vpack.c.b16 %v579, %v578
  %v673 = vpack.c.b16 %v581, %v580
  %v674 = vpack.c.b16 %v583, %v582
  %v675 = vpack.c.b16 %v585, %v584
  %v676 = vpack.c.b16 %v587, %v586
  %v677 = vpack.c.b16 %v589, %v588
  %v678 = vpack.c.b16 %v591, %v590
  %v679 = vpack.c.b16 %v593, %v592
  %v680 = vpack.c.b16 %v595, %v594
  %v681 = vpack.c.b16 %v597, %v596
  %v682 = vpack.c.b16 %v599, %v598
  %v683 = vpack.c.b16 %v601, %v600
  %v684 = vpack.c.b16 %v603, %v602
  %v685 = vpack.c.b16 %v605, %v604
  %v686 = vpack.c.b16 %v607, %v606
  %v687 = vpack.c.b16 %v609, %v608
  %v688 = vpack.c.b16 %v611, %v610
  %v689 = vpack.c.b16 %v613, %v612
  %v690 = vpack.c.b16 %v615, %v614
  %v691 = vpack.c.b16 %v617, %v616
  %v692 = vpack.c.b16 %v619, %v618
  %v693 = vpack.c.b16 %v621, %v620
  %766 = vmatprep.subr.bf16.mxu0 0
  %767 = vmatpush1.bf16.msra.mxu0 %v622
  %768 = vmatprep.subr.bf16.mxu0 0
  %769 = vmatpush1.bf16.msra.mxu0 %v623
  %770 = vmatprep.subr.bf16.mxu0 0
  %771 = vmatpush1.bf16.msra.mxu0 %v624
  %772 = vmatprep.subr.bf16.mxu0 0
  %773 = vmatpush1.bf16.msra.mxu0 %v625
  %774 = vmatprep.subr.bf16.mxu0 0
  %775 = vmatpush1.bf16.msra.mxu0 %v626
  %776 = vmatprep.subr.bf16.mxu0 0
  %777 = vmatpush1.bf16.msra.mxu0 %v627
  %778 = vmatprep.subr.bf16.mxu0 0
  %779 = vmatpush1.bf16.msra.mxu0 %v628
  %780 = vmatprep.subr.bf16.mxu0 0
  %781 = vmatpush1.bf16.msra.mxu0 %v629
  %782 = vmatprep.subr.bf16.mxu0 0
  %783 = vmatpush1.bf16.msra.mxu0 %v630
  %784 = vmatprep.subr.bf16.mxu0 0
  %785 = vmatpush1.bf16.msra.mxu0 %v631
  %786 = vmatprep.subr.bf16.mxu0 0
  %787 = vmatpush1.bf16.msra.mxu0 %v632
  %788 = vmatprep.subr.bf16.mxu0 0
  %789 = vmatpush1.bf16.msra.mxu0 %v633
  %790 = vmatprep.subr.bf16.mxu0 0
  %791 = vmatpush1.bf16.msra.mxu0 %v634
  %792 = vmatprep.subr.bf16.mxu0 0
  %793 = vmatpush1.bf16.msra.mxu0 %v635
  %794 = vmatprep.subr.bf16.mxu0 0
  %795 = vmatpush1.bf16.msra.mxu0 %v636
  %796 = vmatprep.subr.bf16.mxu0 0
  %797 = vmatpush1.bf16.msra.mxu0 %v637
  %798 = vmatprep.mubr.bf16.mxu0 %v281
  %799 = vmatmul.mubr.bf16.gmra.mrb[0].mxu0 %v280
  %v800 = vpop.f32.mrb[0].mxu0
  %v801 = vadd.f32 %v194, %v800
  %v802 = vpop.f32.mrb[0].mxu0
  %v803 = vpop.f32.mrb[0].mxu0
  %v804 = vadd.f32 %v194, %v803
  %v805 = vpop.f32.mrb[0].mxu0
  %806 = vmatprep.mubr.bf16.mxu0 %v290
  %807 = vmatmul.mubr.bf16.gmra.mrb[0].mxu0 %v289
  %v808 = vpop.f32.mrb[0].mxu0
  %v809 = vadd.f32 %v194, %v808
  %v810 = vpop.f32.mrb[0].mxu0
  %v811 = vpop.f32.mrb[0].mxu0
  %v812 = vadd.f32 %v194, %v811
  %v813 = vpop.f32.mrb[0].mxu0
  %814 = vmatprep.mubr.bf16.mxu0 %v299
  %815 = vmatmul.mubr.bf16.gmra.mrb[0].mxu0 %v298
  %v816 = vpop.f32.mrb[0].mxu0
  %v817 = vadd.f32 %v194, %v816
  %v818 = vpop.f32.mrb[0].mxu0
  %v819 = vpop.f32.mrb[0].mxu0
  %v820 = vadd.f32 %v194, %v819
  %v821 = vpop.f32.mrb[0].mxu0
  %822 = vdwg.mxu0
  %823 = vmatprep.subr.bf16.mxu0 0
  %824 = vmatpush1.bf16.msra.mxu0 %v638
  %825 = vmatprep.subr.bf16.mxu0 0
  %826 = vmatpush1.bf16.msra.mxu0 %v639
  %827 = vmatprep.subr.bf16.mxu0 0
  %828 = vmatpush1.bf16.msra.mxu0 %v640
  %829 = vmatprep.subr.bf16.mxu0 0
  %830 = vmatpush1.bf16.msra.mxu0 %v641
  %831 = vmatprep.subr.bf16.mxu0 0
  %832 = vmatpush1.bf16.msra.mxu0 %v642
  %833 = vmatprep.subr.bf16.mxu0 0
  %834 = vmatpush1.bf16.msra.mxu0 %v643
  %835 = vmatprep.subr.bf16.mxu0 0
  %836 = vmatpush1.bf16.msra.mxu0 %v644
  %837 = vmatprep.subr.bf16.mxu0 0
  %838 = vmatpush1.bf16.msra.mxu0 %v645
  %839 = vmatprep.subr.bf16.mxu0 0
  %840 = vmatpush1.bf16.msra.mxu0 %v646
  %841 = vmatprep.subr.bf16.mxu0 0
  %842 = vmatpush1.bf16.msra.mxu0 %v647
  %843 = vmatprep.subr.bf16.mxu0 0
  %844 = vmatpush1.bf16.msra.mxu0 %v648
  %845 = vmatprep.subr.bf16.mxu0 0
  %846 = vmatpush1.bf16.msra.mxu0 %v649
  %847 = vmatprep.subr.bf16.mxu0 0
  %848 = vmatpush1.bf16.msra.mxu0 %v650
  %849 = vmatprep.subr.bf16.mxu0 0
  %850 = vmatpush1.bf16.msra.mxu0 %v651
  %851 = vmatprep.subr.bf16.mxu0 0
  %852 = vmatpush1.bf16.msra.mxu0 %v652
  %853 = vmatprep.subr.bf16.mxu0 0
  %854 = vmatpush1.bf16.msra.mxu0 %v653
  %855 = vmatprep.mubr.bf16.mxu0 %v283
  %856 = vmatmul.mubr.bf16.gmra.mrb[0].mxu0 %v282
  %v857 = vpop.f32.mrb[0].mxu0
  %v858 = vadd.f32 %v801, %v857
  %v859 = vpop.f32.mrb[0].mxu0
  %v860 = vpop.f32.mrb[0].mxu0
  %v861 = vadd.f32 %v804, %v860
  %v862 = vpop.f32.mrb[0].mxu0
  %863 = vmatprep.mubr.bf16.mxu0 %v292
  %864 = vmatmul.mubr.bf16.gmra.mrb[0].mxu0 %v291
  %v865 = vpop.f32.mrb[0].mxu0
  %v866 = vadd.f32 %v809, %v865
  %v867 = vpop.f32.mrb[0].mxu0
  %v868 = vpop.f32.mrb[0].mxu0
  %v869 = vadd.f32 %v812, %v868
  %v870 = vpop.f32.mrb[0].mxu0
  %871 = vmatprep.mubr.bf16.mxu0 %v301
  %872 = vmatmul.mubr.bf16.gmra.mrb[0].mxu0 %v300
  %v873 = vpop.f32.mrb[0].mxu0
  %v874 = vadd.f32 %v817, %v873
  %v875 = vpop.f32.mrb[0].mxu0
  %v876 = vpop.f32.mrb[0].mxu0
  %v877 = vadd.f32 %v820, %v876
  %v878 = vpop.f32.mrb[0].mxu0
  %879 = vdwg.mxu0
  %880 = vmatprep.subr.bf16.mxu0 0
  %881 = vmatpush1.bf16.msra.mxu0 %v654
  %882 = vmatprep.subr.bf16.mxu0 0
  %883 = vmatpush1.bf16.msra.mxu0 %v655
  %884 = vmatprep.subr.bf16.mxu0 0
  %885 = vmatpush1.bf16.msra.mxu0 %v656
  %886 = vmatprep.subr.bf16.mxu0 0
  %887 = vmatpush1.bf16.msra.mxu0 %v657
  %888 = vmatprep.subr.bf16.mxu0 0
  %889 = vmatpush1.bf16.msra.mxu0 %v658
  %890 = vmatprep.subr.bf16.mxu0 0
  %891 = vmatpush1.bf16.msra.mxu0 %v659
  %892 = vmatprep.subr.bf16.mxu0 0
  %893 = vmatpush1.bf16.msra.mxu0 %v660
  %894 = vmatprep.subr.bf16.mxu0 0
  %895 = vmatpush1.bf16.msra.mxu0 %v661
  %896 = vmatprep.subr.bf16.mxu0 0
  %897 = vmatpush1.bf16.msra.mxu0 %v662
  %898 = vmatprep.subr.bf16.mxu0 0
  %899 = vmatpush1.bf16.msra.mxu0 %v663
  %900 = vmatprep.subr.bf16.mxu0 0
  %901 = vmatpush1.bf16.msra.mxu0 %v664
  %902 = vmatprep.subr.bf16.mxu0 0
  %903 = vmatpush1.bf16.msra.mxu0 %v665
  %904 = vmatprep.subr.bf16.mxu0 0
  %905 = vmatpush1.bf16.msra.mxu0 %v666
  %906 = vmatprep.subr.bf16.mxu0 0
  %907 = vmatpush1.bf16.msra.mxu0 %v667
  %908 = vmatprep.subr.bf16.mxu0 0
  %909 = vmatpush1.bf16.msra.mxu0 %v668
  %910 = vmatprep.subr.bf16.mxu0 0
  %911 = vmatpush1.bf16.msra.mxu0 %v669
  %912 = vmatprep.mubr.bf16.mxu0 %v285
  %913 = vmatmul.mubr.bf16.gmra.mrb[0].mxu0 %v284
  %v914 = vpop.f32.mrb[0].mxu0
  %v915 = vadd.f32 %v858, %v914
  %v916 = vpop.f32.mrb[0].mxu0
  %v917 = vpop.f32.mrb[0].mxu0
  %v918 = vadd.f32 %v861, %v917
  %v919 = vpop.f32.mrb[0].mxu0
  %920 = vmatprep.mubr.bf16.mxu0 %v294
  %921 = vmatmul.mubr.bf16.gmra.mrb[0].mxu0 %v293
  %v922 = vpop.f32.mrb[0].mxu0
  %v923 = vadd.f32 %v866, %v922
  %v924 = vpop.f32.mrb[0].mxu0
  %v925 = vpop.f32.mrb[0].mxu0
  %v926 = vadd.f32 %v869, %v925
  %v927 = vpop.f32.mrb[0].mxu0
  %928 = vmatprep.mubr.bf16.mxu0 %v303
  %929 = vmatmul.mubr.bf16.gmra.mrb[0].mxu0 %v302
  %v930 = vpop.f32.mrb[0].mxu0
  %v931 = vadd.f32 %v874, %v930
  %v932 = vpop.f32.mrb[0].mxu0
  %v933 = vpop.f32.mrb[0].mxu0
  %v934 = vadd.f32 %v877, %v933
  %v935 = vpop.f32.mrb[0].mxu0
  %936 = vdwg.mxu0
  %937 = vmatprep.subr.bf16.mxu0 0
  %938 = vmatpush1.bf16.msra.mxu0 %v670
  %939 = vmatprep.subr.bf16.mxu0 0
  %940 = vmatpush1.bf16.msra.mxu0 %v671
  %941 = vmatprep.subr.bf16.mxu0 0
  %942 = vmatpush1.bf16.msra.mxu0 %v672
  %943 = vmatprep.subr.bf16.mxu0 0
  %944 = vmatpush1.bf16.msra.mxu0 %v673
  %945 = vmatprep.subr.bf16.mxu0 0
  %946 = vmatpush1.bf16.msra.mxu0 %v674
  %947 = vmatprep.subr.bf16.mxu0 0
  %948 = vmatpush1.bf16.msra.mxu0 %v675
  %949 = vmatprep.subr.bf16.mxu0 0
  %950 = vmatpush1.bf16.msra.mxu0 %v676
  %951 = vmatprep.subr.bf16.mxu0 0
  %952 = vmatpush1.bf16.msra.mxu0 %v677
  %953 = vmatprep.subr.bf16.mxu0 0
  %954 = vmatpush1.bf16.msra.mxu0 %v678
  %955 = vmatprep.subr.bf16.mxu0 0
  %956 = vmatpush1.bf16.msra.mxu0 %v679
  %957 = vmatprep.subr.bf16.mxu0 0
  %958 = vmatpush1.bf16.msra.mxu0 %v680
  %959 = vmatprep.subr.bf16.mxu0 0
  %960 = vmatpush1.bf16.msra.mxu0 %v681
  %961 = vmatprep.subr.bf16.mxu0 0
  %962 = vmatpush1.bf16.msra.mxu0 %v682
  %963 = vmatprep.subr.bf16.mxu0 0
  %964 = vmatpush1.bf16.msra.mxu0 %v683
  %965 = vmatprep.subr.bf16.mxu0 0
  %966 = vmatpush1.bf16.msra.mxu0 %v684
  %967 = vmatprep.subr.bf16.mxu0 0
  %968 = vmatpush1.bf16.msra.mxu0 %v685
  %969 = vmatprep.mubr.bf16.mxu0 %v287
  %970 = vmatmul.mubr.bf16.gmra.mrb[0].mxu0 %v286
  %v971 = vpop.f32.mrb[0].mxu0
  %v972 = vadd.f32 %v915, %v971
  %v973 = vpop.f32.mrb[0].mxu0
  %v974 = vpop.f32.mrb[0].mxu0
  %v975 = vadd.f32 %v918, %v974
  %v976 = vpop.f32.mrb[0].mxu0
  %977 = vmatprep.mubr.bf16.mxu0 %v296
  %978 = vmatmul.mubr.bf16.gmra.mrb[0].mxu0 %v295
  %v979 = vpop.f32.mrb[0].mxu0
  %v980 = vadd.f32 %v923, %v979
  %v981 = vpop.f32.mrb[0].mxu0
  %v982 = vpop.f32.mrb[0].mxu0
  %v983 = vadd.f32 %v926, %v982
  %v984 = vpop.f32.mrb[0].mxu0
  %985 = vmatprep.mubr.bf16.mxu0 %v305
  %986 = vmatmul.mubr.bf16.gmra.mrb[0].mxu0 %v304
  %v987 = vpop.f32.mrb[0].mxu0
  %v988 = vadd.f32 %v931, %v987
  %v989 = vpop.f32.mrb[0].mxu0
  %v990 = vpop.f32.mrb[0].mxu0
  %v991 = vadd.f32 %v934, %v990
  %v992 = vpop.f32.mrb[0].mxu0
  %993 = vdwg.mxu0
  %994 = vmatprep.subr.bf16.mxu0 0
  %995 = vmatpush1.bf16.msra.mxu0 %v686
  %996 = vmatprep.subr.bf16.mxu0 0
  %997 = vmatpush1.bf16.msra.mxu0 %v687
  %998 = vmatprep.subr.bf16.mxu0 0
  %999 = vmatpush1.bf16.msra.mxu0 %v688
  %1000 = vmatprep.subr.bf16.mxu0 0
  %1001 = vmatpush1.bf16.msra.mxu0 %v689
  %1002 = vmatprep.subr.bf16.mxu0 0
  %1003 = vmatpush1.bf16.msra.mxu0 %v690
  %1004 = vmatprep.subr.bf16.mxu0 0
  %1005 = vmatpush1.bf16.msra.mxu0 %v691
  %1006 = vmatprep.subr.bf16.mxu0 0
  %1007 = vmatpush1.bf16.msra.mxu0 %v692
  %1008 = vmatprep.subr.bf16.mxu0 0
  %1009 = vmatpush1.bf16.msra.mxu0 %v693
  %1010 = vmatprep.subr.bf16.mxu0 0
  %1011 = vmatpush1.bf16.msra.mxu0 0
  %1012 = vmatprep.subr.bf16.mxu0 0
  %1013 = vmatpush1.bf16.msra.mxu0 0
  %1014 = vmatprep.subr.bf16.mxu0 0
  %1015 = vmatpush1.bf16.msra.mxu0 0
  %1016 = vmatprep.subr.bf16.mxu0 0
  %1017 = vmatpush1.bf16.msra.mxu0 0
  %1018 = vmatprep.subr.bf16.mxu0 0
  %1019 = vmatpush1.bf16.msra.mxu0 0
  %1020 = vmatprep.subr.bf16.mxu0 0
  %1021 = vmatpush1.bf16.msra.mxu0 0
  %1022 = vmatprep.subr.bf16.mxu0 0
  %1023 = vmatpush1.bf16.msra.mxu0 0
  %1024 = vmatprep.subr.bf16.mxu0 0
  %1025 = vmatpush1.bf16.msra.mxu0 0
  %1026 = vmatprep.mubr.bf16.mxu0 0
  %1027 = vmatmul.mubr.bf16.gmra.mrb[0].mxu0 %v288
  %v1028 = vpop.f32.mrb[0].mxu0
  %v1029 = vadd.f32 %v972, %v1028
  %v1030 = vpop.f32.mrb[0].mxu0
  %v1031 = vpop.f32.mrb[0].mxu0
  %v1032 = vadd.f32 %v975, %v1031
  %v1033 = vpop.f32.mrb[0].mxu0
  %1034 = vmatprep.mubr.bf16.mxu0 0
  %1035 = vmatmul.mubr.bf16.gmra.mrb[0].mxu0 %v297
  %v1036 = vpop.f32.mrb[0].mxu0
  %v1037 = vadd.f32 %v980, %v1036
  %v1038 = vpop.f32.mrb[0].mxu0
  %v1039 = vpop.f32.mrb[0].mxu0
  %v1040 = vadd.f32 %v983, %v1039
  %v1041 = vpop.f32.mrb[0].mxu0
  %1042 = vmatprep.mubr.bf16.mxu0 0
  %1043 = vmatmul.mubr.bf16.gmra.mrb[0].mxu0 %v306
  %v1044 = vpop.f32.mrb[0].mxu0
  %v1045 = vadd.f32 %v988, %v1044
  %v1046 = vpop.f32.mrb[0].mxu0
  %v1047 = vpop.f32.mrb[0].mxu0
  %v1048 = vadd.f32 %v991, %v1047
  %v1049 = vpop.f32.mrb[0].mxu0
  %1050 = vdwg.mxu0
  %v1051 = vmax.f32 %v1029, 0.0
  %v1052 = vmax.f32 %v1032, 0.0
  %v1053 = vmax.f32 %v1037, 0.0
  %v1054 = vmax.f32 %v1040, 0.0
  %v1055 = vmax.f32 %v1045, 0.0
  %v1056 = vmax.f32 %v1048, 0.0
  %v1057 = vpack.c.bf16 %v1052, %v1051
  %v1058 = vpack.c.bf16 %v1054, %v1053
  %v1059 = vpack.c.bf16 %v1056, %v1055
  %v1063 = vunpack.c.l.b16 %v1057
  %v1064 = vunpack.c.h.b16 %v1057
  %v1065 = vunpack.c.l.b16 %v1058
  %v1066 = vunpack.c.h.b16 %v1058
  %v1067 = vunpack.c.l.b16 %v1059
  %v1068 = vunpack.c.h.b16 %v1059
  %v1069 = vpack.c.b16 %v1063, %v1063
  %v1070 = vpack.c.b16 %v1064, %v1064
  %v1071 = vpack.c.b16 %v1065, %v1065
  %v1072 = vpack.c.b16 %v1066, %v1066
  %v1073 = vpack.c.b16 %v1067, %v1067
  %v1074 = vpack.c.b16 %v1068, %v1068
  %1081 = vst [vmem:[%s3] sm:$0xf] %v1069
  %1082 = vst [vmem:[%s3 + $0x4] sm:$0xf] %v1070
  %1083 = vst [vmem:[%s3 + $0x8] sm:$0xf] %v1071
  %1084 = vst [vmem:[%s3 + $0xc] sm:$0xf] %v1072
  %1085 = vst [vmem:[%s3 + $0x10] sm:$0xf] %v1073
  %1086 = vst [vmem:[%s3 + $0x14] sm:$0xf] %v1074
  // Predicated region
  $region14: #{encoder_forward.5} parent=0 // pred_check
    _
  $region15: #{encoder_forward.5} parent=0 // pred_check_branch
    %1088 = sbr.rel (0) target = $region17
  $region16: #{encoder_forward.5} parent=0 // pred_region
    _
  $region17: #{encoder_forward.5} parent=0 // pred_fallthru
    _
  // Predicated region
  $region18: #{encoder_forward.5} parent=0 // pred_check
    _
  $region19: #{encoder_forward.5} parent=0 // pred_check_branch
    %1090 = sbr.rel (0) target = $region21
  $region20: #{encoder_forward.5} parent=0 // pred_region
    _
  $region21: #{encoder_forward.5} parent=0 // pred_fallthru
    _

// kernel: encoder_forward.6
$region0: #{encoder_forward.6}
  #allocation0 [shape = 'u32[]', space=smem, size = 0x4, offset = 0x4, fixed_abs, tag = 'smem constant byte address 0x4 - core index']
  #allocation1 [shape = 'u32[144,128]{1,0:T(1,128)}', space=vmem, size = 0x12000, scoped, tag = 'internal scratch']
  %s0 = inlined_call_operand.vmem [shape: bf16[16,384], index: 0, kind: input, shape index: {}]
  %s1 = inlined_call_operand.vmem [shape: bf16[384,128], index: 1, kind: input, shape index: {}]
  %s2 = inlined_call_operand.vmem [shape: f32[1,128], index: 2, kind: input, shape index: {}]
  %s3 = inlined_call_operand.vmem [shape: f32[16,128], index: 3, kind: output, shape index: {}]
  %s4 = sld [smem:[#allocation0]]
  $region22: #{encoder_forward.6} parent=0
    _
  %s6 = ssub.s32 1, %s4
  %s7 = scalar_select 0, %s6, %s4
  // Predicated region
  $region2: #{encoder_forward.6} parent=0 // pred_check
    _
  $region3: #{encoder_forward.6} parent=0 // pred_check_branch
    %9 = sbr.rel (0) target = $region5
  $region4: #{encoder_forward.6} parent=0 // pred_region
    _
  $region5: #{encoder_forward.6} parent=0 // pred_fallthru
    _
  // Predicated region
  $region6: #{encoder_forward.6} parent=0 // pred_check
    _
  $region7: #{encoder_forward.6} parent=0 // pred_check_branch
    %11 = sbr.rel (0) target = $region9
  $region8: #{encoder_forward.6} parent=0 // pred_region
    _
  $region9: #{encoder_forward.6} parent=0 // pred_fallthru
    _
  // Predicated region
  $region10: #{encoder_forward.6} parent=0 // pred_check
    _
  $region11: #{encoder_forward.6} parent=0 // pred_check_branch
    %13 = sbr.rel (0) target = $region13
  $region12: #{encoder_forward.6} parent=0 // pred_region
    _
  $region13: #{encoder_forward.6} parent=0 // pred_fallthru
    _
  %v15 = vld [vmem:[%s0] sm:$0xff]
  %v16 = vld [vmem:[%s0 + $0x8] sm:$0xf]
  %v17 = vld [vmem:[%s0 + $0xc] sm:$0xff]
  %v18 = vld [vmem:[%s0 + $0x14] sm:$0xf]
  %v19 = vld [vmem:[%s1] sm:$0xf]
  %v20 = vld [vmem:[%s1 + $0x4] sm:$0xf]
  %v21 = vld [vmem:[%s1 + $0x8] sm:$0xf]
  %v22 = vld [vmem:[%s1 + $0xc] sm:$0xf]
  %v23 = vld [vmem:[%s1 + $0x10] sm:$0xf]
  %v24 = vld [vmem:[%s1 + $0x14] sm:$0xf]
  %v25 = vld [vmem:[%s1 + $0x18] sm:$0xf]
  %v26 = vld [vmem:[%s1 + $0x1c] sm:$0xf]
  %v27 = vld [vmem:[%s1 + $0x20] sm:$0xf]
  %v28 = vld [vmem:[%s1 + $0x24] sm:$0xf]
  %v29 = vld [vmem:[%s1 + $0x28] sm:$0xf]
  %v30 = vld [vmem:[%s1 + $0x2c] sm:$0xf]
  %v31 = vld [vmem:[%s1 + $0x30] sm:$0xf]
  %v32 = vld [vmem:[%s1 + $0x34] sm:$0xf]
  %v33 = vld [vmem:[%s1 + $0x38] sm:$0xf]
  %v34 = vld [vmem:[%s1 + $0x3c] sm:$0xf]
  %v35 = vld [vmem:[%s1 + $0x40] sm:$0xf]
  %v36 = vld [vmem:[%s1 + $0x44] sm:$0xf]
  %v37 = vld [vmem:[%s1 + $0x48] sm:$0xf]
  %v38 = vld [vmem:[%s1 + $0x4c] sm:$0xf]
  %v39 = vld [vmem:[%s1 + $0x50] sm:$0xf]
  %v40 = vld [vmem:[%s1 + $0x54] sm:$0xf]
  %v41 = vld [vmem:[%s1 + $0x58] sm:$0xf]
  %v42 = vld [vmem:[%s1 + $0x5c] sm:$0xf]
  %v43 = vld [vmem:[%s1 + $0x60] sm:$0xf]
  %v44 = vld [vmem:[%s1 + $0x64] sm:$0xf]
  %v45 = vld [vmem:[%s1 + $0x68] sm:$0xf]
  %v46 = vld [vmem:[%s1 + $0x6c] sm:$0xf]
  %v47 = vld [vmem:[%s1 + $0x70] sm:$0xf]
  %v48 = vld [vmem:[%s1 + $0x74] sm:$0xf]
  %v49 = vld [vmem:[%s1 + $0x78] sm:$0xf]
  %v50 = vld [vmem:[%s1 + $0x7c] sm:$0xf]
  %v51 = vld [vmem:[%s1 + $0x80] sm:$0xf]
  %v52 = vld [vmem:[%s1 + $0x84] sm:$0xf]
  %v53 = vld [vmem:[%s1 + $0x88] sm:$0xf]
  %v54 = vld [vmem:[%s1 + $0x8c] sm:$0xf]
  %v55 = vld [vmem:[%s1 + $0x90] sm:$0xf]
  %v56 = vld [vmem:[%s1 + $0x94] sm:$0xf]
  %v57 = vld [vmem:[%s1 + $0x98] sm:$0xf]
  %v58 = vld [vmem:[%s1 + $0x9c] sm:$0xf]
  %v59 = vld [vmem:[%s1 + $0xa0] sm:$0xf]
  %v60 = vld [vmem:[%s1 + $0xa4] sm:$0xf]
  %v61 = vld [vmem:[%s1 + $0xa8] sm:$0xf]
  %v62 = vld [vmem:[%s1 + $0xac] sm:$0xf]
  %v63 = vld [vmem:[%s1 + $0xb0] sm:$0xf]
  %v64 = vld [vmem:[%s1 + $0xb4] sm:$0xf]
  %v65 = vld [vmem:[%s1 + $0xb8] sm:$0xf]
  %v66 = vld [vmem:[%s1 + $0xbc] sm:$0xf]
  %v67 = vld [vmem:[%s2] sm:$0x1]
  %v69 = vlaneseq
  %v70 = vshrl.u32 %v69, 7
  %v71 = vsub.s32 0, %v70
  %v72 = vrot.slane %v67, %v71
  %v78 = vunpack.c.l.b16 %v15
  %v79 = vunpack.c.h.b16 %v15
  %v80 = vunpack.c.l.b16 %v16
  %v81 = vunpack.c.l.b16 %v17
  %v82 = vunpack.c.h.b16 %v17
  %v83 = vunpack.c.l.b16 %v18
  %v84 = vpack.c.b16 %v81, %v78
  %v85 = vpack.c.b16 %v82, %v79
  %v86 = vpack.c.b16 %v83, %v80
  %v138 = vunpack.c.l.b16 %v19
  %v139 = vunpack.c.l.b16 %v20
  %v140 = vunpack.c.l.b16 %v21
  %v141 = vunpack.c.l.b16 %v22
  %v142 = vunpack.c.l.b16 %v23
  %v143 = vunpack.c.l.b16 %v24
  %v144 = vunpack.c.l.b16 %v25
  %v145 = vunpack.c.l.b16 %v26
  %v146 = vunpack.c.l.b16 %v27
  %v147 = vunpack.c.l.b16 %v28
  %v148 = vunpack.c.l.b16 %v29
  %v149 = vunpack.c.l.b16 %v30
  %v150 = vunpack.c.l.b16 %v31
  %v151 = vunpack.c.l.b16 %v32
  %v152 = vunpack.c.l.b16 %v33
  %v153 = vunpack.c.l.b16 %v34
  %v154 = vunpack.c.l.b16 %v35
  %v155 = vunpack.c.l.b16 %v36
  %v156 = vunpack.c.l.b16 %v37
  %v157 = vunpack.c.l.b16 %v38
  %v158 = vunpack.c.l.b16 %v39
  %v159 = vunpack.c.l.b16 %v40
  %v160 = vunpack.c.l.b16 %v41
  %v161 = vunpack.c.l.b16 %v42
  %v162 = vunpack.c.l.b16 %v43
  %v163 = vunpack.c.l.b16 %v44
  %v164 = vunpack.c.l.b16 %v45
  %v165 = vunpack.c.l.b16 %v46
  %v166 = vunpack.c.l.b16 %v47
  %v167 = vunpack.c.l.b16 %v48
  %v168 = vunpack.c.l.b16 %v49
  %v169 = vunpack.c.l.b16 %v50
  %v170 = vunpack.c.l.b16 %v51
  %v171 = vunpack.c.l.b16 %v52
  %v172 = vunpack.c.l.b16 %v53
  %v173 = vunpack.c.l.b16 %v54
  %v174 = vunpack.c.l.b16 %v55
  %v175 = vunpack.c.l.b16 %v56
  %v176 = vunpack.c.l.b16 %v57
  %v177 = vunpack.c.l.b16 %v58
  %v178 = vunpack.c.l.b16 %v59
  %v179 = vunpack.c.l.b16 %v60
  %v180 = vunpack.c.l.b16 %v61
  %v181 = vunpack.c.l.b16 %v62
  %v182 = vunpack.c.l.b16 %v63
  %v183 = vunpack.c.l.b16 %v64
  %v184 = vunpack.c.l.b16 %v65
  %v185 = vunpack.c.l.b16 %v66
  %v186 = vpack.c.b16 %v139, %v138
  %v187 = vpack.c.b16 %v141, %v140
  %v188 = vpack.c.b16 %v143, %v142
  %v189 = vpack.c.b16 %v145, %v144
  %v190 = vpack.c.b16 %v147, %v146
  %v191 = vpack.c.b16 %v149, %v148
  %v192 = vpack.c.b16 %v151, %v150
  %v193 = vpack.c.b16 %v153, %v152
  %v194 = vpack.c.b16 %v155, %v154
  %v195 = vpack.c.b16 %v157, %v156
  %v196 = vpack.c.b16 %v159, %v158
  %v197 = vpack.c.b16 %v161, %v160
  %v198 = vpack.c.b16 %v163, %v162
  %v199 = vpack.c.b16 %v165, %v164
  %v200 = vpack.c.b16 %v167, %v166
  %v201 = vpack.c.b16 %v169, %v168
  %v202 = vpack.c.b16 %v171, %v170
  %v203 = vpack.c.b16 %v173, %v172
  %v204 = vpack.c.b16 %v175, %v174
  %v205 = vpack.c.b16 %v177, %v176
  %v206 = vpack.c.b16 %v179, %v178
  %v207 = vpack.c.b16 %v181, %v180
  %v208 = vpack.c.b16 %v183, %v182
  %v209 = vpack.c.b16 %v185, %v184
  %234 = vmatprep.subr.bf16.mxu0 0
  %235 = vmatpush1.bf16.msra.mxu0 %v186
  %236 = vmatprep.subr.bf16.mxu0 0
  %237 = vmatpush1.bf16.msra.mxu0 %v187
  %238 = vmatprep.subr.bf16.mxu0 0
  %239 = vmatpush1.bf16.msra.mxu0 %v188
  %240 = vmatprep.subr.bf16.mxu0 0
  %241 = vmatpush1.bf16.msra.mxu0 %v189
  %242 = vmatprep.subr.bf16.mxu0 0
  %243 = vmatpush1.bf16.msra.mxu0 %v190
  %244 = vmatprep.subr.bf16.mxu0 0
  %245 = vmatpush1.bf16.msra.mxu0 %v191
  %246 = vmatprep.subr.bf16.mxu0 0
  %247 = vmatpush1.bf16.msra.mxu0 %v192
  %248 = vmatprep.subr.bf16.mxu0 0
  %249 = vmatpush1.bf16.msra.mxu0 %v193
  %250 = vmatprep.subr.bf16.mxu0 0
  %251 = vmatpush1.bf16.msra.mxu0 %v194
  %252 = vmatprep.subr.bf16.mxu0 0
  %253 = vmatpush1.bf16.msra.mxu0 %v195
  %254 = vmatprep.subr.bf16.mxu0 0
  %255 = vmatpush1.bf16.msra.mxu0 %v196
  %256 = vmatprep.subr.bf16.mxu0 0
  %257 = vmatpush1.bf16.msra.mxu0 %v197
  %258 = vmatprep.subr.bf16.mxu0 0
  %259 = vmatpush1.bf16.msra.mxu0 %v198
  %260 = vmatprep.subr.bf16.mxu0 0
  %261 = vmatpush1.bf16.msra.mxu0 %v199
  %262 = vmatprep.subr.bf16.mxu0 0
  %263 = vmatpush1.bf16.msra.mxu0 %v200
  %264 = vmatprep.subr.bf16.mxu0 0
  %265 = vmatpush1.bf16.msra.mxu0 %v201
  %266 = vmatprep.mubr.bf16.mxu0 %v85
  %267 = vmatmul.mubr.bf16.gmra.mrb[0].mxu0 %v84
  %v268 = vpop.f32.mrb[0].mxu0
  %v269 = vadd.f32 %v72, %v268
  %v270 = vpop.f32.mrb[0].mxu0
  %v271 = vpop.f32.mrb[0].mxu0
  %v272 = vadd.f32 %v72, %v271
  %v273 = vpop.f32.mrb[0].mxu0
  %274 = vdwg.mxu0
  %275 = vmatprep.subr.bf16.mxu0 0
  %276 = vmatpush1.bf16.msra.mxu0 %v202
  %277 = vmatprep.subr.bf16.mxu0 0
  %278 = vmatpush1.bf16.msra.mxu0 %v203
  %279 = vmatprep.subr.bf16.mxu0 0
  %280 = vmatpush1.bf16.msra.mxu0 %v204
  %281 = vmatprep.subr.bf16.mxu0 0
  %282 = vmatpush1.bf16.msra.mxu0 %v205
  %283 = vmatprep.subr.bf16.mxu0 0
  %284 = vmatpush1.bf16.msra.mxu0 %v206
  %285 = vmatprep.subr.bf16.mxu0 0
  %286 = vmatpush1.bf16.msra.mxu0 %v207
  %287 = vmatprep.subr.bf16.mxu0 0
  %288 = vmatpush1.bf16.msra.mxu0 %v208
  %289 = vmatprep.subr.bf16.mxu0 0
  %290 = vmatpush1.bf16.msra.mxu0 %v209
  %291 = vmatprep.subr.bf16.mxu0 0
  %292 = vmatpush1.bf16.msra.mxu0 0
  %293 = vmatprep.subr.bf16.mxu0 0
  %294 = vmatpush1.bf16.msra.mxu0 0
  %295 = vmatprep.subr.bf16.mxu0 0
  %296 = vmatpush1.bf16.msra.mxu0 0
  %297 = vmatprep.subr.bf16.mxu0 0
  %298 = vmatpush1.bf16.msra.mxu0 0
  %299 = vmatprep.subr.bf16.mxu0 0
  %300 = vmatpush1.bf16.msra.mxu0 0
  %301 = vmatprep.subr.bf16.mxu0 0
  %302 = vmatpush1.bf16.msra.mxu0 0
  %303 = vmatprep.subr.bf16.mxu0 0
  %304 = vmatpush1.bf16.msra.mxu0 0
  %305 = vmatprep.subr.bf16.mxu0 0
  %306 = vmatpush1.bf16.msra.mxu0 0
  %307 = vmatprep.mubr.bf16.mxu0 0
  %308 = vmatmul.mubr.bf16.gmra.mrb[0].mxu0 %v86
  %v309 = vpop.f32.mrb[0].mxu0
  %v310 = vadd.f32 %v269, %v309
  %v311 = vpop.f32.mrb[0].mxu0
  %v312 = vpop.f32.mrb[0].mxu0
  %v313 = vadd.f32 %v272, %v312
  %v314 = vpop.f32.mrb[0].mxu0
  %315 = vdwg.mxu0
  %316 = vst [vmem:[%s3] sm:$0xff] %v310
  %317 = vst [vmem:[%s3 + $0x8] sm:$0xff] %v313
  // Predicated region
  $region14: #{encoder_forward.6} parent=0 // pred_check
    _
  $region15: #{encoder_forward.6} parent=0 // pred_check_branch
    %319 = sbr.rel (0) target = $region17
  $region16: #{encoder_forward.6} parent=0 // pred_region
    _
  $region17: #{encoder_forward.6} parent=0 // pred_fallthru
    _
  // Predicated region
  $region18: #{encoder_forward.6} parent=0 // pred_check
    _
  $region19: #{encoder_forward.6} parent=0 // pred_check_branch
    %321 = sbr.rel (0) target = $region21
  $region20: #{encoder_forward.6} parent=0 // pred_region
    _
  $region21: #{encoder_forward.6} parent=0 // pred_fallthru
    _

// kernel: encoder_forward.7
$region0: #{encoder_forward.7}
  #allocation0 [shape = 'u32[]', space=smem, size = 0x4, offset = 0x4, fixed_abs, tag = 'smem constant byte address 0x4 - core index']
  #allocation1 [shape = 'u32[144,128]{1,0:T(1,128)}', space=vmem, size = 0x12000, scoped, tag = 'internal scratch']
  %s0 = inlined_call_operand.vmem [shape: f32[2,8,128], index: 0, kind: input, shape index: {}]
  %s1 = inlined_call_operand.vmem [shape: f32[2,1,8], index: 1, kind: input, shape index: {}]
  %s2 = inlined_call_operand.vmem [shape: f32[2,1,128], index: 2, kind: input, shape index: {}]
  %s3 = inlined_call_operand.vmem [shape: f32[2,1,128], index: 3, kind: input, shape index: {}]
  %s4 = inlined_call_operand.vmem [shape: bf16[2,128,384], index: 4, kind: input, shape index: {}]
  %s5 = inlined_call_operand.vmem [shape: f32[2,1,384], index: 5, kind: input, shape index: {}]
  %s6 = inlined_call_operand.vmem [shape: bf16[2,128,128], index: 6, kind: input, shape index: {}]
  %s7 = inlined_call_operand.vmem [shape: f32[2,1,128], index: 7, kind: input, shape index: {}]
  %s8 = inlined_call_operand.vmem [shape: f32[2,1,128], index: 8, kind: input, shape index: {}]
  %s9 = inlined_call_operand.vmem [shape: f32[2,1,128], index: 9, kind: input, shape index: {}]
  %s10 = inlined_call_operand.vmem [shape: bf16[2,128,256], index: 10, kind: input, shape index: {}]
  %s11 = inlined_call_operand.vmem [shape: f32[2,1,256], index: 11, kind: input, shape index: {}]
  %s12 = inlined_call_operand.vmem [shape: bf16[2,256,128], index: 12, kind: input, shape index: {}]
  %s13 = inlined_call_operand.vmem [shape: f32[2,1,128], index: 13, kind: input, shape index: {}]
  %s14 = inlined_call_operand.vmem [shape: f32[1,128], index: 14, kind: input, shape index: {}]
  %s15 = inlined_call_operand.vmem [shape: f32[1,128], index: 15, kind: input, shape index: {}]
  %s16 = inlined_call_operand.vmem [shape: f32[2,8,128], index: 16, kind: output, shape index: {}]
  %s17 = sld [smem:[#allocation0]]
  $region109: #{encoder_forward.7} parent=0
    _
  %s19 = ssub.s32 1, %s17
  %s20 = scalar_select 0, %s19, %s17
  loop: start=0, step=1, limit=4
  $region2: #{encoder_forward.7} parent=0 // loop_pre_header
    _
  $region3: #{encoder_forward.7} parent=0 // loop_header
    %s22 = sphi 0, %s26
    %p23 = scmp.ge.s32.totalorder %s22, 4
    %s29 = sphi 0, %s41
    %s30 = sphi 0, %s37
    %s31 = sphi 0, %s29
    %s32 = sphi 0, %s30
    %s33 = sphi 0, %s31
    %s34 = sphi 0, %s32
    %s44 = sphi 0, %s46
    %s47 = sphi 0, %s44
    %s48 = sphi 0, %s47
    %s64 = sphi 0, %s48
    %s70 = sphi 0, %s72
    %s73 = sphi 0, %s70
    %s74 = sphi 0, %s73
    %s90 = sphi 0, %s74
    %s96 = sphi 0, %s98
    %s99 = sphi 0, %s96
    %s100 = sphi 0, %s99
    %s116 = sphi 0, %s100
    %s122 = sphi 0, %s124
    %s125 = sphi 0, %s122
    %s126 = sphi 0, %s125
    %s142 = sphi 0, %s126
    %s148 = sphi 0, %s150
    %s151 = sphi 0, %s148
    %s152 = sphi 0, %s151
    %s168 = sphi 0, %s152
    %s174 = sphi 0, %s176
    %s177 = sphi 0, %s174
    %s178 = sphi 0, %s177
    %s194 = sphi 0, %s178
    %s200 = sphi 0, %s202
    %s203 = sphi 0, %s200
    %s204 = sphi 0, %s203
    %s220 = sphi 0, %s204
    %s226 = sphi 0, %s228
    %s229 = sphi 0, %s226
    %s230 = sphi 0, %s229
    %s246 = sphi 0, %s230
    %s252 = sphi 0, %s254
    %s255 = sphi 0, %s252
    %s256 = sphi 0, %s255
    %s272 = sphi 0, %s256
    %s278 = sphi 0, %s280
    %s281 = sphi 0, %s278
    %s282 = sphi 0, %s281
    %s298 = sphi 0, %s282
    %s304 = sphi 0, %s306
    %s307 = sphi 0, %s304
    %s308 = sphi 0, %s307
    %s324 = sphi 0, %s308
    %s330 = sphi 0, %s332
    %s333 = sphi 0, %s330
    %s334 = sphi 0, %s333
    %s350 = sphi 0, %s334
    %s356 = sphi 0, %s358
    %s359 = sphi 0, %s356
    %s360 = sphi 0, %s359
    %s376 = sphi 0, %s360
    %s382 = sphi 0, %s384
    %s385 = sphi 0, %s382
    %s386 = sphi 0, %s385
    %s402 = sphi 0, %s386
    %s406 = sphi 0, %s406
    %s408 = sphi 0, %s406
    %s409 = sphi 0, %s408
    %s423 = sphi 0, %s409
    %s427 = sphi 0, %s427
    %s429 = sphi 0, %s427
    %s430 = sphi 0, %s429
    %s444 = sphi 0, %s430
    %s450 = sphi 0, %s452
    %s453 = sphi 0, %s450
    %s454 = sphi 0, %s453
    %s470 = sphi 0, %s454
  $region4: #{encoder_forward.7} parent=0 // loop_header_branch
    %25 = sbr.rel (%p23) target = $region8
  $region5: #{encoder_forward.7} parent=0 // loop_body
    %s27 = ssub.s32 %s22, 1
    %s28 = ssub.s32 %s22, 2
    %s35 = sadd.s32 1, %s30
    %p36 = scmp.ge.s32.totalorder %s35, 2
    %s37 = scalar_select %p36, 0, %s35
    %s38 = sadd.s32 1, %s29
    %s39 = scalar_select %p36, %s38, %s29
    %p40 = scmp.ge.s32.totalorder %s39, 1
    %s41 = scalar_select %p40, 0, %s39
    %s42 = ssub.s32 %s29, %s41
    %p43 = scmp.eq.s32.totalorder %s42, 0
    %s45 = sadd.s32 %s44, 1
    %s46 = scalar_select %p43, %s44, %s45
    %p49 = pneg %p43
    %p50 = scmp.eq.s32.totalorder %s22, 1
    %p51 = por %p49, %p50
    %p52 = scmp.ne.s32.totalorder %s44, %s47
    %p53 = scmp.eq.s32.totalorder %s22, 0
    %p54 = por %p52, %p53
    %p55 = scmp.ne.s32.totalorder %s44, %s47
    %p56 = scmp.eq.s32.totalorder %s27, 1
    %p57 = por %p55, %p56
    %p58 = scmp.ne.s32.totalorder %s47, %s48
    %p59 = scmp.eq.s32.totalorder %s27, 0
    %p60 = por %p58, %p59
    %p61 = scmp.ne.s32.totalorder %s47, %s48
    %p62 = scmp.eq.s32.totalorder %s28, 1
    %p63 = por %p61, %p62
    %p65 = scmp.ne.s32.totalorder %s48, %s64
    %p66 = scmp.eq.s32.totalorder %s28, 0
    %p67 = por %p65, %p66
    %s68 = ssub.s32 %s29, %s41
    %p69 = scmp.eq.s32.totalorder %s68, 0
    %s71 = sadd.s32 %s70, 1
    %s72 = scalar_select %p69, %s70, %s71
    %p75 = pneg %p69
    %p76 = scmp.eq.s32.totalorder %s22, 1
    %p77 = por %p75, %p76
    %p78 = scmp.ne.s32.totalorder %s70, %s73
    %p79 = scmp.eq.s32.totalorder %s22, 0
    %p80 = por %p78, %p79
    %p81 = scmp.ne.s32.totalorder %s70, %s73
    %p82 = scmp.eq.s32.totalorder %s27, 1
    %p83 = por %p81, %p82
    %p84 = scmp.ne.s32.totalorder %s73, %s74
    %p85 = scmp.eq.s32.totalorder %s27, 0
    %p86 = por %p84, %p85
    %p87 = scmp.ne.s32.totalorder %s73, %s74
    %p88 = scmp.eq.s32.totalorder %s28, 1
    %p89 = por %p87, %p88
    %p91 = scmp.ne.s32.totalorder %s74, %s90
    %p92 = scmp.eq.s32.totalorder %s28, 0
    %p93 = por %p91, %p92
    %s94 = ssub.s32 %s30, %s37
    %p95 = scmp.eq.s32.totalorder %s94, 0
    %s97 = sadd.s32 %s96, 1
    %s98 = scalar_select %p95, %s96, %s97
    %p101 = pneg %p95
    %p102 = scmp.eq.s32.totalorder %s22, 1
    %p103 = por %p101, %p102
    %p104 = scmp.ne.s32.totalorder %s96, %s99
    %p105 = scmp.eq.s32.totalorder %s22, 0
    %p106 = por %p104, %p105
    %p107 = scmp.ne.s32.totalorder %s96, %s99
    %p108 = scmp.eq.s32.totalorder %s27, 1
    %p109 = por %p107, %p108
    %p110 = scmp.ne.s32.totalorder %s99, %s100
    %p111 = scmp.eq.s32.totalorder %s27, 0
    %p112 = por %p110, %p111
    %p113 = scmp.ne.s32.totalorder %s99, %s100
    %p114 = scmp.eq.s32.totalorder %s28, 1
    %p115 = por %p113, %p114
    %p117 = scmp.ne.s32.totalorder %s100, %s116
    %p118 = scmp.eq.s32.totalorder %s28, 0
    %p119 = por %p117, %p118
    %s120 = ssub.s32 %s30, %s37
    %p121 = scmp.eq.s32.totalorder %s120, 0
    %s123 = sadd.s32 %s122, 1
    %s124 = scalar_select %p121, %s122, %s123
    %p127 = pneg %p121
    %p128 = scmp.eq.s32.totalorder %s22, 1
    %p129 = por %p127, %p128
    %p130 = scmp.ne.s32.totalorder %s122, %s125
    %p131 = scmp.eq.s32.totalorder %s22, 0
    %p132 = por %p130, %p131
    %p133 = scmp.ne.s32.totalorder %s122, %s125
    %p134 = scmp.eq.s32.totalorder %s27, 1
    %p135 = por %p133, %p134
    %p136 = scmp.ne.s32.totalorder %s125, %s126
    %p137 = scmp.eq.s32.totalorder %s27, 0
    %p138 = por %p136, %p137
    %p139 = scmp.ne.s32.totalorder %s125, %s126
    %p140 = scmp.eq.s32.totalorder %s28, 1
    %p141 = por %p139, %p140
    %p143 = scmp.ne.s32.totalorder %s126, %s142
    %p144 = scmp.eq.s32.totalorder %s28, 0
    %p145 = por %p143, %p144
    %s146 = ssub.s32 %s30, %s37
    %p147 = scmp.eq.s32.totalorder %s146, 0
    %s149 = sadd.s32 %s148, 1
    %s150 = scalar_select %p147, %s148, %s149
    %p153 = pneg %p147
    %p154 = scmp.eq.s32.totalorder %s22, 1
    %p155 = por %p153, %p154
    %p156 = scmp.ne.s32.totalorder %s148, %s151
    %p157 = scmp.eq.s32.totalorder %s22, 0
    %p158 = por %p156, %p157
    %p159 = scmp.ne.s32.totalorder %s148, %s151
    %p160 = scmp.eq.s32.totalorder %s27, 1
    %p161 = por %p159, %p160
    %p162 = scmp.ne.s32.totalorder %s151, %s152
    %p163 = scmp.eq.s32.totalorder %s27, 0
    %p164 = por %p162, %p163
    %p165 = scmp.ne.s32.totalorder %s151, %s152
    %p166 = scmp.eq.s32.totalorder %s28, 1
    %p167 = por %p165, %p166
    %p169 = scmp.ne.s32.totalorder %s152, %s168
    %p170 = scmp.eq.s32.totalorder %s28, 0
    %p171 = por %p169, %p170
    %s172 = ssub.s32 %s30, %s37
    %p173 = scmp.eq.s32.totalorder %s172, 0
    %s175 = sadd.s32 %s174, 1
    %s176 = scalar_select %p173, %s174, %s175
    %p179 = pneg %p173
    %p180 = scmp.eq.s32.totalorder %s22, 1
    %p181 = por %p179, %p180
    %p182 = scmp.ne.s32.totalorder %s174, %s177
    %p183 = scmp.eq.s32.totalorder %s22, 0
    %p184 = por %p182, %p183
    %p185 = scmp.ne.s32.totalorder %s174, %s177
    %p186 = scmp.eq.s32.totalorder %s27, 1
    %p187 = por %p185, %p186
    %p188 = scmp.ne.s32.totalorder %s177, %s178
    %p189 = scmp.eq.s32.totalorder %s27, 0
    %p190 = por %p188, %p189
    %p191 = scmp.ne.s32.totalorder %s177, %s178
    %p192 = scmp.eq.s32.totalorder %s28, 1
    %p193 = por %p191, %p192
    %p195 = scmp.ne.s32.totalorder %s178, %s194
    %p196 = scmp.eq.s32.totalorder %s28, 0
    %p197 = por %p195, %p196
    %s198 = ssub.s32 %s30, %s37
    %p199 = scmp.eq.s32.totalorder %s198, 0
    %s201 = sadd.s32 %s200, 1
    %s202 = scalar_select %p199, %s200, %s201
    %p205 = pneg %p199
    %p206 = scmp.eq.s32.totalorder %s22, 1
    %p207 = por %p205, %p206
    %p208 = scmp.ne.s32.totalorder %s200, %s203
    %p209 = scmp.eq.s32.totalorder %s22, 0
    %p210 = por %p208, %p209
    %p211 = scmp.ne.s32.totalorder %s200, %s203
    %p212 = scmp.eq.s32.totalorder %s27, 1
    %p213 = por %p211, %p212
    %p214 = scmp.ne.s32.totalorder %s203, %s204
    %p215 = scmp.eq.s32.totalorder %s27, 0
    %p216 = por %p214, %p215
    %p217 = scmp.ne.s32.totalorder %s203, %s204
    %p218 = scmp.eq.s32.totalorder %s28, 1
    %p219 = por %p217, %p218
    %p221 = scmp.ne.s32.totalorder %s204, %s220
    %p222 = scmp.eq.s32.totalorder %s28, 0
    %p223 = por %p221, %p222
    %s224 = ssub.s32 %s30, %s37
    %p225 = scmp.eq.s32.totalorder %s224, 0
    %s227 = sadd.s32 %s226, 1
    %s228 = scalar_select %p225, %s226, %s227
    %p231 = pneg %p225
    %p232 = scmp.eq.s32.totalorder %s22, 1
    %p233 = por %p231, %p232
    %p234 = scmp.ne.s32.totalorder %s226, %s229
    %p235 = scmp.eq.s32.totalorder %s22, 0
    %p236 = por %p234, %p235
    %p237 = scmp.ne.s32.totalorder %s226, %s229
    %p238 = scmp.eq.s32.totalorder %s27, 1
    %p239 = por %p237, %p238
    %p240 = scmp.ne.s32.totalorder %s229, %s230
    %p241 = scmp.eq.s32.totalorder %s27, 0
    %p242 = por %p240, %p241
    %p243 = scmp.ne.s32.totalorder %s229, %s230
    %p244 = scmp.eq.s32.totalorder %s28, 1
    %p245 = por %p243, %p244
    %p247 = scmp.ne.s32.totalorder %s230, %s246
    %p248 = scmp.eq.s32.totalorder %s28, 0
    %p249 = por %p247, %p248
    %s250 = ssub.s32 %s30, %s37
    %p251 = scmp.eq.s32.totalorder %s250, 0
    %s253 = sadd.s32 %s252, 1
    %s254 = scalar_select %p251, %s252, %s253
    %p257 = pneg %p251
    %p258 = scmp.eq.s32.totalorder %s22, 1
    %p259 = por %p257, %p258
    %p260 = scmp.ne.s32.totalorder %s252, %s255
    %p261 = scmp.eq.s32.totalorder %s22, 0
    %p262 = por %p260, %p261
    %p263 = scmp.ne.s32.totalorder %s252, %s255
    %p264 = scmp.eq.s32.totalorder %s27, 1
    %p265 = por %p263, %p264
    %p266 = scmp.ne.s32.totalorder %s255, %s256
    %p267 = scmp.eq.s32.totalorder %s27, 0
    %p268 = por %p266, %p267
    %p269 = scmp.ne.s32.totalorder %s255, %s256
    %p270 = scmp.eq.s32.totalorder %s28, 1
    %p271 = por %p269, %p270
    %p273 = scmp.ne.s32.totalorder %s256, %s272
    %p274 = scmp.eq.s32.totalorder %s28, 0
    %p275 = por %p273, %p274
    %s276 = ssub.s32 %s30, %s37
    %p277 = scmp.eq.s32.totalorder %s276, 0
    %s279 = sadd.s32 %s278, 1
    %s280 = scalar_select %p277, %s278, %s279
    %p283 = pneg %p277
    %p284 = scmp.eq.s32.totalorder %s22, 1
    %p285 = por %p283, %p284
    %p286 = scmp.ne.s32.totalorder %s278, %s281
    %p287 = scmp.eq.s32.totalorder %s22, 0
    %p288 = por %p286, %p287
    %p289 = scmp.ne.s32.totalorder %s278, %s281
    %p290 = scmp.eq.s32.totalorder %s27, 1
    %p291 = por %p289, %p290
    %p292 = scmp.ne.s32.totalorder %s281, %s282
    %p293 = scmp.eq.s32.totalorder %s27, 0
    %p294 = por %p292, %p293
    %p295 = scmp.ne.s32.totalorder %s281, %s282
    %p296 = scmp.eq.s32.totalorder %s28, 1
    %p297 = por %p295, %p296
    %p299 = scmp.ne.s32.totalorder %s282, %s298
    %p300 = scmp.eq.s32.totalorder %s28, 0
    %p301 = por %p299, %p300
    %s302 = ssub.s32 %s30, %s37
    %p303 = scmp.eq.s32.totalorder %s302, 0
    %s305 = sadd.s32 %s304, 1
    %s306 = scalar_select %p303, %s304, %s305
    %p309 = pneg %p303
    %p310 = scmp.eq.s32.totalorder %s22, 1
    %p311 = por %p309, %p310
    %p312 = scmp.ne.s32.totalorder %s304, %s307
    %p313 = scmp.eq.s32.totalorder %s22, 0
    %p314 = por %p312, %p313
    %p315 = scmp.ne.s32.totalorder %s304, %s307
    %p316 = scmp.eq.s32.totalorder %s27, 1
    %p317 = por %p315, %p316
    %p318 = scmp.ne.s32.totalorder %s307, %s308
    %p319 = scmp.eq.s32.totalorder %s27, 0
    %p320 = por %p318, %p319
    %p321 = scmp.ne.s32.totalorder %s307, %s308
    %p322 = scmp.eq.s32.totalorder %s28, 1
    %p323 = por %p321, %p322
    %p325 = scmp.ne.s32.totalorder %s308, %s324
    %p326 = scmp.eq.s32.totalorder %s28, 0
    %p327 = por %p325, %p326
    %s328 = ssub.s32 %s30, %s37
    %p329 = scmp.eq.s32.totalorder %s328, 0
    %s331 = sadd.s32 %s330, 1
    %s332 = scalar_select %p329, %s330, %s331
    %p335 = pneg %p329
    %p336 = scmp.eq.s32.totalorder %s22, 1
    %p337 = por %p335, %p336
    %p338 = scmp.ne.s32.totalorder %s330, %s333
    %p339 = scmp.eq.s32.totalorder %s22, 0
    %p340 = por %p338, %p339
    %p341 = scmp.ne.s32.totalorder %s330, %s333
    %p342 = scmp.eq.s32.totalorder %s27, 1
    %p343 = por %p341, %p342
    %p344 = scmp.ne.s32.totalorder %s333, %s334
    %p345 = scmp.eq.s32.totalorder %s27, 0
    %p346 = por %p344, %p345
    %p347 = scmp.ne.s32.totalorder %s333, %s334
    %p348 = scmp.eq.s32.totalorder %s28, 1
    %p349 = por %p347, %p348
    %p351 = scmp.ne.s32.totalorder %s334, %s350
    %p352 = scmp.eq.s32.totalorder %s28, 0
    %p353 = por %p351, %p352
    %s354 = ssub.s32 %s30, %s37
    %p355 = scmp.eq.s32.totalorder %s354, 0
    %s357 = sadd.s32 %s356, 1
    %s358 = scalar_select %p355, %s356, %s357
    %p361 = pneg %p355
    %p362 = scmp.eq.s32.totalorder %s22, 1
    %p363 = por %p361, %p362
    %p364 = scmp.ne.s32.totalorder %s356, %s359
    %p365 = scmp.eq.s32.totalorder %s22, 0
    %p366 = por %p364, %p365
    %p367 = scmp.ne.s32.totalorder %s356, %s359
    %p368 = scmp.eq.s32.totalorder %s27, 1
    %p369 = por %p367, %p368
    %p370 = scmp.ne.s32.totalorder %s359, %s360
    %p371 = scmp.eq.s32.totalorder %s27, 0
    %p372 = por %p370, %p371
    %p373 = scmp.ne.s32.totalorder %s359, %s360
    %p374 = scmp.eq.s32.totalorder %s28, 1
    %p375 = por %p373, %p374
    %p377 = scmp.ne.s32.totalorder %s360, %s376
    %p378 = scmp.eq.s32.totalorder %s28, 0
    %p379 = por %p377, %p378
    %s380 = ssub.s32 %s30, %s37
    %p381 = scmp.eq.s32.totalorder %s380, 0
    %s383 = sadd.s32 %s382, 1
    %s384 = scalar_select %p381, %s382, %s383
    %p387 = pneg %p381
    %p388 = scmp.eq.s32.totalorder %s22, 1
    %p389 = por %p387, %p388
    %p390 = scmp.ne.s32.totalorder %s382, %s385
    %p391 = scmp.eq.s32.totalorder %s22, 0
    %p392 = por %p390, %p391
    %p393 = scmp.ne.s32.totalorder %s382, %s385
    %p394 = scmp.eq.s32.totalorder %s27, 1
    %p395 = por %p393, %p394
    %p396 = scmp.ne.s32.totalorder %s385, %s386
    %p397 = scmp.eq.s32.totalorder %s27, 0
    %p398 = por %p396, %p397
    %p399 = scmp.ne.s32.totalorder %s385, %s386
    %p400 = scmp.eq.s32.totalorder %s28, 1
    %p401 = por %p399, %p400
    %p403 = scmp.ne.s32.totalorder %s386, %s402
    %p404 = scmp.eq.s32.totalorder %s28, 0
    %p405 = por %p403, %p404
    %s407 = sadd.s32 %s406, 1
    %p410 = scmp.eq.s32.totalorder %s22, 1
    %p411 = scmp.ne.s32.totalorder %s406, %s408
    %p412 = scmp.eq.s32.totalorder %s22, 0
    %p413 = por %p411, %p412
    %p414 = scmp.ne.s32.totalorder %s406, %s408
    %p415 = scmp.eq.s32.totalorder %s27, 1
    %p416 = por %p414, %p415
    %p417 = scmp.ne.s32.totalorder %s408, %s409
    %p418 = scmp.eq.s32.totalorder %s27, 0
    %p419 = por %p417, %p418
    %p420 = scmp.ne.s32.totalorder %s408, %s409
    %p421 = scmp.eq.s32.totalorder %s28, 1
    %p422 = por %p420, %p421
    %p424 = scmp.ne.s32.totalorder %s409, %s423
    %p425 = scmp.eq.s32.totalorder %s28, 0
    %p426 = por %p424, %p425
    %s428 = sadd.s32 %s427, 1
    %p431 = scmp.eq.s32.totalorder %s22, 1
    %p432 = scmp.ne.s32.totalorder %s427, %s429
    %p433 = scmp.eq.s32.totalorder %s22, 0
    %p434 = por %p432, %p433
    %p435 = scmp.ne.s32.totalorder %s427, %s429
    %p436 = scmp.eq.s32.totalorder %s27, 1
    %p437 = por %p435, %p436
    %p438 = scmp.ne.s32.totalorder %s429, %s430
    %p439 = scmp.eq.s32.totalorder %s27, 0
    %p440 = por %p438, %p439
    %p441 = scmp.ne.s32.totalorder %s429, %s430
    %p442 = scmp.eq.s32.totalorder %s28, 1
    %p443 = por %p441, %p442
    %p445 = scmp.ne.s32.totalorder %s430, %s444
    %p446 = scmp.eq.s32.totalorder %s28, 0
    %p447 = por %p445, %p446
    %s448 = ssub.s32 %s29, %s41
    %p449 = scmp.eq.s32.totalorder %s448, 0
    %s451 = sadd.s32 %s450, 1
    %s452 = scalar_select %p449, %s450, %s451
    %p455 = pneg %p449
    %p456 = scmp.eq.s32.totalorder %s22, 1
    %p457 = por %p455, %p456
    %p458 = scmp.ne.s32.totalorder %s450, %s453
    %p459 = scmp.eq.s32.totalorder %s22, 0
    %p460 = por %p458, %p459
    %p461 = scmp.ne.s32.totalorder %s450, %s453
    %p462 = scmp.eq.s32.totalorder %s27, 1
    %p463 = por %p461, %p462
    %p464 = scmp.ne.s32.totalorder %s453, %s454
    %p465 = scmp.eq.s32.totalorder %s27, 0
    %p466 = por %p464, %p465
    %p467 = scmp.ne.s32.totalorder %s453, %s454
    %p468 = scmp.eq.s32.totalorder %s28, 1
    %p469 = por %p467, %p468
    %p471 = scmp.ne.s32.totalorder %s454, %s470
    %p472 = scmp.eq.s32.totalorder %s28, 0
    %p473 = por %p471, %p472
    %p474 = scmp.le.s32.totalorder 1, %s22
    %p475 = scmp.lt.s32.totalorder %s22, 3
    %p476 = pnand %p474, %p475
    %p477 = pneg %p476
    // Predicated region
    $region9: #{encoder_forward.7} parent=5 // pred_check
      _
    $region10: #{encoder_forward.7} parent=5 // pred_check_branch
      %479 = sbr.rel (%p476) target = $region12
    $region11: #{encoder_forward.7} parent=5 // pred_region
      %s480 = ssub.s32 %s22, 1
      // Predicated region
      $region13: #{encoder_forward.7} parent=11 // pred_check
        %p481 = pneg %p60
      $region14: #{encoder_forward.7} parent=11 // pred_check_branch
        %483 = sbr.rel (%p481) target = $region16
      $region15: #{encoder_forward.7} parent=11 // pred_region
        %s484 = smul.u32 2, %s31
        %p485 = scmp.lt.s32.totalorder %s484, 1
        %s486 = scalar_select %p485, %s484, 1
        %s487 = smul.addr %s486, 8
        %s488 = scalar_lea.vmem %s0, %s487
        %s489 = smul.u32 2, %s31
      $region16: #{encoder_forward.7} parent=11 // pred_fallthru
        _
      // Predicated region
      $region17: #{encoder_forward.7} parent=11 // pred_check
        %p490 = pneg %p86
      $region18: #{encoder_forward.7} parent=11 // pred_check_branch
        %492 = sbr.rel (%p490) target = $region20
      $region19: #{encoder_forward.7} parent=11 // pred_region
        %s493 = smul.u32 2, %s31
        %p494 = scmp.lt.s32.totalorder %s493, 1
        %s495 = scalar_select %p494, %s493, 1
        %s496 = scalar_lea.vmem %s1, %s495
        %s497 = smul.u32 2, %s31
      $region20: #{encoder_forward.7} parent=11 // pred_fallthru
        _
      // Predicated region
      $region21: #{encoder_forward.7} parent=11 // pred_check
        %p498 = pneg %p419
      $region22: #{encoder_forward.7} parent=11 // pred_check_branch
        %500 = sbr.rel (%p498) target = $region24
      $region23: #{encoder_forward.7} parent=11 // pred_region
        _
      $region24: #{encoder_forward.7} parent=11 // pred_fallthru
        _
      // Predicated region
      $region25: #{encoder_forward.7} parent=11 // pred_check
        %p501 = pneg %p440
      $region26: #{encoder_forward.7} parent=11 // pred_check_branch
        %503 = sbr.rel (%p501) target = $region28
      $region27: #{encoder_forward.7} parent=11 // pred_region
        _
      $region28: #{encoder_forward.7} parent=11 // pred_fallthru
        _
    $region12: #{encoder_forward.7} parent=5 // pred_fallthru
      _
    %p504 = scmp.lt.s32.totalorder %s22, 2
    // Predicated region
    $region29: #{encoder_forward.7} parent=5 // pred_check
      %p505 = pneg %p504
    $region30: #{encoder_forward.7} parent=5 // pred_check_branch
      %507 = sbr.rel (%p505) target = $region32
    $region31: #{encoder_forward.7} parent=5 // pred_region
      // Predicated region
      $region33: #{encoder_forward.7} parent=31 // pred_check
        %p508 = pneg %p106
      $region34: #{encoder_forward.7} parent=31 // pred_check_branch
        %510 = sbr.rel (%p508) target = $region36
      $region35: #{encoder_forward.7} parent=31 // pred_region
        %p511 = scmp.lt.s32.totalorder %s30, 1
        %s512 = scalar_select %p511, %s30, 1
        %s513 = scalar_lea.vmem %s2, %s512
      $region36: #{encoder_forward.7} parent=31 // pred_fallthru
        _
      // Predicated region
      $region37: #{encoder_forward.7} parent=31 // pred_check
        %p514 = pneg %p132
      $region38: #{encoder_forward.7} parent=31 // pred_check_branch
        %516 = sbr.rel (%p514) target = $region40
      $region39: #{encoder_forward.7} parent=31 // pred_region
        %p517 = scmp.lt.s32.totalorder %s30, 1
        %s518 = scalar_select %p517, %s30, 1
        %s519 = scalar_lea.vmem %s3, %s518
      $region40: #{encoder_forward.7} parent=31 // pred_fallthru
        _
      // Predicated region
      $region41: #{encoder_forward.7} parent=31 // pred_check
        %p520 = pneg %p158
      $region42: #{encoder_forward.7} parent=31 // pred_check_branch
        %522 = sbr.rel (%p520) target = $region44
      $region43: #{encoder_forward.7} parent=31 // pred_region
        %p523 = scmp.lt.s32.totalorder %s30, 1
        %s524 = scalar_select %p523, %s30, 1
        %s525 = smul.addr %s524, 48
        %s526 = smul.addr %s525, 4
        %s527 = scalar_lea.vmem %s4, %s526
      $region44: #{encoder_forward.7} parent=31 // pred_fallthru
        _
      // Predicated region
      $region45: #{encoder_forward.7} parent=31 // pred_check
        %p528 = pneg %p184
      $region46: #{encoder_forward.7} parent=31 // pred_check_branch
        %530 = sbr.rel (%p528) target = $region48
      $region47: #{encoder_forward.7} parent=31 // pred_region
        %p531 = scmp.lt.s32.totalorder %s30, 1
        %s532 = scalar_select %p531, %s30, 1
        %s533 = smul.addr %s532, 3
        %s534 = scalar_lea.vmem %s5, %s533
      $region48: #{encoder_forward.7} parent=31 // pred_fallthru
        _
      // Predicated region
      $region49: #{encoder_forward.7} parent=31 // pred_check
        %p535 = pneg %p210
      $region50: #{encoder_forward.7} parent=31 // pred_check_branch
        %537 = sbr.rel (%p535) target = $region52
      $region51: #{encoder_forward.7} parent=31 // pred_region
        %p538 = scmp.lt.s32.totalorder %s30, 1
        %s539 = scalar_select %p538, %s30, 1
        %s540 = smul.addr %s539, 16
        %s541 = smul.addr %s540, 4
        %s542 = scalar_lea.vmem %s6, %s541
      $region52: #{encoder_forward.7} parent=31 // pred_fallthru
        _
      // Predicated region
      $region53: #{encoder_forward.7} parent=31 // pred_check
        %p543 = pneg %p236
      $region54: #{encoder_forward.7} parent=31 // pred_check_branch
        %545 = sbr.rel (%p543) target = $region56
      $region55: #{encoder_forward.7} parent=31 // pred_region
        %p546 = scmp.lt.s32.totalorder %s30, 1
        %s547 = scalar_select %p546, %s30, 1
        %s548 = scalar_lea.vmem %s7, %s547
      $region56: #{encoder_forward.7} parent=31 // pred_fallthru
        _
      // Predicated region
      $region57: #{encoder_forward.7} parent=31 // pred_check
        %p549 = pneg %p262
      $region58: #{encoder_forward.7} parent=31 // pred_check_branch
        %551 = sbr.rel (%p549) target = $region60
      $region59: #{encoder_forward.7} parent=31 // pred_region
        %p552 = scmp.lt.s32.totalorder %s30, 1
        %s553 = scalar_select %p552, %s30, 1
        %s554 = scalar_lea.vmem %s8, %s553
      $region60: #{encoder_forward.7} parent=31 // pred_fallthru
        _
      // Predicated region
      $region61: #{encoder_forward.7} parent=31 // pred_check
        %p555 = pneg %p288
      $region62: #{encoder_forward.7} parent=31 // pred_check_branch
        %557 = sbr.rel (%p555) target = $region64
      $region63: #{encoder_forward.7} parent=31 // pred_region
        %p558 = scmp.lt.s32.totalorder %s30, 1
        %s559 = scalar_select %p558, %s30, 1
        %s560 = scalar_lea.vmem %s9, %s559
      $region64: #{encoder_forward.7} parent=31 // pred_fallthru
        _
      // Predicated region
      $region65: #{encoder_forward.7} parent=31 // pred_check
        %p561 = pneg %p314
      $region66: #{encoder_forward.7} parent=31 // pred_check_branch
        %563 = sbr.rel (%p561) target = $region68
      $region67: #{encoder_forward.7} parent=31 // pred_region
        %p564 = scmp.lt.s32.totalorder %s30, 1
        %s565 = scalar_select %p564, %s30, 1
        %s566 = smul.addr %s565, 32
        %s567 = smul.addr %s566, 4
        %s568 = scalar_lea.vmem %s10, %s567
      $region68: #{encoder_forward.7} parent=31 // pred_fallthru
        _
      // Predicated region
      $region69: #{encoder_forward.7} parent=31 // pred_check
        %p569 = pneg %p340
      $region70: #{encoder_forward.7} parent=31 // pred_check_branch
        %571 = sbr.rel (%p569) target = $region72
      $region71: #{encoder_forward.7} parent=31 // pred_region
        %p572 = scmp.lt.s32.totalorder %s30, 1
        %s573 = scalar_select %p572, %s30, 1
        %s574 = smul.addr %s573, 2
        %s575 = scalar_lea.vmem %s11, %s574
      $region72: #{encoder_forward.7} parent=31 // pred_fallthru
        _
      // Predicated region
      $region73: #{encoder_forward.7} parent=31 // pred_check
        %p576 = pneg %p366
      $region74: #{encoder_forward.7} parent=31 // pred_check_branch
        %578 = sbr.rel (%p576) target = $region76
      $region75: #{encoder_forward.7} parent=31 // pred_region
        %p579 = scmp.lt.s32.totalorder %s30, 1
        %s580 = scalar_select %p579, %s30, 1
        %s581 = smul.addr %s580, 32
        %s582 = smul.addr %s581, 4
        %s583 = scalar_lea.vmem %s12, %s582
      $region76: #{encoder_forward.7} parent=31 // pred_fallthru
        _
      // Predicated region
      $region77: #{encoder_forward.7} parent=31 // pred_check
        %p584 = pneg %p392
      $region78: #{encoder_forward.7} parent=31 // pred_check_branch
        %586 = sbr.rel (%p584) target = $region80
      $region79: #{encoder_forward.7} parent=31 // pred_region
        %p587 = scmp.lt.s32.totalorder %s30, 1
        %s588 = scalar_select %p587, %s30, 1
        %s589 = scalar_lea.vmem %s13, %s588
      $region80: #{encoder_forward.7} parent=31 // pred_fallthru
        _
    $region32: #{encoder_forward.7} parent=5 // pred_fallthru
      _
    %p590 = scmp.le.s32.totalorder 1, %s22
    %p591 = scmp.lt.s32.totalorder %s22, 3
    %p592 = pnand %p590, %p591
    %p593 = pneg %p592
    // Predicated region
    $region81: #{encoder_forward.7} parent=5 // pred_check
      _
    $region82: #{encoder_forward.7} parent=5 // pred_check_branch
      %595 = sbr.rel (%p592) target = $region84
    $region83: #{encoder_forward.7} parent=5 // pred_region
      %s596 = ssub.s32 %s22, 1
      %s597 = smul.u32 2, %s31
      %p598 = scmp.lt.s32.totalorder %s597, 1
      %s599 = scalar_select %p598, %s597, 1
      %s600 = smul.addr %s599, 8
      %s601 = scalar_lea.vmem %s0, %s600
      %p602 = pneg %p60
      %p603 = pneg %p57
      %s604 = smul.u32 2, %s31
      %p605 = scmp.lt.s32.totalorder %s604, 1
      %s606 = scalar_select %p605, %s604, 1
      %s607 = scalar_lea.vmem %s1, %s606
      %p608 = pneg %p86
      %p609 = pneg %p83
      %p610 = scmp.lt.s32.totalorder %s32, 1
      %s611 = scalar_select %p610, %s32, 1
      %s612 = scalar_lea.vmem %s2, %s611
      %p613 = pneg %p112
      %p614 = pneg %p109
      %p615 = scmp.lt.s32.totalorder %s32, 1
      %s616 = scalar_select %p615, %s32, 1
      %s617 = scalar_lea.vmem %s3, %s616
      %p618 = pneg %p138
      %p619 = pneg %p135
      %p620 = scmp.lt.s32.totalorder %s32, 1
      %s621 = scalar_select %p620, %s32, 1
      %s622 = smul.addr %s621, 48
      %s623 = smul.addr %s622, 4
      %s624 = scalar_lea.vmem %s4, %s623
      %p625 = pneg %p164
      %p626 = pneg %p161
      %p627 = scmp.lt.s32.totalorder %s32, 1
      %s628 = scalar_select %p627, %s32, 1
      %s629 = smul.addr %s628, 3
      %s630 = scalar_lea.vmem %s5, %s629
      %p631 = pneg %p190
      %p632 = pneg %p187
      %p633 = scmp.lt.s32.totalorder %s32, 1
      %s634 = scalar_select %p633, %s32, 1
      %s635 = smul.addr %s634, 16
      %s636 = smul.addr %s635, 4
      %s637 = scalar_lea.vmem %s6, %s636
      %p638 = pneg %p216
      %p639 = pneg %p213
      %p640 = scmp.lt.s32.totalorder %s32, 1
      %s641 = scalar_select %p640, %s32, 1
      %s642 = scalar_lea.vmem %s7, %s641
      %p643 = pneg %p242
      %p644 = pneg %p239
      %p645 = scmp.lt.s32.totalorder %s32, 1
      %s646 = scalar_select %p645, %s32, 1
      %s647 = scalar_lea.vmem %s8, %s646
      %p648 = pneg %p268
      %p649 = pneg %p265
      %p650 = scmp.lt.s32.totalorder %s32, 1
      %s651 = scalar_select %p650, %s32, 1
      %s652 = scalar_lea.vmem %s9, %s651
      %p653 = pneg %p294
      %p654 = pneg %p291
      %p655 = scmp.lt.s32.totalorder %s32, 1
      %s656 = scalar_select %p655, %s32, 1
      %s657 = smul.addr %s656, 32
      %s658 = smul.addr %s657, 4
      %s659 = scalar_lea.vmem %s10, %s658
      %p660 = pneg %p320
      %p661 = pneg %p317
      %p662 = scmp.lt.s32.totalorder %s32, 1
      %s663 = scalar_select %p662, %s32, 1
      %s664 = smul.addr %s663, 2
      %s665 = scalar_lea.vmem %s11, %s664
      %p666 = pneg %p346
      %p667 = pneg %p343
      %p668 = scmp.lt.s32.totalorder %s32, 1
      %s669 = scalar_select %p668, %s32, 1
      %s670 = smul.addr %s669, 32
      %s671 = smul.addr %s670, 4
      %s672 = scalar_lea.vmem %s12, %s671
      %p673 = pneg %p372
      %p674 = pneg %p369
      %p675 = scmp.lt.s32.totalorder %s32, 1
      %s676 = scalar_select %p675, %s32, 1
      %s677 = scalar_lea.vmem %s13, %s676
      %p678 = pneg %p398
      %p679 = pneg %p395
      %p680 = pneg %p419
      %p681 = pneg %p416
      %p682 = pneg %p440
      %p683 = pneg %p437
      %p684 = pneg %p466
      %p685 = pneg %p463
      %s686 = smul.u32 2, %s31
      %p687 = scmp.lt.s32.totalorder %s686, 1
      %s688 = scalar_select %p687, %s686, 1
      %s689 = smul.addr %s688, 8
      %s690 = scalar_lea.vmem %s16, %s689
      %s691 = smul.u32 2, %s31
      %p692 = scmp.lt.s32.totalorder %s691, 1
      %s693 = scalar_select %p692, %s691, 1
      %s694 = smul.addr %s693, 8
      %s695 = scalar_lea.vmem %s0, %s694
      %s696 = smul.u32 2, %s31
      %s697 = smul.u32 2, %s31
      %p698 = scmp.lt.s32.totalorder %s697, 1
      %s699 = scalar_select %p698, %s697, 1
      %s700 = scalar_lea.vmem %s1, %s699
      %s701 = smul.u32 2, %s31
      %p702 = scmp.lt.s32.totalorder %s32, 1
      %s703 = scalar_select %p702, %s32, 1
      %s704 = scalar_lea.vmem %s2, %s703
      %p705 = scmp.lt.s32.totalorder %s32, 1
      %s706 = scalar_select %p705, %s32, 1
      %s707 = scalar_lea.vmem %s3, %s706
      %p708 = scmp.lt.s32.totalorder %s32, 1
      %s709 = scalar_select %p708, %s32, 1
      %s710 = smul.addr %s709, 48
      %s711 = smul.addr %s710, 4
      %s712 = scalar_lea.vmem %s4, %s711
      %p713 = scmp.lt.s32.totalorder %s32, 1
      %s714 = scalar_select %p713, %s32, 1
      %s715 = smul.addr %s714, 3
      %s716 = scalar_lea.vmem %s5, %s715
      %p717 = scmp.lt.s32.totalorder %s32, 1
      %s718 = scalar_select %p717, %s32, 1
      %s719 = smul.addr %s718, 16
      %s720 = smul.addr %s719, 4
      %s721 = scalar_lea.vmem %s6, %s720
      %p722 = scmp.lt.s32.totalorder %s32, 1
      %s723 = scalar_select %p722, %s32, 1
      %s724 = scalar_lea.vmem %s7, %s723
      %p725 = scmp.lt.s32.totalorder %s32, 1
      %s726 = scalar_select %p725, %s32, 1
      %s727 = scalar_lea.vmem %s8, %s726
      %p728 = scmp.lt.s32.totalorder %s32, 1
      %s729 = scalar_select %p728, %s32, 1
      %s730 = scalar_lea.vmem %s9, %s729
      %p731 = scmp.lt.s32.totalorder %s32, 1
      %s732 = scalar_select %p731, %s32, 1
      %s733 = smul.addr %s732, 32
      %s734 = smul.addr %s733, 4
      %s735 = scalar_lea.vmem %s10, %s734
      %p736 = scmp.lt.s32.totalorder %s32, 1
      %s737 = scalar_select %p736, %s32, 1
      %s738 = smul.addr %s737, 2
      %s739 = scalar_lea.vmem %s11, %s738
      %p740 = scmp.lt.s32.totalorder %s32, 1
      %s741 = scalar_select %p740, %s32, 1
      %s742 = smul.addr %s741, 32
      %s743 = smul.addr %s742, 4
      %s744 = scalar_lea.vmem %s12, %s743
      %p745 = scmp.lt.s32.totalorder %s32, 1
      %s746 = scalar_select %p745, %s32, 1
      %s747 = scalar_lea.vmem %s13, %s746
      %s748 = smul.u32 2, %s31
      %p749 = scmp.lt.s32.totalorder %s748, 1
      %s750 = scalar_select %p749, %s748, 1
      %s751 = smul.addr %s750, 8
      %s752 = scalar_lea.vmem %s16, %s751
      %s753 = smul.u32 2, %s31
      %p755 = scmp.eq.s32.totalorder %s32, 0
      // Predicated region
      $region85: #{encoder_forward.7} parent=83 // pred_check
        %p756 = pneg %p755
      $region86: #{encoder_forward.7} parent=83 // pred_check_branch
        %758 = sbr.rel (%p756) target = $region88
      $region87: #{encoder_forward.7} parent=83 // pred_region
        %v759 = vld [vmem:[%s695] sm:$0xff]
        %v760 = vld [vmem:[%s695 + $0x8] sm:$0xff]
        %761 = vst [vmem:[%s752] sm:$0xff] %v759
        %762 = vst [vmem:[%s752 + $0x8] sm:$0xff] %v760
      $region88: #{encoder_forward.7} parent=83 // pred_fallthru
        _
      %v763 = vld [vmem:[%s752] sm:$0xff]
      %v764 = vld [vmem:[%s752 + $0x8] sm:$0xff]
      %v765 = vld [vmem:[%s700] sm:$0x1]
      %v766 = vld [vmem:[%s700 + $0x1] sm:$0x1]
      %v767 = vld [vmem:[%s704] sm:$0x1]
      %v768 = vld [vmem:[%s707] sm:$0x1]
      %769 = vadd.xlane.f32.xlu0 %v763
      %v770 = vpop.xlane.xlu0 %769
      %771 = vadd.xlane.f32.xlu0 %v764
      %v772 = vpop.xlane.xlu0 %771
      %v773 = vrcp.pop 128.0
      %v774 = vmul.f32 %v770, %v773
      %v775 = vmul.f32 %v772, %v773
      %v776 = vsub.f32 %v763, %v774
      %v777 = vsub.f32 %v764, %v775
      %v778 = vmul.f32 %v776, %v776
      %v779 = vmul.f32 %v777, %v777
      %780 = vadd.xlane.f32.xlu0 %v778
      %v781 = vpop.xlane.xlu0 %780
      %782 = vadd.xlane.f32.xlu0 %v779
      %v783 = vpop.xlane.xlu0 %782
      %v784 = vmul.f32 %v781, %v773
      %v785 = vmul.f32 %v783, %v773
      %v786 = vadd.f32 %v784, 1e-12
      %v787 = vadd.f32 %v785, 1e-12
      %v788 = vrsqrt.pop %v786
      %v789 = vrsqrt.pop %v787
      %v790 = vmul.f32 %v776, %v788
      %v791 = vmul.f32 %v777, %v789
      %v793 = vlaneseq
      %v794 = vshrl.u32 %v793, 7
      %v795 = vsub.s32 0, %v794
      %v796 = vrot.slane %v767, %v795
      %v798 = vmul.f32 %v790, %v796
      %v799 = vmul.f32 %v791, %v796
      %v801 = vlaneseq
      %v802 = vshrl.u32 %v801, 7
      %v803 = vsub.s32 0, %v802
      %v804 = vrot.slane %v768, %v803
      %v806 = vadd.f32 %v798, %v804
      %v807 = vadd.f32 %v799, %v804
      %v808 = vpack.c.bf16 %v807, %v806
      %v809 = vld [vmem:[%s712] sm:$0xff]
      %v810 = vld [vmem:[%s712 + $0x8] sm:$0xf]
      %v811 = vld [vmem:[%s712 + $0xc] sm:$0xff]
      %v812 = vld [vmem:[%s712 + $0x14] sm:$0xf]
      %v813 = vld [vmem:[%s712 + $0x18] sm:$0xff]
      %v814 = vld [vmem:[%s712 + $0x20] sm:$0xf]
      %v815 = vld [vmem:[%s712 + $0x24] sm:$0xff]
      %v816 = vld [vmem:[%s712 + $0x2c] sm:$0xf]
      %v817 = vld [vmem:[%s712 + $0x30] sm:$0xff]
      %v818 = vld [vmem:[%s712 + $0x38] sm:$0xf]
      %v819 = vld [vmem:[%s712 + $0x3c] sm:$0xff]
      %v820 = vld [vmem:[%s712 + $0x44] sm:$0xf]
      %v821 = vld [vmem:[%s712 + $0x48] sm:$0xff]
      %v822 = vld [vmem:[%s712 + $0x50] sm:$0xf]
      %v823 = vld [vmem:[%s712 + $0x54] sm:$0xff]
      %v824 = vld [vmem:[%s712 + $0x5c] sm:$0xf]
      %v825 = vld [vmem:[%s712 + $0x60] sm:$0xff]
      %v826 = vld [vmem:[%s712 + $0x68] sm:$0xf]
      %v827 = vld [vmem:[%s712 + $0x6c] sm:$0xff]
      %v828 = vld [vmem:[%s712 + $0x74] sm:$0xf]
      %v829 = vld [vmem:[%s712 + $0x78] sm:$0xff]
      %v830 = vld [vmem:[%s712 + $0x80] sm:$0xf]
      %v831 = vld [vmem:[%s712 + $0x84] sm:$0xff]
      %v832 = vld [vmem:[%s712 + $0x8c] sm:$0xf]
      %v833 = vld [vmem:[%s712 + $0x90] sm:$0xff]
      %v834 = vld [vmem:[%s712 + $0x98] sm:$0xf]
      %v835 = vld [vmem:[%s712 + $0x9c] sm:$0xff]
      %v836 = vld [vmem:[%s712 + $0xa4] sm:$0xf]
      %v837 = vld [vmem:[%s712 + $0xa8] sm:$0xff]
      %v838 = vld [vmem:[%s712 + $0xb0] sm:$0xf]
      %v839 = vld [vmem:[%s712 + $0xb4] sm:$0xff]
      %v840 = vld [vmem:[%s712 + $0xbc] sm:$0xf]
      %v841 = vld [vmem:[%s716] sm:$0x7]
      %v843 = vlaneseq
      %v844 = vshrl.u32 %v843, 7
      %v845 = vsub.s32 0, %v844
      %v846 = vrot.slane %v841, %v845
      %v847 = vlaneseq
      %v848 = vshrl.u32 %v847, 7
      %v849 = vsub.s32 1, %v848
      %v850 = vrot.slane %v841, %v849
      %v851 = vlaneseq
      %v852 = vshrl.u32 %v851, 7
      %v853 = vsub.s32 2, %v852
      %v854 = vrot.slane %v841, %v853
      %v890 = vunpack.c.l.b16 %v809
      %v891 = vunpack.c.h.b16 %v809
      %v892 = vunpack.c.l.b16 %v810
      %v893 = vunpack.c.l.b16 %v811
      %v894 = vunpack.c.h.b16 %v811
      %v895 = vunpack.c.l.b16 %v812
      %v896 = vunpack.c.l.b16 %v813
      %v897 = vunpack.c.h.b16 %v813
      %v898 = vunpack.c.l.b16 %v814
      %v899 = vunpack.c.l.b16 %v815
      %v900 = vunpack.c.h.b16 %v815
      %v901 = vunpack.c.l.b16 %v816
      %v902 = vunpack.c.l.b16 %v817
      %v903 = vunpack.c.h.b16 %v817
      %v904 = vunpack.c.l.b16 %v818
      %v905 = vunpack.c.l.b16 %v819
      %v906 = vunpack.c.h.b16 %v819
      %v907 = vunpack.c.l.b16 %v820
      %v908 = vunpack.c.l.b16 %v821
      %v909 = vunpack.c.h.b16 %v821
      %v910 = vunpack.c.l.b16 %v822
      %v911 = vunpack.c.l.b16 %v823
      %v912 = vunpack.c.h.b16 %v823
      %v913 = vunpack.c.l.b16 %v824
      %v914 = vunpack.c.l.b16 %v825
      %v915 = vunpack.c.h.b16 %v825
      %v916 = vunpack.c.l.b16 %v826
      %v917 = vunpack.c.l.b16 %v827
      %v918 = vunpack.c.h.b16 %v827
      %v919 = vunpack.c.l.b16 %v828
      %v920 = vunpack.c.l.b16 %v829
      %v921 = vunpack.c.h.b16 %v829
      %v922 = vunpack.c.l.b16 %v830
      %v923 = vunpack.c.l.b16 %v831
      %v924 = vunpack.c.h.b16 %v831
      %v925 = vunpack.c.l.b16 %v832
      %v926 = vunpack.c.l.b16 %v833
      %v927 = vunpack.c.h.b16 %v833
      %v928 = vunpack.c.l.b16 %v834
      %v929 = vunpack.c.l.b16 %v835
      %v930 = vunpack.c.h.b16 %v835
      %v931 = vunpack.c.l.b16 %v836
      %v932 = vunpack.c.l.b16 %v837
      %v933 = vunpack.c.h.b16 %v837
      %v934 = vunpack.c.l.b16 %v838
      %v935 = vunpack.c.l.b16 %v839
      %v936 = vunpack.c.h.b16 %v839
      %v937 = vunpack.c.l.b16 %v840
      %v938 = vpack.c.b16 %v893, %v890
      %v939 = vpack.c.b16 %v894, %v891
      %v940 = vpack.c.b16 %v895, %v892
      %v941 = vpack.c.b16 %v899, %v896
      %v942 = vpack.c.b16 %v900, %v897
      %v943 = vpack.c.b16 %v901, %v898
      %v944 = vpack.c.b16 %v905, %v902
      %v945 = vpack.c.b16 %v906, %v903
      %v946 = vpack.c.b16 %v907, %v904
      %v947 = vpack.c.b16 %v911, %v908
      %v948 = vpack.c.b16 %v912, %v909
      %v949 = vpack.c.b16 %v913, %v910
      %v950 = vpack.c.b16 %v917, %v914
      %v951 = vpack.c.b16 %v918, %v915
      %v952 = vpack.c.b16 %v919, %v916
      %v953 = vpack.c.b16 %v923, %v920
      %v954 = vpack.c.b16 %v924, %v921
      %v955 = vpack.c.b16 %v925, %v922
      %v956 = vpack.c.b16 %v929, %v926
      %v957 = vpack.c.b16 %v930, %v927
      %v958 = vpack.c.b16 %v931, %v928
      %v959 = vpack.c.b16 %v935, %v932
      %v960 = vpack.c.b16 %v936, %v933
      %v961 = vpack.c.b16 %v937, %v934
      %986 = vmatprep.subr.bf16.mxu0 %v939
      %987 = vmatpush1.bf16.msra.mxu0 %v938
      %988 = vmatprep.subr.bf16.mxu0 %v942
      %989 = vmatpush1.bf16.msra.mxu0 %v941
      %990 = vmatprep.subr.bf16.mxu0 %v945
      %991 = vmatpush1.bf16.msra.mxu0 %v944
      %992 = vmatprep.subr.bf16.mxu0 %v948
      %993 = vmatpush1.bf16.msra.mxu0 %v947
      %994 = vmatprep.subr.bf16.mxu0 %v951
      %995 = vmatpush1.bf16.msra.mxu0 %v950
      %996 = vmatprep.subr.bf16.mxu0 %v954
      %997 = vmatpush1.bf16.msra.mxu0 %v953
      %998 = vmatprep.subr.bf16.mxu0 %v957
      %999 = vmatpush1.bf16.msra.mxu0 %v956
      %1000 = vmatprep.subr.bf16.mxu0 %v960
      %1001 = vmatpush1.bf16.msra.mxu0 %v959
      %1002 = vmatprep.subr.bf16.mxu0 0
      %1003 = vmatpush1.bf16.msra.mxu0 0
      %1004 = vmatprep.subr.bf16.mxu0 0
      %1005 = vmatpush1.bf16.msra.mxu0 0
      %1006 = vmatprep.subr.bf16.mxu0 0
      %1007 = vmatpush1.bf16.msra.mxu0 0
      %1008 = vmatprep.subr.bf16.mxu0 0
      %1009 = vmatpush1.bf16.msra.mxu0 0
      %1010 = vmatprep.subr.bf16.mxu0 0
      %1011 = vmatpush1.bf16.msra.mxu0 0
      %1012 = vmatprep.subr.bf16.mxu0 0
      %1013 = vmatpush1.bf16.msra.mxu0 0
      %1014 = vmatprep.subr.bf16.mxu0 0
      %1015 = vmatpush1.bf16.msra.mxu0 0
      %1016 = vmatprep.subr.bf16.mxu0 0
      %1017 = vmatpush1.bf16.msra.mxu0 0
      %1018 = vmatprep.mubr.bf16.mxu0 0
      %1019 = vmatmul.mubr.bf16.gmra.mrb[0].mxu0 %v808
      %v1020 = vpop.f32.mrb[0].mxu0
      %v1021 = vadd.f32 %v846, %v1020
      %v1022 = vpop.f32.mrb[0].mxu0
      %v1023 = vadd.f32 %v850, %v1022
      %v1024 = vpop.f32.mrb[0].mxu0
      %v1025 = vadd.f32 %v846, %v1024
      %v1026 = vpop.f32.mrb[0].mxu0
      %v1027 = vadd.f32 %v850, %v1026
      %1028 = vdwg.mxu0
      %1029 = vmatprep.subr.bf16.mxu0 0
      %1030 = vmatpush1.bf16.msra.mxu0 %v940
      %1031 = vmatprep.subr.bf16.mxu0 0
      %1032 = vmatpush1.bf16.msra.mxu0 %v943
      %1033 = vmatprep.subr.bf16.mxu0 0
      %1034 = vmatpush1.bf16.msra.mxu0 %v946
      %1035 = vmatprep.subr.bf16.mxu0 0
      %1036 = vmatpush1.bf16.msra.mxu0 %v949
      %1037 = vmatprep.subr.bf16.mxu0 0
      %1038 = vmatpush1.bf16.msra.mxu0 %v952
      %1039 = vmatprep.subr.bf16.mxu0 0
      %1040 = vmatpush1.bf16.msra.mxu0 %v955
      %1041 = vmatprep.subr.bf16.mxu0 0
      %1042 = vmatpush1.bf16.msra.mxu0 %v958
      %1043 = vmatprep.subr.bf16.mxu0 0
      %1044 = vmatpush1.bf16.msra.mxu0 %v961
      %1045 = vmatprep.subr.bf16.mxu0 0
      %1046 = vmatpush1.bf16.msra.mxu0 0
      %1047 = vmatprep.subr.bf16.mxu0 0
      %1048 = vmatpush1.bf16.msra.mxu0 0
      %1049 = vmatprep.subr.bf16.mxu0 0
      %1050 = vmatpush1.bf16.msra.mxu0 0
      %1051 = vmatprep.subr.bf16.mxu0 0
      %1052 = vmatpush1.bf16.msra.mxu0 0
      %1053 = vmatprep.subr.bf16.mxu0 0
      %1054 = vmatpush1.bf16.msra.mxu0 0
      %1055 = vmatprep.subr.bf16.mxu0 0
      %1056 = vmatpush1.bf16.msra.mxu0 0
      %1057 = vmatprep.subr.bf16.mxu0 0
      %1058 = vmatpush1.bf16.msra.mxu0 0
      %1059 = vmatprep.subr.bf16.mxu0 0
      %1060 = vmatpush1.bf16.msra.mxu0 0
      %1061 = vmatprep.mubr.bf16.mxu0 0
      %1062 = vmatmul.mubr.bf16.gmra.mrb[0].mxu0 %v808
      %v1063 = vpop.f32.mrb[0].mxu0
      %v1064 = vadd.f32 %v854, %v1063
      %v1065 = vpop.f32.mrb[0].mxu0
      %v1066 = vpop.f32.mrb[0].mxu0
      %v1067 = vadd.f32 %v854, %v1066
      %v1068 = vpop.f32.mrb[0].mxu0
      %1069 = vdwg.mxu0
      %1072 = vrot.lane.b32.xlu0 %v1021, 96
      %v1073 = vpop.permute.xlu0 %1072
      %1074 = vrot.lane.b32.xlu0 %v1025, 96
      %v1075 = vpop.permute.xlu0 %1074
      %1078 = vrot.lane.b32.xlu0 %v1021, 64
      %v1079 = vpop.permute.xlu0 %1078
      %1080 = vrot.lane.b32.xlu0 %v1025, 64
      %v1081 = vpop.permute.xlu0 %1080
      %1084 = vrot.lane.b32.xlu0 %v1021, 32
      %v1085 = vpop.permute.xlu0 %1084
      %1086 = vrot.lane.b32.xlu0 %v1025, 32
      %v1087 = vpop.permute.xlu0 %1086
      %v1090 = vcombine.low %v1021, %v1079
      %v1091 = vcombine.high %v1021, %v1079
      %v1093 = vunpack.c.l.s4 1983009808
      %v1094 = vunpack.c.0.s8 %v1093
      %v1095 = vlaneseq
      %v1096 = vshrl.u32 %v1095, 7
      %v1097 = vsub.s32 %v1094, %v1096
      %v1098 = vrot.slane %v1090, %v1097
      %v1100 = vunpack.c.l.s4 1983009808
      %v1101 = vunpack.c.0.s8 %v1100
      %v1102 = vlaneseq
      %v1103 = vshrl.u32 %v1102, 7
      %v1104 = vsub.s32 %v1101, %v1103
      %v1105 = vrot.slane %v1091, %v1104
      %v1106 = vcombine.low %v1073, %v1085
      %v1107 = vcombine.high %v1073, %v1085
      %v1109 = vunpack.c.l.s4 1983009808
      %v1110 = vunpack.c.0.s8 %v1109
      %v1111 = vlaneseq
      %v1112 = vshrl.u32 %v1111, 7
      %v1113 = vsub.s32 %v1110, %v1112
      %v1114 = vrot.slane %v1106, %v1113
      %v1116 = vunpack.c.l.s4 1983009808
      %v1117 = vunpack.c.0.s8 %v1116
      %v1118 = vlaneseq
      %v1119 = vshrl.u32 %v1118, 7
      %v1120 = vsub.s32 %v1117, %v1119
      %v1121 = vrot.slane %v1107, %v1120
      %v1122 = vcombine.low %v1098, %v1114
      %v1123 = vcombine.high %v1098, %v1114
      %v1125 = vunpack.c.l.s4 1934713408
      %v1126 = vunpack.c.0.s8 %v1125
      %v1127 = vlaneseq
      %v1128 = vshrl.u32 %v1127, 7
      %v1129 = vsub.s32 %v1126, %v1128
      %v1130 = vrot.slane %v1122, %v1129
      %v1132 = vunpack.c.l.s4 1934713408
      %v1133 = vunpack.c.0.s8 %v1132
      %v1134 = vlaneseq
      %v1135 = vshrl.u32 %v1134, 7
      %v1136 = vsub.s32 %v1133, %v1135
      %v1137 = vrot.slane %v1123, %v1136
      %v1138 = vcombine.low %v1105, %v1121
      %v1139 = vcombine.high %v1105, %v1121
      %v1141 = vunpack.c.l.s4 1934713408
      %v1142 = vunpack.c.0.s8 %v1141
      %v1143 = vlaneseq
      %v1144 = vshrl.u32 %v1143, 7
      %v1145 = vsub.s32 %v1142, %v1144
      %v1146 = vrot.slane %v1138, %v1145
      %v1148 = vunpack.c.l.s4 1934713408
      %v1149 = vunpack.c.0.s8 %v1148
      %v1150 = vlaneseq
      %v1151 = vshrl.u32 %v1150, 7
      %v1152 = vsub.s32 %v1149, %v1151
      %v1153 = vrot.slane %v1139, %v1152
      %v1154 = vcombine.high %v1130, 0.0
      %v1155 = vcombine.high %v1137, 0.0
      %v1156 = vcombine.high %v1146, 0.0
      %v1157 = vcombine.high %v1153, 0.0
      %v1158 = vcombine.low %v1025, %v1081
      %v1159 = vcombine.high %v1025, %v1081
      %v1161 = vunpack.c.l.s4 1983009808
      %v1162 = vunpack.c.0.s8 %v1161
      %v1163 = vlaneseq
      %v1164 = vshrl.u32 %v1163, 7
      %v1165 = vsub.s32 %v1162, %v1164
      %v1166 = vrot.slane %v1158, %v1165
      %v1168 = vunpack.c.l.s4 1983009808
      %v1169 = vunpack.c.0.s8 %v1168
      %v1170 = vlaneseq
      %v1171 = vshrl.u32 %v1170, 7
      %v1172 = vsub.s32 %v1169, %v1171
      %v1173 = vrot.slane %v1159, %v1172
      %v1174 = vcombine.low %v1075, %v1087
      %v1175 = vcombine.high %v1075, %v1087
      %v1177 = vunpack.c.l.s4 1983009808
      %v1178 = vunpack.c.0.s8 %v1177
      %v1179 = vlaneseq
      %v1180 = vshrl.u32 %v1179, 7
      %v1181 = vsub.s32 %v1178, %v1180
      %v1182 = vrot.slane %v1174, %v1181
      %v1184 = vunpack.c.l.s4 1983009808
      %v1185 = vunpack.c.0.s8 %v1184
      %v1186 = vlaneseq
      %v1187 = vshrl.u32 %v1186, 7
      %v1188 = vsub.s32 %v1185, %v1187
      %v1189 = vrot.slane %v1175, %v1188
      %v1190 = vcombine.low %v1166, %v1182
      %v1191 = vcombine.high %v1166, %v1182
      %v1193 = vunpack.c.l.s4 1934713408
      %v1194 = vunpack.c.0.s8 %v1193
      %v1195 = vlaneseq
      %v1196 = vshrl.u32 %v1195, 7
      %v1197 = vsub.s32 %v1194, %v1196
      %v1198 = vrot.slane %v1190, %v1197
      %v1200 = vunpack.c.l.s4 1934713408
      %v1201 = vunpack.c.0.s8 %v1200
      %v1202 = vlaneseq
      %v1203 = vshrl.u32 %v1202, 7
      %v1204 = vsub.s32 %v1201, %v1203
      %v1205 = vrot.slane %v1191, %v1204
      %v1206 = vcombine.low %v1173, %v1189
      %v1207 = vcombine.high %v1173, %v1189
      %v1209 = vunpack.c.l.s4 1934713408
      %v1210 = vunpack.c.0.s8 %v1209
      %v1211 = vlaneseq
      %v1212 = vshrl.u32 %v1211, 7
      %v1213 = vsub.s32 %v1210, %v1212
      %v1214 = vrot.slane %v1206, %v1213
      %v1216 = vunpack.c.l.s4 1934713408
      %v1217 = vunpack.c.0.s8 %v1216
      %v1218 = vlaneseq
      %v1219 = vshrl.u32 %v1218, 7
      %v1220 = vsub.s32 %v1217, %v1219
      %v1221 = vrot.slane %v1207, %v1220
      %v1222 = vcombine.high %v1198, 0.0
      %v1223 = vcombine.high %v1205, 0.0
      %v1224 = vcombine.high %v1214, 0.0
      %v1225 = vcombine.high %v1221, 0.0
      %v1226 = vcombine.low %v1130, %v1137
      %v1228 = vunpack.c.l.s4 1983009808
      %v1229 = vunpack.c.0.s8 %v1228
      %v1230 = vlaneseq
      %v1231 = vshrl.u32 %v1230, 7
      %v1232 = vsub.s32 %v1229, %v1231
      %v1233 = vrot.slane %v1226, %v1232
      %v1234 = vcombine.low %v1154, %v1155
      %v1236 = vunpack.c.l.s4 1983009808
      %v1237 = vunpack.c.0.s8 %v1236
      %v1238 = vlaneseq
      %v1239 = vshrl.u32 %v1238, 7
      %v1240 = vsub.s32 %v1237, %v1239
      %v1241 = vrot.slane %v1234, %v1240
      %v1242 = vcombine.low %v1146, %v1153
      %v1244 = vunpack.c.l.s4 1983009808
      %v1245 = vunpack.c.0.s8 %v1244
      %v1246 = vlaneseq
      %v1247 = vshrl.u32 %v1246, 7
      %v1248 = vsub.s32 %v1245, %v1247
      %v1249 = vrot.slane %v1242, %v1248
      %v1250 = vcombine.low %v1156, %v1157
      %v1252 = vunpack.c.l.s4 1983009808
      %v1253 = vunpack.c.0.s8 %v1252
      %v1254 = vlaneseq
      %v1255 = vshrl.u32 %v1254, 7
      %v1256 = vsub.s32 %v1253, %v1255
      %v1257 = vrot.slane %v1250, %v1256
      %v1258 = vcombine.low %v1233, %v1241
      %v1259 = vcombine.high %v1233, %v1241
      %v1261 = vunpack.c.l.s4 1934713408
      %v1262 = vunpack.c.0.s8 %v1261
      %v1263 = vlaneseq
      %v1264 = vshrl.u32 %v1263, 7
      %v1265 = vsub.s32 %v1262, %v1264
      %v1266 = vrot.slane %v1258, %v1265
      %v1268 = vunpack.c.l.s4 1934713408
      %v1269 = vunpack.c.0.s8 %v1268
      %v1270 = vlaneseq
      %v1271 = vshrl.u32 %v1270, 7
      %v1272 = vsub.s32 %v1269, %v1271
      %v1273 = vrot.slane %v1259, %v1272
      %v1274 = vcombine.low %v1249, %v1257
      %v1275 = vcombine.high %v1249, %v1257
      %v1277 = vunpack.c.l.s4 1934713408
      %v1278 = vunpack.c.0.s8 %v1277
      %v1279 = vlaneseq
      %v1280 = vshrl.u32 %v1279, 7
      %v1281 = vsub.s32 %v1278, %v1280
      %v1282 = vrot.slane %v1274, %v1281
      %v1284 = vunpack.c.l.s4 1934713408
      %v1285 = vunpack.c.0.s8 %v1284
      %v1286 = vlaneseq
      %v1287 = vshrl.u32 %v1286, 7
      %v1288 = vsub.s32 %v1285, %v1287
      %v1289 = vrot.slane %v1275, %v1288
      %v1290 = vcombine.low %v1266, %v1282
      %v1291 = vcombine.high %v1266, %v1282
      %v1292 = vcombine.low %v1273, %v1289
      %v1293 = vcombine.high %v1273, %v1289
      %v1294 = vcombine.low %v1198, %v1205
      %v1296 = vunpack.c.l.s4 1983009808
      %v1297 = vunpack.c.0.s8 %v1296
      %v1298 = vlaneseq
      %v1299 = vshrl.u32 %v1298, 7
      %v1300 = vsub.s32 %v1297, %v1299
      %v1301 = vrot.slane %v1294, %v1300
      %v1302 = vcombine.low %v1222, %v1223
      %v1304 = vunpack.c.l.s4 1983009808
      %v1305 = vunpack.c.0.s8 %v1304
      %v1306 = vlaneseq
      %v1307 = vshrl.u32 %v1306, 7
      %v1308 = vsub.s32 %v1305, %v1307
      %v1309 = vrot.slane %v1302, %v1308
      %v1310 = vcombine.low %v1214, %v1221
      %v1312 = vunpack.c.l.s4 1983009808
      %v1313 = vunpack.c.0.s8 %v1312
      %v1314 = vlaneseq
      %v1315 = vshrl.u32 %v1314, 7
      %v1316 = vsub.s32 %v1313, %v1315
      %v1317 = vrot.slane %v1310, %v1316
      %v1318 = vcombine.low %v1224, %v1225
      %v1320 = vunpack.c.l.s4 1983009808
      %v1321 = vunpack.c.0.s8 %v1320
      %v1322 = vlaneseq
      %v1323 = vshrl.u32 %v1322, 7
      %v1324 = vsub.s32 %v1321, %v1323
      %v1325 = vrot.slane %v1318, %v1324
      %v1326 = vcombine.low %v1301, %v1309
      %v1327 = vcombine.high %v1301, %v1309
      %v1329 = vunpack.c.l.s4 1934713408
      %v1330 = vunpack.c.0.s8 %v1329
      %v1331 = vlaneseq
      %v1332 = vshrl.u32 %v1331, 7
      %v1333 = vsub.s32 %v1330, %v1332
      %v1334 = vrot.slane %v1326, %v1333
      %v1336 = vunpack.c.l.s4 1934713408
      %v1337 = vunpack.c.0.s8 %v1336
      %v1338 = vlaneseq
      %v1339 = vshrl.u32 %v1338, 7
      %v1340 = vsub.s32 %v1337, %v1339
      %v1341 = vrot.slane %v1327, %v1340
      %v1342 = vcombine.low %v1317, %v1325
      %v1343 = vcombine.high %v1317, %v1325
      %v1345 = vunpack.c.l.s4 1934713408
      %v1346 = vunpack.c.0.s8 %v1345
      %v1347 = vlaneseq
      %v1348 = vshrl.u32 %v1347, 7
      %v1349 = vsub.s32 %v1346, %v1348
      %v1350 = vrot.slane %v1342, %v1349
      %v1352 = vunpack.c.l.s4 1934713408
      %v1353 = vunpack.c.0.s8 %v1352
      %v1354 = vlaneseq
      %v1355 = vshrl.u32 %v1354, 7
      %v1356 = vsub.s32 %v1353, %v1355
      %v1357 = vrot.slane %v1343, %v1356
      %v1358 = vcombine.low %v1334, %v1350
      %v1359 = vcombine.high %v1334, %v1350
      %v1360 = vcombine.low %v1341, %v1357
      %v1361 = vcombine.high %v1341, %v1357
      %v1362 = vpack.c.bf16 %v1290, %v1290
      %v1363 = vpack.c.bf16 %v1291, %v1291
      %v1364 = vpack.c.bf16 %v1292, %v1292
      %v1365 = vpack.c.bf16 %v1293, %v1293
      %v1366 = vpack.c.bf16 %v1358, %v1358
      %v1367 = vpack.c.bf16 %v1359, %v1359
      %v1368 = vpack.c.bf16 %v1360, %v1360
      %v1369 = vpack.c.bf16 %v1361, %v1361
      %1372 = vrot.lane.b32.xlu0 %v1023, 96
      %v1373 = vpop.permute.xlu0 %1372
      %1374 = vrot.lane.b32.xlu0 %v1027, 96
      %v1375 = vpop.permute.xlu0 %1374
      %1378 = vrot.lane.b32.xlu0 %v1023, 64
      %v1379 = vpop.permute.xlu0 %1378
      %1380 = vrot.lane.b32.xlu0 %v1027, 64
      %v1381 = vpop.permute.xlu0 %1380
      %1384 = vrot.lane.b32.xlu0 %v1023, 32
      %v1385 = vpop.permute.xlu0 %1384
      %1386 = vrot.lane.b32.xlu0 %v1027, 32
      %v1387 = vpop.permute.xlu0 %1386
      %v1390 = vcombine.low %v1023, %v1379
      %v1391 = vcombine.high %v1023, %v1379
      %v1393 = vunpack.c.l.s4 1983009808
      %v1394 = vunpack.c.0.s8 %v1393
      %v1395 = vlaneseq
      %v1396 = vshrl.u32 %v1395, 7
      %v1397 = vsub.s32 %v1394, %v1396
      %v1398 = vrot.slane %v1390, %v1397
      %v1400 = vunpack.c.l.s4 1983009808
      %v1401 = vunpack.c.0.s8 %v1400
      %v1402 = vlaneseq
      %v1403 = vshrl.u32 %v1402, 7
      %v1404 = vsub.s32 %v1401, %v1403
      %v1405 = vrot.slane %v1391, %v1404
      %v1406 = vcombine.low %v1373, %v1385
      %v1407 = vcombine.high %v1373, %v1385
      %v1409 = vunpack.c.l.s4 1983009808
      %v1410 = vunpack.c.0.s8 %v1409
      %v1411 = vlaneseq
      %v1412 = vshrl.u32 %v1411, 7
      %v1413 = vsub.s32 %v1410, %v1412
      %v1414 = vrot.slane %v1406, %v1413
      %v1416 = vunpack.c.l.s4 1983009808
      %v1417 = vunpack.c.0.s8 %v1416
      %v1418 = vlaneseq
      %v1419 = vshrl.u32 %v1418, 7
      %v1420 = vsub.s32 %v1417, %v1419
      %v1421 = vrot.slane %v1407, %v1420
      %v1422 = vcombine.low %v1398, %v1414
      %v1423 = vcombine.high %v1398, %v1414
      %v1425 = vunpack.c.l.s4 1934713408
      %v1426 = vunpack.c.0.s8 %v1425
      %v1427 = vlaneseq
      %v1428 = vshrl.u32 %v1427, 7
      %v1429 = vsub.s32 %v1426, %v1428
      %v1430 = vrot.slane %v1422, %v1429
      %v1432 = vunpack.c.l.s4 1934713408
      %v1433 = vunpack.c.0.s8 %v1432
      %v1434 = vlaneseq
      %v1435 = vshrl.u32 %v1434, 7
      %v1436 = vsub.s32 %v1433, %v1435
      %v1437 = vrot.slane %v1423, %v1436
      %v1438 = vcombine.low %v1405, %v1421
      %v1439 = vcombine.high %v1405, %v1421
      %v1441 = vunpack.c.l.s4 1934713408
      %v1442 = vunpack.c.0.s8 %v1441
      %v1443 = vlaneseq
      %v1444 = vshrl.u32 %v1443, 7
      %v1445 = vsub.s32 %v1442, %v1444
      %v1446 = vrot.slane %v1438, %v1445
      %v1448 = vunpack.c.l.s4 1934713408
      %v1449 = vunpack.c.0.s8 %v1448
      %v1450 = vlaneseq
      %v1451 = vshrl.u32 %v1450, 7
      %v1452 = vsub.s32 %v1449, %v1451
      %v1453 = vrot.slane %v1439, %v1452
      %v1454 = vcombine.high %v1430, 0.0
      %v1455 = vcombine.high %v1437, 0.0
      %v1456 = vcombine.high %v1446, 0.0
      %v1457 = vcombine.high %v1453, 0.0
      %v1458 = vcombine.low %v1027, %v1381
      %v1459 = vcombine.high %v1027, %v1381
      %v1461 = vunpack.c.l.s4 1983009808
      %v1462 = vunpack.c.0.s8 %v1461
      %v1463 = vlaneseq
      %v1464 = vshrl.u32 %v1463, 7
      %v1465 = vsub.s32 %v1462, %v1464
      %v1466 = vrot.slane %v1458, %v1465
      %v1468 = vunpack.c.l.s4 1983009808
      %v1469 = vunpack.c.0.s8 %v1468
      %v1470 = vlaneseq
      %v1471 = vshrl.u32 %v1470, 7
      %v1472 = vsub.s32 %v1469, %v1471
      %v1473 = vrot.slane %v1459, %v1472
      %v1474 = vcombine.low %v1375, %v1387
      %v1475 = vcombine.high %v1375, %v1387
      %v1477 = vunpack.c.l.s4 1983009808
      %v1478 = vunpack.c.0.s8 %v1477
      %v1479 = vlaneseq
      %v1480 = vshrl.u32 %v1479, 7
      %v1481 = vsub.s32 %v1478, %v1480
      %v1482 = vrot.slane %v1474, %v1481
      %v1484 = vunpack.c.l.s4 1983009808
      %v1485 = vunpack.c.0.s8 %v1484
      %v1486 = vlaneseq
      %v1487 = vshrl.u32 %v1486, 7
      %v1488 = vsub.s32 %v1485, %v1487
      %v1489 = vrot.slane %v1475, %v1488
      %v1490 = vcombine.low %v1466, %v1482
      %v1491 = vcombine.high %v1466, %v1482
      %v1493 = vunpack.c.l.s4 1934713408
      %v1494 = vunpack.c.0.s8 %v1493
      %v1495 = vlaneseq
      %v1496 = vshrl.u32 %v1495, 7
      %v1497 = vsub.s32 %v1494, %v1496
      %v1498 = vrot.slane %v1490, %v1497
      %v1500 = vunpack.c.l.s4 1934713408
      %v1501 = vunpack.c.0.s8 %v1500
      %v1502 = vlaneseq
      %v1503 = vshrl.u32 %v1502, 7
      %v1504 = vsub.s32 %v1501, %v1503
      %v1505 = vrot.slane %v1491, %v1504
      %v1506 = vcombine.low %v1473, %v1489
      %v1507 = vcombine.high %v1473, %v1489
      %v1509 = vunpack.c.l.s4 1934713408
      %v1510 = vunpack.c.0.s8 %v1509
      %v1511 = vlaneseq
      %v1512 = vshrl.u32 %v1511, 7
      %v1513 = vsub.s32 %v1510, %v1512
      %v1514 = vrot.slane %v1506, %v1513
      %v1516 = vunpack.c.l.s4 1934713408
      %v1517 = vunpack.c.0.s8 %v1516
      %v1518 = vlaneseq
      %v1519 = vshrl.u32 %v1518, 7
      %v1520 = vsub.s32 %v1517, %v1519
      %v1521 = vrot.slane %v1507, %v1520
      %v1522 = vcombine.high %v1498, 0.0
      %v1523 = vcombine.high %v1505, 0.0
      %v1524 = vcombine.high %v1514, 0.0
      %v1525 = vcombine.high %v1521, 0.0
      %v1526 = vcombine.low %v1430, %v1437
      %v1528 = vunpack.c.l.s4 1983009808
      %v1529 = vunpack.c.0.s8 %v1528
      %v1530 = vlaneseq
      %v1531 = vshrl.u32 %v1530, 7
      %v1532 = vsub.s32 %v1529, %v1531
      %v1533 = vrot.slane %v1526, %v1532
      %v1534 = vcombine.low %v1454, %v1455
      %v1536 = vunpack.c.l.s4 1983009808
      %v1537 = vunpack.c.0.s8 %v1536
      %v1538 = vlaneseq
      %v1539 = vshrl.u32 %v1538, 7
      %v1540 = vsub.s32 %v1537, %v1539
      %v1541 = vrot.slane %v1534, %v1540
      %v1542 = vcombine.low %v1446, %v1453
      %v1544 = vunpack.c.l.s4 1983009808
      %v1545 = vunpack.c.0.s8 %v1544
      %v1546 = vlaneseq
      %v1547 = vshrl.u32 %v1546, 7
      %v1548 = vsub.s32 %v1545, %v1547
      %v1549 = vrot.slane %v1542, %v1548
      %v1550 = vcombine.low %v1456, %v1457
      %v1552 = vunpack.c.l.s4 1983009808
      %v1553 = vunpack.c.0.s8 %v1552
      %v1554 = vlaneseq
      %v1555 = vshrl.u32 %v1554, 7
      %v1556 = vsub.s32 %v1553, %v1555
      %v1557 = vrot.slane %v1550, %v1556
      %v1558 = vcombine.low %v1533, %v1541
      %v1559 = vcombine.high %v1533, %v1541
      %v1561 = vunpack.c.l.s4 1934713408
      %v1562 = vunpack.c.0.s8 %v1561
      %v1563 = vlaneseq
      %v1564 = vshrl.u32 %v1563, 7
      %v1565 = vsub.s32 %v1562, %v1564
      %v1566 = vrot.slane %v1558, %v1565
      %v1568 = vunpack.c.l.s4 1934713408
      %v1569 = vunpack.c.0.s8 %v1568
      %v1570 = vlaneseq
      %v1571 = vshrl.u32 %v1570, 7
      %v1572 = vsub.s32 %v1569, %v1571
      %v1573 = vrot.slane %v1559, %v1572
      %v1574 = vcombine.low %v1549, %v1557
      %v1575 = vcombine.high %v1549, %v1557
      %v1577 = vunpack.c.l.s4 1934713408
      %v1578 = vunpack.c.0.s8 %v1577
      %v1579 = vlaneseq
      %v1580 = vshrl.u32 %v1579, 7
      %v1581 = vsub.s32 %v1578, %v1580
      %v1582 = vrot.slane %v1574, %v1581
      %v1584 = vunpack.c.l.s4 1934713408
      %v1585 = vunpack.c.0.s8 %v1584
      %v1586 = vlaneseq
      %v1587 = vshrl.u32 %v1586, 7
      %v1588 = vsub.s32 %v1585, %v1587
      %v1589 = vrot.slane %v1575, %v1588
      %v1590 = vcombine.low %v1566, %v1582
      %v1591 = vcombine.high %v1566, %v1582
      %v1592 = vcombine.low %v1573, %v1589
      %v1593 = vcombine.high %v1573, %v1589
      %v1594 = vcombine.low %v1498, %v1505
      %v1596 = vunpack.c.l.s4 1983009808
      %v1597 = vunpack.c.0.s8 %v1596
      %v1598 = vlaneseq
      %v1599 = vshrl.u32 %v1598, 7
      %v1600 = vsub.s32 %v1597, %v1599
      %v1601 = vrot.slane %v1594, %v1600
      %v1602 = vcombine.low %v1522, %v1523
      %v1604 = vunpack.c.l.s4 1983009808
      %v1605 = vunpack.c.0.s8 %v1604
      %v1606 = vlaneseq
      %v1607 = vshrl.u32 %v1606, 7
      %v1608 = vsub.s32 %v1605, %v1607
      %v1609 = vrot.slane %v1602, %v1608
      %v1610 = vcombine.low %v1514, %v1521
      %v1612 = vunpack.c.l.s4 1983009808
      %v1613 = vunpack.c.0.s8 %v1612
      %v1614 = vlaneseq
      %v1615 = vshrl.u32 %v1614, 7
      %v1616 = vsub.s32 %v1613, %v1615
      %v1617 = vrot.slane %v1610, %v1616
      %v1618 = vcombine.low %v1524, %v1525
      %v1620 = vunpack.c.l.s4 1983009808
      %v1621 = vunpack.c.0.s8 %v1620
      %v1622 = vlaneseq
      %v1623 = vshrl.u32 %v1622, 7
      %v1624 = vsub.s32 %v1621, %v1623
      %v1625 = vrot.slane %v1618, %v1624
      %v1626 = vcombine.low %v1601, %v1609
      %v1627 = vcombine.high %v1601, %v1609
      %v1629 = vunpack.c.l.s4 1934713408
      %v1630 = vunpack.c.0.s8 %v1629
      %v1631 = vlaneseq
      %v1632 = vshrl.u32 %v1631, 7
      %v1633 = vsub.s32 %v1630, %v1632
      %v1634 = vrot.slane %v1626, %v1633
      %v1636 = vunpack.c.l.s4 1934713408
      %v1637 = vunpack.c.0.s8 %v1636
      %v1638 = vlaneseq
      %v1639 = vshrl.u32 %v1638, 7
      %v1640 = vsub.s32 %v1637, %v1639
      %v1641 = vrot.slane %v1627, %v1640
      %v1642 = vcombine.low %v1617, %v1625
      %v1643 = vcombine.high %v1617, %v1625
      %v1645 = vunpack.c.l.s4 1934713408
      %v1646 = vunpack.c.0.s8 %v1645
      %v1647 = vlaneseq
      %v1648 = vshrl.u32 %v1647, 7
      %v1649 = vsub.s32 %v1646, %v1648
      %v1650 = vrot.slane %v1642, %v1649
      %v1652 = vunpack.c.l.s4 1934713408
      %v1653 = vunpack.c.0.s8 %v1652
      %v1654 = vlaneseq
      %v1655 = vshrl.u32 %v1654, 7
      %v1656 = vsub.s32 %v1653, %v1655
      %v1657 = vrot.slane %v1643, %v1656
      %v1658 = vcombine.low %v1634, %v1650
      %v1659 = vcombine.high %v1634, %v1650
      %v1660 = vcombine.low %v1641, %v1657
      %v1661 = vcombine.high %v1641, %v1657
      %v1662 = vpack.c.bf16 %v1590, %v1590
      %v1663 = vpack.c.bf16 %v1591, %v1591
      %v1664 = vpack.c.bf16 %v1592, %v1592
      %v1665 = vpack.c.bf16 %v1593, %v1593
      %v1666 = vpack.c.bf16 %v1658, %v1658
      %v1667 = vpack.c.bf16 %v1659, %v1659
      %v1668 = vpack.c.bf16 %v1660, %v1660
      %v1669 = vpack.c.bf16 %v1661, %v1661
      %1672 = vrot.lane.b32.xlu0 %v1064, 96
      %v1673 = vpop.permute.xlu0 %1672
      %1674 = vrot.lane.b32.xlu0 %v1067, 96
      %v1675 = vpop.permute.xlu0 %1674
      %1678 = vrot.lane.b32.xlu0 %v1064, 64
      %v1679 = vpop.permute.xlu0 %1678
      %1680 = vrot.lane.b32.xlu0 %v1067, 64
      %v1681 = vpop.permute.xlu0 %1680
      %1684 = vrot.lane.b32.xlu0 %v1064, 32
      %v1685 = vpop.permute.xlu0 %1684
      %1686 = vrot.lane.b32.xlu0 %v1067, 32
      %v1687 = vpop.permute.xlu0 %1686
      %v1690 = vcombine.low %v1064, %v1679
      %v1691 = vcombine.high %v1064, %v1679
      %v1693 = vunpack.c.l.s4 1983009808
      %v1694 = vunpack.c.0.s8 %v1693
      %v1695 = vlaneseq
      %v1696 = vshrl.u32 %v1695, 7
      %v1697 = vsub.s32 %v1694, %v1696
      %v1698 = vrot.slane %v1690, %v1697
      %v1700 = vunpack.c.l.s4 1983009808
      %v1701 = vunpack.c.0.s8 %v1700
      %v1702 = vlaneseq
      %v1703 = vshrl.u32 %v1702, 7
      %v1704 = vsub.s32 %v1701, %v1703
      %v1705 = vrot.slane %v1691, %v1704
      %v1706 = vcombine.low %v1673, %v1685
      %v1707 = vcombine.high %v1673, %v1685
      %v1709 = vunpack.c.l.s4 1983009808
      %v1710 = vunpack.c.0.s8 %v1709
      %v1711 = vlaneseq
      %v1712 = vshrl.u32 %v1711, 7
      %v1713 = vsub.s32 %v1710, %v1712
      %v1714 = vrot.slane %v1706, %v1713
      %v1716 = vunpack.c.l.s4 1983009808
      %v1717 = vunpack.c.0.s8 %v1716
      %v1718 = vlaneseq
      %v1719 = vshrl.u32 %v1718, 7
      %v1720 = vsub.s32 %v1717, %v1719
      %v1721 = vrot.slane %v1707, %v1720
      %v1722 = vcombine.low %v1698, %v1714
      %v1723 = vcombine.high %v1698, %v1714
      %v1725 = vunpack.c.l.s4 1934713408
      %v1726 = vunpack.c.0.s8 %v1725
      %v1727 = vlaneseq
      %v1728 = vshrl.u32 %v1727, 7
      %v1729 = vsub.s32 %v1726, %v1728
      %v1730 = vrot.slane %v1722, %v1729
      %v1732 = vunpack.c.l.s4 1934713408
      %v1733 = vunpack.c.0.s8 %v1732
      %v1734 = vlaneseq
      %v1735 = vshrl.u32 %v1734, 7
      %v1736 = vsub.s32 %v1733, %v1735
      %v1737 = vrot.slane %v1723, %v1736
      %v1738 = vcombine.low %v1705, %v1721
      %v1739 = vcombine.high %v1705, %v1721
      %v1741 = vunpack.c.l.s4 1934713408
      %v1742 = vunpack.c.0.s8 %v1741
      %v1743 = vlaneseq
      %v1744 = vshrl.u32 %v1743, 7
      %v1745 = vsub.s32 %v1742, %v1744
      %v1746 = vrot.slane %v1738, %v1745
      %v1748 = vunpack.c.l.s4 1934713408
      %v1749 = vunpack.c.0.s8 %v1748
      %v1750 = vlaneseq
      %v1751 = vshrl.u32 %v1750, 7
      %v1752 = vsub.s32 %v1749, %v1751
      %v1753 = vrot.slane %v1739, %v1752
      %v1754 = vcombine.high %v1730, 0.0
      %v1755 = vcombine.high %v1737, 0.0
      %v1756 = vcombine.high %v1746, 0.0
      %v1757 = vcombine.high %v1753, 0.0
      %v1758 = vcombine.low %v1067, %v1681
      %v1759 = vcombine.high %v1067, %v1681
      %v1761 = vunpack.c.l.s4 1983009808
      %v1762 = vunpack.c.0.s8 %v1761
      %v1763 = vlaneseq
      %v1764 = vshrl.u32 %v1763, 7
      %v1765 = vsub.s32 %v1762, %v1764
      %v1766 = vrot.slane %v1758, %v1765
      %v1768 = vunpack.c.l.s4 1983009808
      %v1769 = vunpack.c.0.s8 %v1768
      %v1770 = vlaneseq
      %v1771 = vshrl.u32 %v1770, 7
      %v1772 = vsub.s32 %v1769, %v1771
      %v1773 = vrot.slane %v1759, %v1772
      %v1774 = vcombine.low %v1675, %v1687
      %v1775 = vcombine.high %v1675, %v1687
      %v1777 = vunpack.c.l.s4 1983009808
      %v1778 = vunpack.c.0.s8 %v1777
      %v1779 = vlaneseq
      %v1780 = vshrl.u32 %v1779, 7
      %v1781 = vsub.s32 %v1778, %v1780
      %v1782 = vrot.slane %v1774, %v1781
      %v1784 = vunpack.c.l.s4 1983009808
      %v1785 = vunpack.c.0.s8 %v1784
      %v1786 = vlaneseq
      %v1787 = vshrl.u32 %v1786, 7
      %v1788 = vsub.s32 %v1785, %v1787
      %v1789 = vrot.slane %v1775, %v1788
      %v1790 = vcombine.low %v1766, %v1782
      %v1791 = vcombine.high %v1766, %v1782
      %v1793 = vunpack.c.l.s4 1934713408
      %v1794 = vunpack.c.0.s8 %v1793
      %v1795 = vlaneseq
      %v1796 = vshrl.u32 %v1795, 7
      %v1797 = vsub.s32 %v1794, %v1796
      %v1798 = vrot.slane %v1790, %v1797
      %v1800 = vunpack.c.l.s4 1934713408
      %v1801 = vunpack.c.0.s8 %v1800
      %v1802 = vlaneseq
      %v1803 = vshrl.u32 %v1802, 7
      %v1804 = vsub.s32 %v1801, %v1803
      %v1805 = vrot.slane %v1791, %v1804
      %v1806 = vcombine.low %v1773, %v1789
      %v1807 = vcombine.high %v1773, %v1789
      %v1809 = vunpack.c.l.s4 1934713408
      %v1810 = vunpack.c.0.s8 %v1809
      %v1811 = vlaneseq
      %v1812 = vshrl.u32 %v1811, 7
      %v1813 = vsub.s32 %v1810, %v1812
      %v1814 = vrot.slane %v1806, %v1813
      %v1816 = vunpack.c.l.s4 1934713408
      %v1817 = vunpack.c.0.s8 %v1816
      %v1818 = vlaneseq
      %v1819 = vshrl.u32 %v1818, 7
      %v1820 = vsub.s32 %v1817, %v1819
      %v1821 = vrot.slane %v1807, %v1820
      %v1822 = vcombine.high %v1798, 0.0
      %v1823 = vcombine.high %v1805, 0.0
      %v1824 = vcombine.high %v1814, 0.0
      %v1825 = vcombine.high %v1821, 0.0
      %v1826 = vcombine.low %v1730, %v1737
      %v1828 = vunpack.c.l.s4 1983009808
      %v1829 = vunpack.c.0.s8 %v1828
      %v1830 = vlaneseq
      %v1831 = vshrl.u32 %v1830, 7
      %v1832 = vsub.s32 %v1829, %v1831
      %v1833 = vrot.slane %v1826, %v1832
      %v1834 = vcombine.low %v1754, %v1755
      %v1836 = vunpack.c.l.s4 1983009808
      %v1837 = vunpack.c.0.s8 %v1836
      %v1838 = vlaneseq
      %v1839 = vshrl.u32 %v1838, 7
      %v1840 = vsub.s32 %v1837, %v1839
      %v1841 = vrot.slane %v1834, %v1840
      %v1842 = vcombine.low %v1746, %v1753
      %v1844 = vunpack.c.l.s4 1983009808
      %v1845 = vunpack.c.0.s8 %v1844
      %v1846 = vlaneseq
      %v1847 = vshrl.u32 %v1846, 7
      %v1848 = vsub.s32 %v1845, %v1847
      %v1849 = vrot.slane %v1842, %v1848
      %v1850 = vcombine.low %v1756, %v1757
      %v1852 = vunpack.c.l.s4 1983009808
      %v1853 = vunpack.c.0.s8 %v1852
      %v1854 = vlaneseq
      %v1855 = vshrl.u32 %v1854, 7
      %v1856 = vsub.s32 %v1853, %v1855
      %v1857 = vrot.slane %v1850, %v1856
      %v1858 = vcombine.low %v1833, %v1841
      %v1859 = vcombine.high %v1833, %v1841
      %v1861 = vunpack.c.l.s4 1934713408
      %v1862 = vunpack.c.0.s8 %v1861
      %v1863 = vlaneseq
      %v1864 = vshrl.u32 %v1863, 7
      %v1865 = vsub.s32 %v1862, %v1864
      %v1866 = vrot.slane %v1858, %v1865
      %v1868 = vunpack.c.l.s4 1934713408
      %v1869 = vunpack.c.0.s8 %v1868
      %v1870 = vlaneseq
      %v1871 = vshrl.u32 %v1870, 7
      %v1872 = vsub.s32 %v1869, %v1871
      %v1873 = vrot.slane %v1859, %v1872
      %v1874 = vcombine.low %v1849, %v1857
      %v1875 = vcombine.high %v1849, %v1857
      %v1877 = vunpack.c.l.s4 1934713408
      %v1878 = vunpack.c.0.s8 %v1877
      %v1879 = vlaneseq
      %v1880 = vshrl.u32 %v1879, 7
      %v1881 = vsub.s32 %v1878, %v1880
      %v1882 = vrot.slane %v1874, %v1881
      %v1884 = vunpack.c.l.s4 1934713408
      %v1885 = vunpack.c.0.s8 %v1884
      %v1886 = vlaneseq
      %v1887 = vshrl.u32 %v1886, 7
      %v1888 = vsub.s32 %v1885, %v1887
      %v1889 = vrot.slane %v1875, %v1888
      %v1890 = vcombine.low %v1866, %v1882
      %v1891 = vcombine.high %v1866, %v1882
      %v1892 = vcombine.low %v1873, %v1889
      %v1893 = vcombine.high %v1873, %v1889
      %v1894 = vcombine.low %v1798, %v1805
      %v1896 = vunpack.c.l.s4 1983009808
      %v1897 = vunpack.c.0.s8 %v1896
      %v1898 = vlaneseq
      %v1899 = vshrl.u32 %v1898, 7
      %v1900 = vsub.s32 %v1897, %v1899
      %v1901 = vrot.slane %v1894, %v1900
      %v1902 = vcombine.low %v1822, %v1823
      %v1904 = vunpack.c.l.s4 1983009808
      %v1905 = vunpack.c.0.s8 %v1904
      %v1906 = vlaneseq
      %v1907 = vshrl.u32 %v1906, 7
      %v1908 = vsub.s32 %v1905, %v1907
      %v1909 = vrot.slane %v1902, %v1908
      %v1910 = vcombine.low %v1814, %v1821
      %v1912 = vunpack.c.l.s4 1983009808
      %v1913 = vunpack.c.0.s8 %v1912
      %v1914 = vlaneseq
      %v1915 = vshrl.u32 %v1914, 7
      %v1916 = vsub.s32 %v1913, %v1915
      %v1917 = vrot.slane %v1910, %v1916
      %v1918 = vcombine.low %v1824, %v1825
      %v1920 = vunpack.c.l.s4 1983009808
      %v1921 = vunpack.c.0.s8 %v1920
      %v1922 = vlaneseq
      %v1923 = vshrl.u32 %v1922, 7
      %v1924 = vsub.s32 %v1921, %v1923
      %v1925 = vrot.slane %v1918, %v1924
      %v1926 = vcombine.low %v1901, %v1909
      %v1927 = vcombine.high %v1901, %v1909
      %v1929 = vunpack.c.l.s4 1934713408
      %v1930 = vunpack.c.0.s8 %v1929
      %v1931 = vlaneseq
      %v1932 = vshrl.u32 %v1931, 7
      %v1933 = vsub.s32 %v1930, %v1932
      %v1934 = vrot.slane %v1926, %v1933
      %v1936 = vunpack.c.l.s4 1934713408
      %v1937 = vunpack.c.0.s8 %v1936
      %v1938 = vlaneseq
      %v1939 = vshrl.u32 %v1938, 7
      %v1940 = vsub.s32 %v1937, %v1939
      %v1941 = vrot.slane %v1927, %v1940
      %v1942 = vcombine.low %v1917, %v1925
      %v1943 = vcombine.high %v1917, %v1925
      %v1945 = vunpack.c.l.s4 1934713408
      %v1946 = vunpack.c.0.s8 %v1945
      %v1947 = vlaneseq
      %v1948 = vshrl.u32 %v1947, 7
      %v1949 = vsub.s32 %v1946, %v1948
      %v1950 = vrot.slane %v1942, %v1949
      %v1952 = vunpack.c.l.s4 1934713408
      %v1953 = vunpack.c.0.s8 %v1952
      %v1954 = vlaneseq
      %v1955 = vshrl.u32 %v1954, 7
      %v1956 = vsub.s32 %v1953, %v1955
      %v1957 = vrot.slane %v1943, %v1956
      %v1958 = vcombine.low %v1934, %v1950
      %v1959 = vcombine.high %v1934, %v1950
      %v1960 = vcombine.low %v1941, %v1957
      %v1961 = vcombine.high %v1941, %v1957
      %v1962 = vpack.c.bf16 %v1890, %v1890
      %v1963 = vpack.c.bf16 %v1891, %v1891
      %v1964 = vpack.c.bf16 %v1892, %v1892
      %v1965 = vpack.c.bf16 %v1893, %v1893
      %v1966 = vpack.c.bf16 %v1958, %v1958
      %v1967 = vpack.c.bf16 %v1959, %v1959
      %v1968 = vpack.c.bf16 %v1960, %v1960
      %v1969 = vpack.c.bf16 %v1961, %v1961
      %vm1970 = vcmask 261120
      %v1972 = vsel %vm1970, %v1362, 0
      %v1975 = vsel %vm1970, %v1662, 0
      %1977 = vmatprep.subr.bf16.mxu0 0
      %1978 = vmatpush1.bf16.xpose.msra.mxu0 %v1975
      %1979 = vmatprep.subr.bf16.mxu0 0
      %1980 = vmatpush1.bf16.xpose.msra.mxu0 0
      %1981 = vmatprep.subr.bf16.mxu0 0
      %1982 = vmatpush1.bf16.xpose.msra.mxu0 0
      %1983 = vmatprep.subr.bf16.mxu0 0
      %1984 = vmatpush1.bf16.xpose.msra.mxu0 0
      %1985 = vmatprep.subr.bf16.mxu0 0
      %1986 = vmatpush1.bf16.xpose.msra.mxu0 0
      %1987 = vmatprep.subr.bf16.mxu0 0
      %1988 = vmatpush1.bf16.xpose.msra.mxu0 0
      %1989 = vmatprep.subr.bf16.mxu0 0
      %1990 = vmatpush1.bf16.xpose.msra.mxu0 0
      %1991 = vmatprep.subr.bf16.mxu0 0
      %1992 = vmatpush1.bf16.xpose.msra.mxu0 0
      %1993 = vmatprep.subr.bf16.mxu0 0
      %1994 = vmatpush1.bf16.xpose.msra.mxu0 0
      %1995 = vmatprep.subr.bf16.mxu0 0
      %1996 = vmatpush1.bf16.xpose.msra.mxu0 0
      %1997 = vmatprep.subr.bf16.mxu0 0
      %1998 = vmatpush1.bf16.xpose.msra.mxu0 0
      %1999 = vmatprep.subr.bf16.mxu0 0
      %2000 = vmatpush1.bf16.xpose.msra.mxu0 0
      %2001 = vmatprep.subr.bf16.mxu0 0
      %2002 = vmatpush1.bf16.xpose.msra.mxu0 0
      %2003 = vmatprep.subr.bf16.mxu0 0
      %2004 = vmatpush1.bf16.xpose.msra.mxu0 0
      %2005 = vmatprep.subr.bf16.mxu0 0
      %2006 = vmatpush1.bf16.xpose.msra.mxu0 0
      %2007 = vmatprep.subr.bf16.mxu0 0
      %2008 = vmatpush1.bf16.xpose.msra.mxu0 0
      %2009 = vmatprep.mubr.bf16.mxu0 0
      %2010 = vmatmul.mubr.bf16.gmra.mrb[0].mxu0 %v1972
      %v2011 = vpop.f32.mrb[0].mxu0
      %v2012 = vadd.f32 0.0, %v2011
      %v2013 = vpop.f32.mrb[0].mxu0
      %v2014 = vpop.f32.mrb[0].mxu0
      %v2015 = vpop.f32.mrb[0].mxu0
      %2016 = vdwg.mxu0
      %v2018 = vsel %vm1970, %v1363, 0
      %v2021 = vsel %vm1970, %v1663, 0
      %2023 = vmatprep.subr.bf16.mxu0 0
      %2024 = vmatpush1.bf16.xpose.msra.mxu0 %v2021
      %2025 = vmatprep.subr.bf16.mxu0 0
      %2026 = vmatpush1.bf16.xpose.msra.mxu0 0
      %2027 = vmatprep.subr.bf16.mxu0 0
      %2028 = vmatpush1.bf16.xpose.msra.mxu0 0
      %2029 = vmatprep.subr.bf16.mxu0 0
      %2030 = vmatpush1.bf16.xpose.msra.mxu0 0
      %2031 = vmatprep.subr.bf16.mxu0 0
      %2032 = vmatpush1.bf16.xpose.msra.mxu0 0
      %2033 = vmatprep.subr.bf16.mxu0 0
      %2034 = vmatpush1.bf16.xpose.msra.mxu0 0
      %2035 = vmatprep.subr.bf16.mxu0 0
      %2036 = vmatpush1.bf16.xpose.msra.mxu0 0
      %2037 = vmatprep.subr.bf16.mxu0 0
      %2038 = vmatpush1.bf16.xpose.msra.mxu0 0
      %2039 = vmatprep.subr.bf16.mxu0 0
      %2040 = vmatpush1.bf16.xpose.msra.mxu0 0
      %2041 = vmatprep.subr.bf16.mxu0 0
      %2042 = vmatpush1.bf16.xpose.msra.mxu0 0
      %2043 = vmatprep.subr.bf16.mxu0 0
      %2044 = vmatpush1.bf16.xpose.msra.mxu0 0
      %2045 = vmatprep.subr.bf16.mxu0 0
      %2046 = vmatpush1.bf16.xpose.msra.mxu0 0
      %2047 = vmatprep.subr.bf16.mxu0 0
      %2048 = vmatpush1.bf16.xpose.msra.mxu0 0
      %2049 = vmatprep.subr.bf16.mxu0 0
      %2050 = vmatpush1.bf16.xpose.msra.mxu0 0
      %2051 = vmatprep.subr.bf16.mxu0 0
      %2052 = vmatpush1.bf16.xpose.msra.mxu0 0
      %2053 = vmatprep.subr.bf16.mxu0 0
      %2054 = vmatpush1.bf16.xpose.msra.mxu0 0
      %2055 = vmatprep.mubr.bf16.mxu0 0
      %2056 = vmatmul.mubr.bf16.gmra.mrb[0].mxu0 %v2018
      %v2057 = vpop.f32.mrb[0].mxu0
      %v2058 = vadd.f32 0.0, %v2057
      %v2059 = vpop.f32.mrb[0].mxu0
      %v2060 = vpop.f32.mrb[0].mxu0
      %v2061 = vpop.f32.mrb[0].mxu0
      %2062 = vdwg.mxu0
      %v2064 = vsel %vm1970, %v1364, 0
      %v2067 = vsel %vm1970, %v1664, 0
      %2069 = vmatprep.subr.bf16.mxu0 0
      %2070 = vmatpush1.bf16.xpose.msra.mxu0 %v2067
      %2071 = vmatprep.subr.bf16.mxu0 0
      %2072 = vmatpush1.bf16.xpose.msra.mxu0 0
      %2073 = vmatprep.subr.bf16.mxu0 0
      %2074 = vmatpush1.bf16.xpose.msra.mxu0 0
      %2075 = vmatprep.subr.bf16.mxu0 0
      %2076 = vmatpush1.bf16.xpose.msra.mxu0 0
      %2077 = vmatprep.subr.bf16.mxu0 0
      %2078 = vmatpush1.bf16.xpose.msra.mxu0 0
      %2079 = vmatprep.subr.bf16.mxu0 0
      %2080 = vmatpush1.bf16.xpose.msra.mxu0 0
      %2081 = vmatprep.subr.bf16.mxu0 0
      %2082 = vmatpush1.bf16.xpose.msra.mxu0 0
      %2083 = vmatprep.subr.bf16.mxu0 0
      %2084 = vmatpush1.bf16.xpose.msra.mxu0 0
      %2085 = vmatprep.subr.bf16.mxu0 0
      %2086 = vmatpush1.bf16.xpose.msra.mxu0 0
      %2087 = vmatprep.subr.bf16.mxu0 0
      %2088 = vmatpush1.bf16.xpose.msra.mxu0 0
      %2089 = vmatprep.subr.bf16.mxu0 0
      %2090 = vmatpush1.bf16.xpose.msra.mxu0 0
      %2091 = vmatprep.subr.bf16.mxu0 0
      %2092 = vmatpush1.bf16.xpose.msra.mxu0 0
      %2093 = vmatprep.subr.bf16.mxu0 0
      %2094 = vmatpush1.bf16.xpose.msra.mxu0 0
      %2095 = vmatprep.subr.bf16.mxu0 0
      %2096 = vmatpush1.bf16.xpose.msra.mxu0 0
      %2097 = vmatprep.subr.bf16.mxu0 0
      %2098 = vmatpush1.bf16.xpose.msra.mxu0 0
      %2099 = vmatprep.subr.bf16.mxu0 0
      %2100 = vmatpush1.bf16.xpose.msra.mxu0 0
      %2101 = vmatprep.mubr.bf16.mxu0 0
      %2102 = vmatmul.mubr.bf16.gmra.mrb[0].mxu0 %v2064
      %v2103 = vpop.f32.mrb[0].mxu0
      %v2104 = vadd.f32 0.0, %v2103
      %v2105 = vpop.f32.mrb[0].mxu0
      %v2106 = vpop.f32.mrb[0].mxu0
      %v2107 = vpop.f32.mrb[0].mxu0
      %2108 = vdwg.mxu0
      %v2110 = vsel %vm1970, %v1365, 0
      %v2113 = vsel %vm1970, %v1665, 0
      %2115 = vmatprep.subr.bf16.mxu0 0
      %2116 = vmatpush1.bf16.xpose.msra.mxu0 %v2113
      %2117 = vmatprep.subr.bf16.mxu0 0
      %2118 = vmatpush1.bf16.xpose.msra.mxu0 0
      %2119 = vmatprep.subr.bf16.mxu0 0
      %2120 = vmatpush1.bf16.xpose.msra.mxu0 0
      %2121 = vmatprep.subr.bf16.mxu0 0
      %2122 = vmatpush1.bf16.xpose.msra.mxu0 0
      %2123 = vmatprep.subr.bf16.mxu0 0
      %2124 = vmatpush1.bf16.xpose.msra.mxu0 0
      %2125 = vmatprep.subr.bf16.mxu0 0
      %2126 = vmatpush1.bf16.xpose.msra.mxu0 0
      %2127 = vmatprep.subr.bf16.mxu0 0
      %2128 = vmatpush1.bf16.xpose.msra.mxu0 0
      %2129 = vmatprep.subr.bf16.mxu0 0
      %2130 = vmatpush1.bf16.xpose.msra.mxu0 0
      %2131 = vmatprep.subr.bf16.mxu0 0
      %2132 = vmatpush1.bf16.xpose.msra.mxu0 0
      %2133 = vmatprep.subr.bf16.mxu0 0
      %2134 = vmatpush1.bf16.xpose.msra.mxu0 0
      %2135 = vmatprep.subr.bf16.mxu0 0
      %2136 = vmatpush1.bf16.xpose.msra.mxu0 0
      %2137 = vmatprep.subr.bf16.mxu0 0
      %2138 = vmatpush1.bf16.xpose.msra.mxu0 0
      %2139 = vmatprep.subr.bf16.mxu0 0
      %2140 = vmatpush1.bf16.xpose.msra.mxu0 0
      %2141 = vmatprep.subr.bf16.mxu0 0
      %2142 = vmatpush1.bf16.xpose.msra.mxu0 0
      %2143 = vmatprep.subr.bf16.mxu0 0
      %2144 = vmatpush1.bf16.xpose.msra.mxu0 0
      %2145 = vmatprep.subr.bf16.mxu0 0
      %2146 = vmatpush1.bf16.xpose.msra.mxu0 0
      %2147 = vmatprep.mubr.bf16.mxu0 0
      %2148 = vmatmul.mubr.bf16.gmra.mrb[0].mxu0 %v2110
      %v2149 = vpop.f32.mrb[0].mxu0
      %v2150 = vadd.f32 0.0, %v2149
      %v2151 = vpop.f32.mrb[0].mxu0
      %v2152 = vpop.f32.mrb[0].mxu0
      %v2153 = vpop.f32.mrb[0].mxu0
      %2154 = vdwg.mxu0
      %v2156 = vsel %vm1970, %v1366, 0
      %v2159 = vsel %vm1970, %v1666, 0
      %2161 = vmatprep.subr.bf16.mxu0 0
      %2162 = vmatpush1.bf16.xpose.msra.mxu0 %v2159
      %2163 = vmatprep.subr.bf16.mxu0 0
      %2164 = vmatpush1.bf16.xpose.msra.mxu0 0
      %2165 = vmatprep.subr.bf16.mxu0 0
      %2166 = vmatpush1.bf16.xpose.msra.mxu0 0
      %2167 = vmatprep.subr.bf16.mxu0 0
      %2168 = vmatpush1.bf16.xpose.msra.mxu0 0
      %2169 = vmatprep.subr.bf16.mxu0 0
      %2170 = vmatpush1.bf16.xpose.msra.mxu0 0
      %2171 = vmatprep.subr.bf16.mxu0 0
      %2172 = vmatpush1.bf16.xpose.msra.mxu0 0
      %2173 = vmatprep.subr.bf16.mxu0 0
      %2174 = vmatpush1.bf16.xpose.msra.mxu0 0
      %2175 = vmatprep.subr.bf16.mxu0 0
      %2176 = vmatpush1.bf16.xpose.msra.mxu0 0
      %2177 = vmatprep.subr.bf16.mxu0 0
      %2178 = vmatpush1.bf16.xpose.msra.mxu0 0
      %2179 = vmatprep.subr.bf16.mxu0 0
      %2180 = vmatpush1.bf16.xpose.msra.mxu0 0
      %2181 = vmatprep.subr.bf16.mxu0 0
      %2182 = vmatpush1.bf16.xpose.msra.mxu0 0
      %2183 = vmatprep.subr.bf16.mxu0 0
      %2184 = vmatpush1.bf16.xpose.msra.mxu0 0
      %2185 = vmatprep.subr.bf16.mxu0 0
      %2186 = vmatpush1.bf16.xpose.msra.mxu0 0
      %2187 = vmatprep.subr.bf16.mxu0 0
      %2188 = vmatpush1.bf16.xpose.msra.mxu0 0
      %2189 = vmatprep.subr.bf16.mxu0 0
      %2190 = vmatpush1.bf16.xpose.msra.mxu0 0
      %2191 = vmatprep.subr.bf16.mxu0 0
      %2192 = vmatpush1.bf16.xpose.msra.mxu0 0
      %2193 = vmatprep.mubr.bf16.mxu0 0
      %2194 = vmatmul.mubr.bf16.gmra.mrb[0].mxu0 %v2156
      %v2195 = vpop.f32.mrb[0].mxu0
      %v2196 = vadd.f32 0.0, %v2195
      %v2197 = vpop.f32.mrb[0].mxu0
      %v2198 = vpop.f32.mrb[0].mxu0
      %v2199 = vpop.f32.mrb[0].mxu0
      %2200 = vdwg.mxu0
      %v2202 = vsel %vm1970, %v1367, 0
      %v2205 = vsel %vm1970, %v1667, 0
      %2207 = vmatprep.subr.bf16.mxu0 0
      %2208 = vmatpush1.bf16.xpose.msra.mxu0 %v2205
      %2209 = vmatprep.subr.bf16.mxu0 0
      %2210 = vmatpush1.bf16.xpose.msra.mxu0 0
      %2211 = vmatprep.subr.bf16.mxu0 0
      %2212 = vmatpush1.bf16.xpose.msra.mxu0 0
      %2213 = vmatprep.subr.bf16.mxu0 0
      %2214 = vmatpush1.bf16.xpose.msra.mxu0 0
      %2215 = vmatprep.subr.bf16.mxu0 0
      %2216 = vmatpush1.bf16.xpose.msra.mxu0 0
      %2217 = vmatprep.subr.bf16.mxu0 0
      %2218 = vmatpush1.bf16.xpose.msra.mxu0 0
      %2219 = vmatprep.subr.bf16.mxu0 0
      %2220 = vmatpush1.bf16.xpose.msra.mxu0 0
      %2221 = vmatprep.subr.bf16.mxu0 0
      %2222 = vmatpush1.bf16.xpose.msra.mxu0 0
      %2223 = vmatprep.subr.bf16.mxu0 0
      %2224 = vmatpush1.bf16.xpose.msra.mxu0 0
      %2225 = vmatprep.subr.bf16.mxu0 0
      %2226 = vmatpush1.bf16.xpose.msra.mxu0 0
      %2227 = vmatprep.subr.bf16.mxu0 0
      %2228 = vmatpush1.bf16.xpose.msra.mxu0 0
      %2229 = vmatprep.subr.bf16.mxu0 0
      %2230 = vmatpush1.bf16.xpose.msra.mxu0 0
      %2231 = vmatprep.subr.bf16.mxu0 0
      %2232 = vmatpush1.bf16.xpose.msra.mxu0 0
      %2233 = vmatprep.subr.bf16.mxu0 0
      %2234 = vmatpush1.bf16.xpose.msra.mxu0 0
      %2235 = vmatprep.subr.bf16.mxu0 0
      %2236 = vmatpush1.bf16.xpose.msra.mxu0 0
      %2237 = vmatprep.subr.bf16.mxu0 0
      %2238 = vmatpush1.bf16.xpose.msra.mxu0 0
      %2239 = vmatprep.mubr.bf16.mxu0 0
      %2240 = vmatmul.mubr.bf16.gmra.mrb[0].mxu0 %v2202
      %v2241 = vpop.f32.mrb[0].mxu0
      %v2242 = vadd.f32 0.0, %v2241
      %v2243 = vpop.f32.mrb[0].mxu0
      %v2244 = vpop.f32.mrb[0].mxu0
      %v2245 = vpop.f32.mrb[0].mxu0
      %2246 = vdwg.mxu0
      %v2248 = vsel %vm1970, %v1368, 0
      %v2251 = vsel %vm1970, %v1668, 0
      %2253 = vmatprep.subr.bf16.mxu0 0
      %2254 = vmatpush1.bf16.xpose.msra.mxu0 %v2251
      %2255 = vmatprep.subr.bf16.mxu0 0
      %2256 = vmatpush1.bf16.xpose.msra.mxu0 0
      %2257 = vmatprep.subr.bf16.mxu0 0
      %2258 = vmatpush1.bf16.xpose.msra.mxu0 0
      %2259 = vmatprep.subr.bf16.mxu0 0
      %2260 = vmatpush1.bf16.xpose.msra.mxu0 0
      %2261 = vmatprep.subr.bf16.mxu0 0
      %2262 = vmatpush1.bf16.xpose.msra.mxu0 0
      %2263 = vmatprep.subr.bf16.mxu0 0
      %2264 = vmatpush1.bf16.xpose.msra.mxu0 0
      %2265 = vmatprep.subr.bf16.mxu0 0
      %2266 = vmatpush1.bf16.xpose.msra.mxu0 0
      %2267 = vmatprep.subr.bf16.mxu0 0
      %2268 = vmatpush1.bf16.xpose.msra.mxu0 0
      %2269 = vmatprep.subr.bf16.mxu0 0
      %2270 = vmatpush1.bf16.xpose.msra.mxu0 0
      %2271 = vmatprep.subr.bf16.mxu0 0
      %2272 = vmatpush1.bf16.xpose.msra.mxu0 0
      %2273 = vmatprep.subr.bf16.mxu0 0
      %2274 = vmatpush1.bf16.xpose.msra.mxu0 0
      %2275 = vmatprep.subr.bf16.mxu0 0
      %2276 = vmatpush1.bf16.xpose.msra.mxu0 0
      %2277 = vmatprep.subr.bf16.mxu0 0
      %2278 = vmatpush1.bf16.xpose.msra.mxu0 0
      %2279 = vmatprep.subr.bf16.mxu0 0
      %2280 = vmatpush1.bf16.xpose.msra.mxu0 0
      %2281 = vmatprep.subr.bf16.mxu0 0
      %2282 = vmatpush1.bf16.xpose.msra.mxu0 0
      %2283 = vmatprep.subr.bf16.mxu0 0
      %2284 = vmatpush1.bf16.xpose.msra.mxu0 0
      %2285 = vmatprep.mubr.bf16.mxu0 0
      %2286 = vmatmul.mubr.bf16.gmra.mrb[0].mxu0 %v2248
      %v2287 = vpop.f32.mrb[0].mxu0
      %v2288 = vadd.f32 0.0, %v2287
      %v2289 = vpop.f32.mrb[0].mxu0
      %v2290 = vpop.f32.mrb[0].mxu0
      %v2291 = vpop.f32.mrb[0].mxu0
      %2292 = vdwg.mxu0
      %v2294 = vsel %vm1970, %v1369, 0
      %v2297 = vsel %vm1970, %v1669, 0
      %2299 = vmatprep.subr.bf16.mxu0 0
      %2300 = vmatpush1.bf16.xpose.msra.mxu0 %v2297
      %2301 = vmatprep.subr.bf16.mxu0 0
      %2302 = vmatpush1.bf16.xpose.msra.mxu0 0
      %2303 = vmatprep.subr.bf16.mxu0 0
      %2304 = vmatpush1.bf16.xpose.msra.mxu0 0
      %2305 = vmatprep.subr.bf16.mxu0 0
      %2306 = vmatpush1.bf16.xpose.msra.mxu0 0
      %2307 = vmatprep.subr.bf16.mxu0 0
      %2308 = vmatpush1.bf16.xpose.msra.mxu0 0
      %2309 = vmatprep.subr.bf16.mxu0 0
      %2310 = vmatpush1.bf16.xpose.msra.mxu0 0
      %2311 = vmatprep.subr.bf16.mxu0 0
      %2312 = vmatpush1.bf16.xpose.msra.mxu0 0
      %2313 = vmatprep.subr.bf16.mxu0 0
      %2314 = vmatpush1.bf16.xpose.msra.mxu0 0
      %2315 = vmatprep.subr.bf16.mxu0 0
      %2316 = vmatpush1.bf16.xpose.msra.mxu0 0
      %2317 = vmatprep.subr.bf16.mxu0 0
      %2318 = vmatpush1.bf16.xpose.msra.mxu0 0
      %2319 = vmatprep.subr.bf16.mxu0 0
      %2320 = vmatpush1.bf16.xpose.msra.mxu0 0
      %2321 = vmatprep.subr.bf16.mxu0 0
      %2322 = vmatpush1.bf16.xpose.msra.mxu0 0
      %2323 = vmatprep.subr.bf16.mxu0 0
      %2324 = vmatpush1.bf16.xpose.msra.mxu0 0
      %2325 = vmatprep.subr.bf16.mxu0 0
      %2326 = vmatpush1.bf16.xpose.msra.mxu0 0
      %2327 = vmatprep.subr.bf16.mxu0 0
      %2328 = vmatpush1.bf16.xpose.msra.mxu0 0
      %2329 = vmatprep.subr.bf16.mxu0 0
      %2330 = vmatpush1.bf16.xpose.msra.mxu0 0
      %2331 = vmatprep.mubr.bf16.mxu0 0
      %2332 = vmatmul.mubr.bf16.gmra.mrb[0].mxu0 %v2294
      %v2333 = vpop.f32.mrb[0].mxu0
      %v2334 = vadd.f32 0.0, %v2333
      %v2335 = vpop.f32.mrb[0].mxu0
      %v2336 = vpop.f32.mrb[0].mxu0
      %v2337 = vpop.f32.mrb[0].mxu0
      %2338 = vdwg.mxu0
      %v2341 = vlaneseq
      %v2342 = vshrl.u32 %v2341, 7
      %v2343 = vsub.s32 0, %v2342
      %v2344 = vrot.slane %v765, %v2343
      %v2345 = vlaneseq
      %v2346 = vshrl.u32 %v2345, 7
      %v2347 = vsub.s32 0, %v2346
      %v2348 = vrot.slane %v766, %v2347
      %v2351 = vadd.f32 %v2012, %v2344
      %v2352 = vadd.f32 %v2058, %v2344
      %v2353 = vadd.f32 %v2104, %v2344
      %v2354 = vadd.f32 %v2150, %v2344
      %v2355 = vadd.f32 %v2196, %v2348
      %v2356 = vadd.f32 %v2242, %v2348
      %v2357 = vadd.f32 %v2288, %v2348
      %v2358 = vadd.f32 %v2334, %v2348
      %vm2359 = vcmask 64512
      %v2360 = vsel %vm2359, %v2351, -inf
      %2361 = vmax.xlane.f32.xlu0 %v2360
      %v2362 = vpop.xlane.xlu0 %2361
      %v2363 = vsel %vm2359, %v2352, -inf
      %2364 = vmax.xlane.f32.xlu0 %v2363
      %v2365 = vpop.xlane.xlu0 %2364
      %v2366 = vsel %vm2359, %v2353, -inf
      %2367 = vmax.xlane.f32.xlu0 %v2366
      %v2368 = vpop.xlane.xlu0 %2367
      %v2369 = vsel %vm2359, %v2354, -inf
      %2370 = vmax.xlane.f32.xlu0 %v2369
      %v2371 = vpop.xlane.xlu0 %2370
      %v2372 = vsel %vm2359, %v2355, -inf
      %2373 = vmax.xlane.f32.xlu0 %v2372
      %v2374 = vpop.xlane.xlu0 %2373
      %v2375 = vsel %vm2359, %v2356, -inf
      %2376 = vmax.xlane.f32.xlu0 %v2375
      %v2377 = vpop.xlane.xlu0 %2376
      %v2378 = vsel %vm2359, %v2357, -inf
      %2379 = vmax.xlane.f32.xlu0 %v2378
      %v2380 = vpop.xlane.xlu0 %2379
      %v2381 = vsel %vm2359, %v2358, -inf
      %2382 = vmax.xlane.f32.xlu0 %v2381
      %v2383 = vpop.xlane.xlu0 %2382
      %v2384 = vsub.f32 %v2351, %v2362
      %v2385 = vsub.f32 %v2352, %v2365
      %v2386 = vsub.f32 %v2353, %v2368
      %v2387 = vsub.f32 %v2354, %v2371
      %v2388 = vsub.f32 %v2355, %v2374
      %v2389 = vsub.f32 %v2356, %v2377
      %v2390 = vsub.f32 %v2357, %v2380
      %v2391 = vsub.f32 %v2358, %v2383
      %v2392 = vmul.f32 %v2384, 1.442695
      %v2393 = vpow.pop %v2392
      %v2394 = vmul.f32 %v2385, 1.442695
      %v2395 = vpow.pop %v2394
      %v2396 = vmul.f32 %v2386, 1.442695
      %v2397 = vpow.pop %v2396
      %v2398 = vmul.f32 %v2387, 1.442695
      %v2399 = vpow.pop %v2398
      %v2400 = vmul.f32 %v2388, 1.442695
      %v2401 = vpow.pop %v2400
      %v2402 = vmul.f32 %v2389, 1.442695
      %v2403 = vpow.pop %v2402
      %v2404 = vmul.f32 %v2390, 1.442695
      %v2405 = vpow.pop %v2404
      %v2406 = vmul.f32 %v2391, 1.442695
      %v2407 = vpow.pop %v2406
      %v2408 = vsel %vm2359, %v2393, 0.0
      %2409 = vadd.xlane.f32.xlu0 %v2408
      %v2410 = vpop.xlane.xlu0 %2409
      %v2411 = vsel %vm2359, %v2395, 0.0
      %2412 = vadd.xlane.f32.xlu0 %v2411
      %v2413 = vpop.xlane.xlu0 %2412
      %v2414 = vsel %vm2359, %v2397, 0.0
      %2415 = vadd.xlane.f32.xlu0 %v2414
      %v2416 = vpop.xlane.xlu0 %2415
      %v2417 = vsel %vm2359, %v2399, 0.0
      %2418 = vadd.xlane.f32.xlu0 %v2417
      %v2419 = vpop.xlane.xlu0 %2418
      %v2420 = vsel %vm2359, %v2401, 0.0
      %2421 = vadd.xlane.f32.xlu0 %v2420
      %v2422 = vpop.xlane.xlu0 %2421
      %v2423 = vsel %vm2359, %v2403, 0.0
      %2424 = vadd.xlane.f32.xlu0 %v2423
      %v2425 = vpop.xlane.xlu0 %2424
      %v2426 = vsel %vm2359, %v2405, 0.0
      %2427 = vadd.xlane.f32.xlu0 %v2426
      %v2428 = vpop.xlane.xlu0 %2427
      %v2429 = vsel %vm2359, %v2407, 0.0
      %2430 = vadd.xlane.f32.xlu0 %v2429
      %v2431 = vpop.xlane.xlu0 %2430
      %v2432 = vrcp.pop %v2410
      %v2433 = vmul.f32 %v2393, %v2432
      %v2434 = vrcp.pop %v2413
      %v2435 = vmul.f32 %v2395, %v2434
      %v2436 = vrcp.pop %v2416
      %v2437 = vmul.f32 %v2397, %v2436
      %v2438 = vrcp.pop %v2419
      %v2439 = vmul.f32 %v2399, %v2438
      %v2440 = vrcp.pop %v2422
      %v2441 = vmul.f32 %v2401, %v2440
      %v2442 = vrcp.pop %v2425
      %v2443 = vmul.f32 %v2403, %v2442
      %v2444 = vrcp.pop %v2428
      %v2445 = vmul.f32 %v2405, %v2444
      %v2446 = vrcp.pop %v2431
      %v2447 = vmul.f32 %v2407, %v2446
      %v2448 = vpack.c.bf16 %v2433, %v2433
      %v2449 = vpack.c.bf16 %v2435, %v2435
      %v2450 = vpack.c.bf16 %v2437, %v2437
      %v2451 = vpack.c.bf16 %v2439, %v2439
      %v2452 = vpack.c.bf16 %v2441, %v2441
      %v2453 = vpack.c.bf16 %v2443, %v2443
      %v2454 = vpack.c.bf16 %v2445, %v2445
      %v2455 = vpack.c.bf16 %v2447, %v2447
      %v2457 = vsel %vm2359, %v2448, 0
      %vm2459 = vcmask 1043456
      %v2461 = vsel %vm2459, %v1962, 0
      %2463 = vmatprep.subr.bf16.mxu0 0
      %2464 = vmatpush1.bf16.msra.mxu0 %v2461
      %2465 = vmatprep.subr.bf16.mxu0 0
      %2466 = vmatpush1.bf16.msra.mxu0 0
      %2467 = vmatprep.subr.bf16.mxu0 0
      %2468 = vmatpush1.bf16.msra.mxu0 0
      %2469 = vmatprep.subr.bf16.mxu0 0
      %2470 = vmatpush1.bf16.msra.mxu0 0
      %2471 = vmatprep.subr.bf16.mxu0 0
      %2472 = vmatpush1.bf16.msra.mxu0 0
      %2473 = vmatprep.subr.bf16.mxu0 0
      %2474 = vmatpush1.bf16.msra.mxu0 0
      %2475 = vmatprep.subr.bf16.mxu0 0
      %2476 = vmatpush1.bf16.msra.mxu0 0
      %2477 = vmatprep.subr.bf16.mxu0 0
      %2478 = vmatpush1.bf16.msra.mxu0 0
      %2479 = vmatprep.subr.bf16.mxu0 0
      %2480 = vmatpush1.bf16.msra.mxu0 0
      %2481 = vmatprep.subr.bf16.mxu0 0
      %2482 = vmatpush1.bf16.msra.mxu0 0
      %2483 = vmatprep.subr.bf16.mxu0 0
      %2484 = vmatpush1.bf16.msra.mxu0 0
      %2485 = vmatprep.subr.bf16.mxu0 0
      %2486 = vmatpush1.bf16.msra.mxu0 0
      %2487 = vmatprep.subr.bf16.mxu0 0
      %2488 = vmatpush1.bf16.msra.mxu0 0
      %2489 = vmatprep.subr.bf16.mxu0 0
      %2490 = vmatpush1.bf16.msra.mxu0 0
      %2491 = vmatprep.subr.bf16.mxu0 0
      %2492 = vmatpush1.bf16.msra.mxu0 0
      %2493 = vmatprep.subr.bf16.mxu0 0
      %2494 = vmatpush1.bf16.msra.mxu0 0
      %2495 = vmatprep.mubr.bf16.mxu0 0
      %2496 = vmatmul.mubr.bf16.gmra.mrb[0].mxu0 %v2457
      %v2497 = vpop.f32.mrb[0].mxu0
      %v2498 = vadd.f32 0.0, %v2497
      %v2499 = vpop.f32.mrb[0].mxu0
      %v2500 = vpop.f32.mrb[0].mxu0
      %v2501 = vpop.f32.mrb[0].mxu0
      %2502 = vdwg.mxu0
      %v2504 = vsel %vm2359, %v2449, 0
      %v2507 = vsel %vm2459, %v1963, 0
      %2509 = vmatprep.subr.bf16.mxu0 0
      %2510 = vmatpush1.bf16.msra.mxu0 %v2507
      %2511 = vmatprep.subr.bf16.mxu0 0
      %2512 = vmatpush1.bf16.msra.mxu0 0
      %2513 = vmatprep.subr.bf16.mxu0 0
      %2514 = vmatpush1.bf16.msra.mxu0 0
      %2515 = vmatprep.subr.bf16.mxu0 0
      %2516 = vmatpush1.bf16.msra.mxu0 0
      %2517 = vmatprep.subr.bf16.mxu0 0
      %2518 = vmatpush1.bf16.msra.mxu0 0
      %2519 = vmatprep.subr.bf16.mxu0 0
      %2520 = vmatpush1.bf16.msra.mxu0 0
      %2521 = vmatprep.subr.bf16.mxu0 0
      %2522 = vmatpush1.bf16.msra.mxu0 0
      %2523 = vmatprep.subr.bf16.mxu0 0
      %2524 = vmatpush1.bf16.msra.mxu0 0
      %2525 = vmatprep.subr.bf16.mxu0 0
      %2526 = vmatpush1.bf16.msra.mxu0 0
      %2527 = vmatprep.subr.bf16.mxu0 0
      %2528 = vmatpush1.bf16.msra.mxu0 0
      %2529 = vmatprep.subr.bf16.mxu0 0
      %2530 = vmatpush1.bf16.msra.mxu0 0
      %2531 = vmatprep.subr.bf16.mxu0 0
      %2532 = vmatpush1.bf16.msra.mxu0 0
      %2533 = vmatprep.subr.bf16.mxu0 0
      %2534 = vmatpush1.bf16.msra.mxu0 0
      %2535 = vmatprep.subr.bf16.mxu0 0
      %2536 = vmatpush1.bf16.msra.mxu0 0
      %2537 = vmatprep.subr.bf16.mxu0 0
      %2538 = vmatpush1.bf16.msra.mxu0 0
      %2539 = vmatprep.subr.bf16.mxu0 0
      %2540 = vmatpush1.bf16.msra.mxu0 0
      %2541 = vmatprep.mubr.bf16.mxu0 0
      %2542 = vmatmul.mubr.bf16.gmra.mrb[0].mxu0 %v2504
      %v2543 = vpop.f32.mrb[0].mxu0
      %v2544 = vadd.f32 0.0, %v2543
      %v2545 = vpop.f32.mrb[0].mxu0
      %v2546 = vpop.f32.mrb[0].mxu0
      %v2547 = vpop.f32.mrb[0].mxu0
      %2548 = vdwg.mxu0
      %v2550 = vsel %vm2359, %v2450, 0
      %v2553 = vsel %vm2459, %v1964, 0
      %2555 = vmatprep.subr.bf16.mxu0 0
      %2556 = vmatpush1.bf16.msra.mxu0 %v2553
      %2557 = vmatprep.subr.bf16.mxu0 0
      %2558 = vmatpush1.bf16.msra.mxu0 0
      %2559 = vmatprep.subr.bf16.mxu0 0
      %2560 = vmatpush1.bf16.msra.mxu0 0
      %2561 = vmatprep.subr.bf16.mxu0 0
      %2562 = vmatpush1.bf16.msra.mxu0 0
      %2563 = vmatprep.subr.bf16.mxu0 0
      %2564 = vmatpush1.bf16.msra.mxu0 0
      %2565 = vmatprep.subr.bf16.mxu0 0
      %2566 = vmatpush1.bf16.msra.mxu0 0
      %2567 = vmatprep.subr.bf16.mxu0 0
      %2568 = vmatpush1.bf16.msra.mxu0 0
      %2569 = vmatprep.subr.bf16.mxu0 0
      %2570 = vmatpush1.bf16.msra.mxu0 0
      %2571 = vmatprep.subr.bf16.mxu0 0
      %2572 = vmatpush1.bf16.msra.mxu0 0
      %2573 = vmatprep.subr.bf16.mxu0 0
      %2574 = vmatpush1.bf16.msra.mxu0 0
      %2575 = vmatprep.subr.bf16.mxu0 0
      %2576 = vmatpush1.bf16.msra.mxu0 0
      %2577 = vmatprep.subr.bf16.mxu0 0
      %2578 = vmatpush1.bf16.msra.mxu0 0
      %2579 = vmatprep.subr.bf16.mxu0 0
      %2580 = vmatpush1.bf16.msra.mxu0 0
      %2581 = vmatprep.subr.bf16.mxu0 0
      %2582 = vmatpush1.bf16.msra.mxu0 0
      %2583 = vmatprep.subr.bf16.mxu0 0
      %2584 = vmatpush1.bf16.msra.mxu0 0
      %2585 = vmatprep.subr.bf16.mxu0 0
      %2586 = vmatpush1.bf16.msra.mxu0 0
      %2587 = vmatprep.mubr.bf16.mxu0 0
      %2588 = vmatmul.mubr.bf16.gmra.mrb[0].mxu0 %v2550
      %v2589 = vpop.f32.mrb[0].mxu0
      %v2590 = vadd.f32 0.0, %v2589
      %v2591 = vpop.f32.mrb[0].mxu0
      %v2592 = vpop.f32.mrb[0].mxu0
      %v2593 = vpop.f32.mrb[0].mxu0
      %2594 = vdwg.mxu0
      %v2596 = vsel %vm2359, %v2451, 0
      %v2599 = vsel %vm2459, %v1965, 0
      %2601 = vmatprep.subr.bf16.mxu0 0
      %2602 = vmatpush1.bf16.msra.mxu0 %v2599
      %2603 = vmatprep.subr.bf16.mxu0 0
      %2604 = vmatpush1.bf16.msra.mxu0 0
      %2605 = vmatprep.subr.bf16.mxu0 0
      %2606 = vmatpush1.bf16.msra.mxu0 0
      %2607 = vmatprep.subr.bf16.mxu0 0
      %2608 = vmatpush1.bf16.msra.mxu0 0
      %2609 = vmatprep.subr.bf16.mxu0 0
      %2610 = vmatpush1.bf16.msra.mxu0 0
      %2611 = vmatprep.subr.bf16.mxu0 0
      %2612 = vmatpush1.bf16.msra.mxu0 0
      %2613 = vmatprep.subr.bf16.mxu0 0
      %2614 = vmatpush1.bf16.msra.mxu0 0
      %2615 = vmatprep.subr.bf16.mxu0 0
      %2616 = vmatpush1.bf16.msra.mxu0 0
      %2617 = vmatprep.subr.bf16.mxu0 0
      %2618 = vmatpush1.bf16.msra.mxu0 0
      %2619 = vmatprep.subr.bf16.mxu0 0
      %2620 = vmatpush1.bf16.msra.mxu0 0
      %2621 = vmatprep.subr.bf16.mxu0 0
      %2622 = vmatpush1.bf16.msra.mxu0 0
      %2623 = vmatprep.subr.bf16.mxu0 0
      %2624 = vmatpush1.bf16.msra.mxu0 0
      %2625 = vmatprep.subr.bf16.mxu0 0
      %2626 = vmatpush1.bf16.msra.mxu0 0
      %2627 = vmatprep.subr.bf16.mxu0 0
      %2628 = vmatpush1.bf16.msra.mxu0 0
      %2629 = vmatprep.subr.bf16.mxu0 0
      %2630 = vmatpush1.bf16.msra.mxu0 0
      %2631 = vmatprep.subr.bf16.mxu0 0
      %2632 = vmatpush1.bf16.msra.mxu0 0
      %2633 = vmatprep.mubr.bf16.mxu0 0
      %2634 = vmatmul.mubr.bf16.gmra.mrb[0].mxu0 %v2596
      %v2635 = vpop.f32.mrb[0].mxu0
      %v2636 = vadd.f32 0.0, %v2635
      %v2637 = vpop.f32.mrb[0].mxu0
      %v2638 = vpop.f32.mrb[0].mxu0
      %v2639 = vpop.f32.mrb[0].mxu0
      %2640 = vdwg.mxu0
      %v2642 = vsel %vm2359, %v2452, 0
      %v2645 = vsel %vm2459, %v1966, 0
      %2647 = vmatprep.subr.bf16.mxu0 0
      %2648 = vmatpush1.bf16.msra.mxu0 %v2645
      %2649 = vmatprep.subr.bf16.mxu0 0
      %2650 = vmatpush1.bf16.msra.mxu0 0
      %2651 = vmatprep.subr.bf16.mxu0 0
      %2652 = vmatpush1.bf16.msra.mxu0 0
      %2653 = vmatprep.subr.bf16.mxu0 0
      %2654 = vmatpush1.bf16.msra.mxu0 0
      %2655 = vmatprep.subr.bf16.mxu0 0
      %2656 = vmatpush1.bf16.msra.mxu0 0
      %2657 = vmatprep.subr.bf16.mxu0 0
      %2658 = vmatpush1.bf16.msra.mxu0 0
      %2659 = vmatprep.subr.bf16.mxu0 0
      %2660 = vmatpush1.bf16.msra.mxu0 0
      %2661 = vmatprep.subr.bf16.mxu0 0
      %2662 = vmatpush1.bf16.msra.mxu0 0
      %2663 = vmatprep.subr.bf16.mxu0 0
      %2664 = vmatpush1.bf16.msra.mxu0 0
      %2665 = vmatprep.subr.bf16.mxu0 0
      %2666 = vmatpush1.bf16.msra.mxu0 0
      %2667 = vmatprep.subr.bf16.mxu0 0
      %2668 = vmatpush1.bf16.msra.mxu0 0
      %2669 = vmatprep.subr.bf16.mxu0 0
      %2670 = vmatpush1.bf16.msra.mxu0 0
      %2671 = vmatprep.subr.bf16.mxu0 0
      %2672 = vmatpush1.bf16.msra.mxu0 0
      %2673 = vmatprep.subr.bf16.mxu0 0
      %2674 = vmatpush1.bf16.msra.mxu0 0
      %2675 = vmatprep.subr.bf16.mxu0 0
      %2676 = vmatpush1.bf16.msra.mxu0 0
      %2677 = vmatprep.subr.bf16.mxu0 0
      %2678 = vmatpush1.bf16.msra.mxu0 0
      %2679 = vmatprep.mubr.bf16.mxu0 0
      %2680 = vmatmul.mubr.bf16.gmra.mrb[0].mxu0 %v2642
      %v2681 = vpop.f32.mrb[0].mxu0
      %v2682 = vadd.f32 0.0, %v2681
      %v2683 = vpop.f32.mrb[0].mxu0
      %v2684 = vpop.f32.mrb[0].mxu0
      %v2685 = vpop.f32.mrb[0].mxu0
      %2686 = vdwg.mxu0
      %v2688 = vsel %vm2359, %v2453, 0
      %v2691 = vsel %vm2459, %v1967, 0
      %2693 = vmatprep.subr.bf16.mxu0 0
      %2694 = vmatpush1.bf16.msra.mxu0 %v2691
      %2695 = vmatprep.subr.bf16.mxu0 0
      %2696 = vmatpush1.bf16.msra.mxu0 0
      %2697 = vmatprep.subr.bf16.mxu0 0
      %2698 = vmatpush1.bf16.msra.mxu0 0
      %2699 = vmatprep.subr.bf16.mxu0 0
      %2700 = vmatpush1.bf16.msra.mxu0 0
      %2701 = vmatprep.subr.bf16.mxu0 0
      %2702 = vmatpush1.bf16.msra.mxu0 0
      %2703 = vmatprep.subr.bf16.mxu0 0
      %2704 = vmatpush1.bf16.msra.mxu0 0
      %2705 = vmatprep.subr.bf16.mxu0 0
      %2706 = vmatpush1.bf16.msra.mxu0 0
      %2707 = vmatprep.subr.bf16.mxu0 0
      %2708 = vmatpush1.bf16.msra.mxu0 0
      %2709 = vmatprep.subr.bf16.mxu0 0
      %2710 = vmatpush1.bf16.msra.mxu0 0
      %2711 = vmatprep.subr.bf16.mxu0 0
      %2712 = vmatpush1.bf16.msra.mxu0 0
      %2713 = vmatprep.subr.bf16.mxu0 0
      %2714 = vmatpush1.bf16.msra.mxu0 0
      %2715 = vmatprep.subr.bf16.mxu0 0
      %2716 = vmatpush1.bf16.msra.mxu0 0
      %2717 = vmatprep.subr.bf16.mxu0 0
      %2718 = vmatpush1.bf16.msra.mxu0 0
      %2719 = vmatprep.subr.bf16.mxu0 0
      %2720 = vmatpush1.bf16.msra.mxu0 0
      %2721 = vmatprep.subr.bf16.mxu0 0
      %2722 = vmatpush1.bf16.msra.mxu0 0
      %2723 = vmatprep.subr.bf16.mxu0 0
      %2724 = vmatpush1.bf16.msra.mxu0 0
      %2725 = vmatprep.mubr.bf16.mxu0 0
      %2726 = vmatmul.mubr.bf16.gmra.mrb[0].mxu0 %v2688
      %v2727 = vpop.f32.mrb[0].mxu0
      %v2728 = vadd.f32 0.0, %v2727
      %v2729 = vpop.f32.mrb[0].mxu0
      %v2730 = vpop.f32.mrb[0].mxu0
      %v2731 = vpop.f32.mrb[0].mxu0
      %2732 = vdwg.mxu0
      %v2734 = vsel %vm2359, %v2454, 0
      %v2737 = vsel %vm2459, %v1968, 0
      %2739 = vmatprep.subr.bf16.mxu0 0
      %2740 = vmatpush1.bf16.msra.mxu0 %v2737
      %2741 = vmatprep.subr.bf16.mxu0 0
      %2742 = vmatpush1.bf16.msra.mxu0 0
      %2743 = vmatprep.subr.bf16.mxu0 0
      %2744 = vmatpush1.bf16.msra.mxu0 0
      %2745 = vmatprep.subr.bf16.mxu0 0
      %2746 = vmatpush1.bf16.msra.mxu0 0
      %2747 = vmatprep.subr.bf16.mxu0 0
      %2748 = vmatpush1.bf16.msra.mxu0 0
      %2749 = vmatprep.subr.bf16.mxu0 0
      %2750 = vmatpush1.bf16.msra.mxu0 0
      %2751 = vmatprep.subr.bf16.mxu0 0
      %2752 = vmatpush1.bf16.msra.mxu0 0
      %2753 = vmatprep.subr.bf16.mxu0 0
      %2754 = vmatpush1.bf16.msra.mxu0 0
      %2755 = vmatprep.subr.bf16.mxu0 0
      %2756 = vmatpush1.bf16.msra.mxu0 0
      %2757 = vmatprep.subr.bf16.mxu0 0
      %2758 = vmatpush1.bf16.msra.mxu0 0
      %2759 = vmatprep.subr.bf16.mxu0 0
      %2760 = vmatpush1.bf16.msra.mxu0 0
      %2761 = vmatprep.subr.bf16.mxu0 0
      %2762 = vmatpush1.bf16.msra.mxu0 0
      %2763 = vmatprep.subr.bf16.mxu0 0
      %2764 = vmatpush1.bf16.msra.mxu0 0
      %2765 = vmatprep.subr.bf16.mxu0 0
      %2766 = vmatpush1.bf16.msra.mxu0 0
      %2767 = vmatprep.subr.bf16.mxu0 0
      %2768 = vmatpush1.bf16.msra.mxu0 0
      %2769 = vmatprep.subr.bf16.mxu0 0
      %2770 = vmatpush1.bf16.msra.mxu0 0
      %2771 = vmatprep.mubr.bf16.mxu0 0
      %2772 = vmatmul.mubr.bf16.gmra.mrb[0].mxu0 %v2734
      %v2773 = vpop.f32.mrb[0].mxu0
      %v2774 = vadd.f32 0.0, %v2773
      %v2775 = vpop.f32.mrb[0].mxu0
      %v2776 = vpop.f32.mrb[0].mxu0
      %v2777 = vpop.f32.mrb[0].mxu0
      %2778 = vdwg.mxu0
      %v2780 = vsel %vm2359, %v2455, 0
      %v2783 = vsel %vm2459, %v1969, 0
      %2785 = vmatprep.subr.bf16.mxu0 0
      %2786 = vmatpush1.bf16.msra.mxu0 %v2783
      %2787 = vmatprep.subr.bf16.mxu0 0
      %2788 = vmatpush1.bf16.msra.mxu0 0
      %2789 = vmatprep.subr.bf16.mxu0 0
      %2790 = vmatpush1.bf16.msra.mxu0 0
      %2791 = vmatprep.subr.bf16.mxu0 0
      %2792 = vmatpush1.bf16.msra.mxu0 0
      %2793 = vmatprep.subr.bf16.mxu0 0
      %2794 = vmatpush1.bf16.msra.mxu0 0
      %2795 = vmatprep.subr.bf16.mxu0 0
      %2796 = vmatpush1.bf16.msra.mxu0 0
      %2797 = vmatprep.subr.bf16.mxu0 0
      %2798 = vmatpush1.bf16.msra.mxu0 0
      %2799 = vmatprep.subr.bf16.mxu0 0
      %2800 = vmatpush1.bf16.msra.mxu0 0
      %2801 = vmatprep.subr.bf16.mxu0 0
      %2802 = vmatpush1.bf16.msra.mxu0 0
      %2803 = vmatprep.subr.bf16.mxu0 0
      %2804 = vmatpush1.bf16.msra.mxu0 0
      %2805 = vmatprep.subr.bf16.mxu0 0
      %2806 = vmatpush1.bf16.msra.mxu0 0
      %2807 = vmatprep.subr.bf16.mxu0 0
      %2808 = vmatpush1.bf16.msra.mxu0 0
      %2809 = vmatprep.subr.bf16.mxu0 0
      %2810 = vmatpush1.bf16.msra.mxu0 0
      %2811 = vmatprep.subr.bf16.mxu0 0
      %2812 = vmatpush1.bf16.msra.mxu0 0
      %2813 = vmatprep.subr.bf16.mxu0 0
      %2814 = vmatpush1.bf16.msra.mxu0 0
      %2815 = vmatprep.subr.bf16.mxu0 0
      %2816 = vmatpush1.bf16.msra.mxu0 0
      %2817 = vmatprep.mubr.bf16.mxu0 0
      %2818 = vmatmul.mubr.bf16.gmra.mrb[0].mxu0 %v2780
      %v2819 = vpop.f32.mrb[0].mxu0
      %v2820 = vadd.f32 0.0, %v2819
      %v2821 = vpop.f32.mrb[0].mxu0
      %v2822 = vpop.f32.mrb[0].mxu0
      %v2823 = vpop.f32.mrb[0].mxu0
      %2824 = vdwg.mxu0
      %v2825 = vcombine.low %v2498, %v2590
      %v2826 = vcombine.high %v2498, %v2590
      %v2828 = vunpack.c.l.s4 1983009808
      %v2829 = vunpack.c.0.s8 %v2828
      %v2830 = vlaneseq
      %v2831 = vshrl.u32 %v2830, 7
      %v2832 = vsub.s32 %v2829, %v2831
      %v2833 = vrot.slane %v2825, %v2832
      %v2835 = vunpack.c.l.s4 1983009808
      %v2836 = vunpack.c.0.s8 %v2835
      %v2837 = vlaneseq
      %v2838 = vshrl.u32 %v2837, 7
      %v2839 = vsub.s32 %v2836, %v2838
      %v2840 = vrot.slane %v2826, %v2839
      %v2841 = vcombine.low %v2544, %v2636
      %v2842 = vcombine.high %v2544, %v2636
      %v2844 = vunpack.c.l.s4 1983009808
      %v2845 = vunpack.c.0.s8 %v2844
      %v2846 = vlaneseq
      %v2847 = vshrl.u32 %v2846, 7
      %v2848 = vsub.s32 %v2845, %v2847
      %v2849 = vrot.slane %v2841, %v2848
      %v2851 = vunpack.c.l.s4 1983009808
      %v2852 = vunpack.c.0.s8 %v2851
      %v2853 = vlaneseq
      %v2854 = vshrl.u32 %v2853, 7
      %v2855 = vsub.s32 %v2852, %v2854
      %v2856 = vrot.slane %v2842, %v2855
      %v2857 = vcombine.low %v2833, %v2849
      %v2858 = vcombine.high %v2833, %v2849
      %v2860 = vunpack.c.l.s4 1934713408
      %v2861 = vunpack.c.0.s8 %v2860
      %v2862 = vlaneseq
      %v2863 = vshrl.u32 %v2862, 7
      %v2864 = vsub.s32 %v2861, %v2863
      %v2865 = vrot.slane %v2857, %v2864
      %v2867 = vunpack.c.l.s4 1934713408
      %v2868 = vunpack.c.0.s8 %v2867
      %v2869 = vlaneseq
      %v2870 = vshrl.u32 %v2869, 7
      %v2871 = vsub.s32 %v2868, %v2870
      %v2872 = vrot.slane %v2858, %v2871
      %v2873 = vcombine.low %v2840, %v2856
      %v2874 = vcombine.high %v2840, %v2856
      %v2876 = vunpack.c.l.s4 1934713408
      %v2877 = vunpack.c.0.s8 %v2876
      %v2878 = vlaneseq
      %v2879 = vshrl.u32 %v2878, 7
      %v2880 = vsub.s32 %v2877, %v2879
      %v2881 = vrot.slane %v2873, %v2880
      %v2883 = vunpack.c.l.s4 1934713408
      %v2884 = vunpack.c.0.s8 %v2883
      %v2885 = vlaneseq
      %v2886 = vshrl.u32 %v2885, 7
      %v2887 = vsub.s32 %v2884, %v2886
      %v2888 = vrot.slane %v2874, %v2887
      %v2889 = vcombine.high %v2865, 0.0
      %v2890 = vcombine.high %v2872, 0.0
      %v2891 = vcombine.high %v2881, 0.0
      %v2892 = vcombine.high %v2888, 0.0
      %v2893 = vcombine.low %v2682, %v2774
      %v2894 = vcombine.high %v2682, %v2774
      %v2896 = vunpack.c.l.s4 1983009808
      %v2897 = vunpack.c.0.s8 %v2896
      %v2898 = vlaneseq
      %v2899 = vshrl.u32 %v2898, 7
      %v2900 = vsub.s32 %v2897, %v2899
      %v2901 = vrot.slane %v2893, %v2900
      %v2903 = vunpack.c.l.s4 1983009808
      %v2904 = vunpack.c.0.s8 %v2903
      %v2905 = vlaneseq
      %v2906 = vshrl.u32 %v2905, 7
      %v2907 = vsub.s32 %v2904, %v2906
      %v2908 = vrot.slane %v2894, %v2907
      %v2909 = vcombine.low %v2728, %v2820
      %v2910 = vcombine.high %v2728, %v2820
      %v2912 = vunpack.c.l.s4 1983009808
      %v2913 = vunpack.c.0.s8 %v2912
      %v2914 = vlaneseq
      %v2915 = vshrl.u32 %v2914, 7
      %v2916 = vsub.s32 %v2913, %v2915
      %v2917 = vrot.slane %v2909, %v2916
      %v2919 = vunpack.c.l.s4 1983009808
      %v2920 = vunpack.c.0.s8 %v2919
      %v2921 = vlaneseq
      %v2922 = vshrl.u32 %v2921, 7
      %v2923 = vsub.s32 %v2920, %v2922
      %v2924 = vrot.slane %v2910, %v2923
      %v2925 = vcombine.low %v2901, %v2917
      %v2926 = vcombine.high %v2901, %v2917
      %v2928 = vunpack.c.l.s4 1934713408
      %v2929 = vunpack.c.0.s8 %v2928
      %v2930 = vlaneseq
      %v2931 = vshrl.u32 %v2930, 7
      %v2932 = vsub.s32 %v2929, %v2931
      %v2933 = vrot.slane %v2925, %v2932
      %v2935 = vunpack.c.l.s4 1934713408
      %v2936 = vunpack.c.0.s8 %v2935
      %v2937 = vlaneseq
      %v2938 = vshrl.u32 %v2937, 7
      %v2939 = vsub.s32 %v2936, %v2938
      %v2940 = vrot.slane %v2926, %v2939
      %v2941 = vcombine.low %v2908, %v2924
      %v2942 = vcombine.high %v2908, %v2924
      %v2944 = vunpack.c.l.s4 1934713408
      %v2945 = vunpack.c.0.s8 %v2944
      %v2946 = vlaneseq
      %v2947 = vshrl.u32 %v2946, 7
      %v2948 = vsub.s32 %v2945, %v2947
      %v2949 = vrot.slane %v2941, %v2948
      %v2951 = vunpack.c.l.s4 1934713408
      %v2952 = vunpack.c.0.s8 %v2951
      %v2953 = vlaneseq
      %v2954 = vshrl.u32 %v2953, 7
      %v2955 = vsub.s32 %v2952, %v2954
      %v2956 = vrot.slane %v2942, %v2955
      %v2957 = vcombine.high %v2933, 0.0
      %v2958 = vcombine.high %v2940, 0.0
      %v2959 = vcombine.high %v2949, 0.0
      %v2960 = vcombine.high %v2956, 0.0
      %v2961 = vcombine.low %v2865, %v2872
      %v2963 = vunpack.c.l.s4 1983009808
      %v2964 = vunpack.c.0.s8 %v2963
      %v2965 = vlaneseq
      %v2966 = vshrl.u32 %v2965, 7
      %v2967 = vsub.s32 %v2964, %v2966
      %v2968 = vrot.slane %v2961, %v2967
      %v2969 = vcombine.low %v2889, %v2890
      %v2971 = vunpack.c.l.s4 1983009808
      %v2972 = vunpack.c.0.s8 %v2971
      %v2973 = vlaneseq
      %v2974 = vshrl.u32 %v2973, 7
      %v2975 = vsub.s32 %v2972, %v2974
      %v2976 = vrot.slane %v2969, %v2975
      %v2977 = vcombine.low %v2881, %v2888
      %v2979 = vunpack.c.l.s4 1983009808
      %v2980 = vunpack.c.0.s8 %v2979
      %v2981 = vlaneseq
      %v2982 = vshrl.u32 %v2981, 7
      %v2983 = vsub.s32 %v2980, %v2982
      %v2984 = vrot.slane %v2977, %v2983
      %v2985 = vcombine.low %v2891, %v2892
      %v2987 = vunpack.c.l.s4 1983009808
      %v2988 = vunpack.c.0.s8 %v2987
      %v2989 = vlaneseq
      %v2990 = vshrl.u32 %v2989, 7
      %v2991 = vsub.s32 %v2988, %v2990
      %v2992 = vrot.slane %v2985, %v2991
      %v2993 = vcombine.low %v2968, %v2976
      %v2994 = vcombine.high %v2968, %v2976
      %v2996 = vunpack.c.l.s4 1934713408
      %v2997 = vunpack.c.0.s8 %v2996
      %v2998 = vlaneseq
      %v2999 = vshrl.u32 %v2998, 7
      %v3000 = vsub.s32 %v2997, %v2999
      %v3001 = vrot.slane %v2993, %v3000
      %v3003 = vunpack.c.l.s4 1934713408
      %v3004 = vunpack.c.0.s8 %v3003
      %v3005 = vlaneseq
      %v3006 = vshrl.u32 %v3005, 7
      %v3007 = vsub.s32 %v3004, %v3006
      %v3008 = vrot.slane %v2994, %v3007
      %v3009 = vcombine.low %v2984, %v2992
      %v3010 = vcombine.high %v2984, %v2992
      %v3012 = vunpack.c.l.s4 1934713408
      %v3013 = vunpack.c.0.s8 %v3012
      %v3014 = vlaneseq
      %v3015 = vshrl.u32 %v3014, 7
      %v3016 = vsub.s32 %v3013, %v3015
      %v3017 = vrot.slane %v3009, %v3016
      %v3019 = vunpack.c.l.s4 1934713408
      %v3020 = vunpack.c.0.s8 %v3019
      %v3021 = vlaneseq
      %v3022 = vshrl.u32 %v3021, 7
      %v3023 = vsub.s32 %v3020, %v3022
      %v3024 = vrot.slane %v3010, %v3023
      %v3025 = vcombine.low %v3001, %v3017
      %v3026 = vcombine.high %v3001, %v3017
      %v3027 = vcombine.low %v3008, %v3024
      %v3028 = vcombine.high %v3008, %v3024
      %v3029 = vcombine.low %v2933, %v2940
      %v3031 = vunpack.c.l.s4 1983009808
      %v3032 = vunpack.c.0.s8 %v3031
      %v3033 = vlaneseq
      %v3034 = vshrl.u32 %v3033, 7
      %v3035 = vsub.s32 %v3032, %v3034
      %v3036 = vrot.slane %v3029, %v3035
      %v3037 = vcombine.low %v2957, %v2958
      %v3039 = vunpack.c.l.s4 1983009808
      %v3040 = vunpack.c.0.s8 %v3039
      %v3041 = vlaneseq
      %v3042 = vshrl.u32 %v3041, 7
      %v3043 = vsub.s32 %v3040, %v3042
      %v3044 = vrot.slane %v3037, %v3043
      %v3045 = vcombine.low %v2949, %v2956
      %v3047 = vunpack.c.l.s4 1983009808
      %v3048 = vunpack.c.0.s8 %v3047
      %v3049 = vlaneseq
      %v3050 = vshrl.u32 %v3049, 7
      %v3051 = vsub.s32 %v3048, %v3050
      %v3052 = vrot.slane %v3045, %v3051
      %v3053 = vcombine.low %v2959, %v2960
      %v3055 = vunpack.c.l.s4 1983009808
      %v3056 = vunpack.c.0.s8 %v3055
      %v3057 = vlaneseq
      %v3058 = vshrl.u32 %v3057, 7
      %v3059 = vsub.s32 %v3056, %v3058
      %v3060 = vrot.slane %v3053, %v3059
      %v3061 = vcombine.low %v3036, %v3044
      %v3062 = vcombine.high %v3036, %v3044
      %v3064 = vunpack.c.l.s4 1934713408
      %v3065 = vunpack.c.0.s8 %v3064
      %v3066 = vlaneseq
      %v3067 = vshrl.u32 %v3066, 7
      %v3068 = vsub.s32 %v3065, %v3067
      %v3069 = vrot.slane %v3061, %v3068
      %v3071 = vunpack.c.l.s4 1934713408
      %v3072 = vunpack.c.0.s8 %v3071
      %v3073 = vlaneseq
      %v3074 = vshrl.u32 %v3073, 7
      %v3075 = vsub.s32 %v3072, %v3074
      %v3076 = vrot.slane %v3062, %v3075
      %v3077 = vcombine.low %v3052, %v3060
      %v3078 = vcombine.high %v3052, %v3060
      %v3080 = vunpack.c.l.s4 1934713408
      %v3081 = vunpack.c.0.s8 %v3080
      %v3082 = vlaneseq
      %v3083 = vshrl.u32 %v3082, 7
      %v3084 = vsub.s32 %v3081, %v3083
      %v3085 = vrot.slane %v3077, %v3084
      %v3087 = vunpack.c.l.s4 1934713408
      %v3088 = vunpack.c.0.s8 %v3087
      %v3089 = vlaneseq
      %v3090 = vshrl.u32 %v3089, 7
      %v3091 = vsub.s32 %v3088, %v3090
      %v3092 = vrot.slane %v3078, %v3091
      %v3093 = vcombine.low %v3069, %v3085
      %v3094 = vcombine.high %v3069, %v3085
      %v3095 = vcombine.low %v3076, %v3092
      %v3096 = vcombine.high %v3076, %v3092
      %3099 = vrot.lane.b32.xlu0 %v3026, 32
      %v3100 = vpop.permute.xlu0 %3099
      %3101 = vrot.lane.b32.xlu0 %v3094, 32
      %v3102 = vpop.permute.xlu0 %3101
      %3107 = vrot.lane.b32.xlu0 %v3027, 64
      %v3108 = vpop.permute.xlu0 %3107
      %3109 = vrot.lane.b32.xlu0 %v3095, 64
      %v3110 = vpop.permute.xlu0 %3109
      %3115 = vrot.lane.b32.xlu0 %v3028, 96
      %v3116 = vpop.permute.xlu0 %3115
      %3117 = vrot.lane.b32.xlu0 %v3096, 96
      %v3118 = vpop.permute.xlu0 %3117
      %v3121 = vsel %vm1970, %v3025, %v3100
      %v3122 = vsel %vm1970, %v3093, %v3102
      %vm3123 = vcmask 523264
      %v3124 = vsel %vm3123, %v3121, %v3108
      %v3125 = vsel %vm3123, %v3122, %v3110
      %vm3126 = vcmask 785408
      %v3127 = vsel %vm3126, %v3124, %v3116
      %v3128 = vsel %vm3126, %v3125, %v3118
      %v3129 = vpack.c.bf16 %v3128, %v3127
      %v3130 = vld [vmem:[%s721] sm:$0xf]
      %v3131 = vld [vmem:[%s721 + $0x4] sm:$0xf]
      %v3132 = vld [vmem:[%s721 + $0x8] sm:$0xf]
      %v3133 = vld [vmem:[%s721 + $0xc] sm:$0xf]
      %v3134 = vld [vmem:[%s721 + $0x10] sm:$0xf]
      %v3135 = vld [vmem:[%s721 + $0x14] sm:$0xf]
      %v3136 = vld [vmem:[%s721 + $0x18] sm:$0xf]
      %v3137 = vld [vmem:[%s721 + $0x1c] sm:$0xf]
      %v3138 = vld [vmem:[%s721 + $0x20] sm:$0xf]
      %v3139 = vld [vmem:[%s721 + $0x24] sm:$0xf]
      %v3140 = vld [vmem:[%s721 + $0x28] sm:$0xf]
      %v3141 = vld [vmem:[%s721 + $0x2c] sm:$0xf]
      %v3142 = vld [vmem:[%s721 + $0x30] sm:$0xf]
      %v3143 = vld [vmem:[%s721 + $0x34] sm:$0xf]
      %v3144 = vld [vmem:[%s721 + $0x38] sm:$0xf]
      %v3145 = vld [vmem:[%s721 + $0x3c] sm:$0xf]
      %v3146 = vld [vmem:[%s724] sm:$0x1]
      %v3148 = vlaneseq
      %v3149 = vshrl.u32 %v3148, 7
      %v3150 = vsub.s32 0, %v3149
      %v3151 = vrot.slane %v3146, %v3150
      %v3169 = vunpack.c.l.b16 %v3130
      %v3170 = vunpack.c.l.b16 %v3131
      %v3171 = vunpack.c.l.b16 %v3132
      %v3172 = vunpack.c.l.b16 %v3133
      %v3173 = vunpack.c.l.b16 %v3134
      %v3174 = vunpack.c.l.b16 %v3135
      %v3175 = vunpack.c.l.b16 %v3136
      %v3176 = vunpack.c.l.b16 %v3137
      %v3177 = vunpack.c.l.b16 %v3138
      %v3178 = vunpack.c.l.b16 %v3139
      %v3179 = vunpack.c.l.b16 %v3140
      %v3180 = vunpack.c.l.b16 %v3141
      %v3181 = vunpack.c.l.b16 %v3142
      %v3182 = vunpack.c.l.b16 %v3143
      %v3183 = vunpack.c.l.b16 %v3144
      %v3184 = vunpack.c.l.b16 %v3145
      %v3185 = vpack.c.b16 %v3170, %v3169
      %v3186 = vpack.c.b16 %v3172, %v3171
      %v3187 = vpack.c.b16 %v3174, %v3173
      %v3188 = vpack.c.b16 %v3176, %v3175
      %v3189 = vpack.c.b16 %v3178, %v3177
      %v3190 = vpack.c.b16 %v3180, %v3179
      %v3191 = vpack.c.b16 %v3182, %v3181
      %v3192 = vpack.c.b16 %v3184, %v3183
      %3201 = vmatprep.subr.bf16.mxu0 0
      %3202 = vmatpush1.bf16.msra.mxu0 %v3185
      %3203 = vmatprep.subr.bf16.mxu0 0
      %3204 = vmatpush1.bf16.msra.mxu0 %v3186
      %3205 = vmatprep.subr.bf16.mxu0 0
      %3206 = vmatpush1.bf16.msra.mxu0 %v3187
      %3207 = vmatprep.subr.bf16.mxu0 0
      %3208 = vmatpush1.bf16.msra.mxu0 %v3188
      %3209 = vmatprep.subr.bf16.mxu0 0
      %3210 = vmatpush1.bf16.msra.mxu0 %v3189
      %3211 = vmatprep.subr.bf16.mxu0 0
      %3212 = vmatpush1.bf16.msra.mxu0 %v3190
      %3213 = vmatprep.subr.bf16.mxu0 0
      %3214 = vmatpush1.bf16.msra.mxu0 %v3191
      %3215 = vmatprep.subr.bf16.mxu0 0
      %3216 = vmatpush1.bf16.msra.mxu0 %v3192
      %3217 = vmatprep.subr.bf16.mxu0 0
      %3218 = vmatpush1.bf16.msra.mxu0 0
      %3219 = vmatprep.subr.bf16.mxu0 0
      %3220 = vmatpush1.bf16.msra.mxu0 0
      %3221 = vmatprep.subr.bf16.mxu0 0
      %3222 = vmatpush1.bf16.msra.mxu0 0
      %3223 = vmatprep.subr.bf16.mxu0 0
      %3224 = vmatpush1.bf16.msra.mxu0 0
      %3225 = vmatprep.subr.bf16.mxu0 0
      %3226 = vmatpush1.bf16.msra.mxu0 0
      %3227 = vmatprep.subr.bf16.mxu0 0
      %3228 = vmatpush1.bf16.msra.mxu0 0
      %3229 = vmatprep.subr.bf16.mxu0 0
      %3230 = vmatpush1.bf16.msra.mxu0 0
      %3231 = vmatprep.subr.bf16.mxu0 0
      %3232 = vmatpush1.bf16.msra.mxu0 0
      %3233 = vmatprep.mubr.bf16.mxu0 0
      %3234 = vmatmul.mubr.bf16.gmra.mrb[0].mxu0 %v3129
      %v3235 = vpop.f32.mrb[0].mxu0
      %v3236 = vadd.f32 %v3151, %v3235
      %v3237 = vpop.f32.mrb[0].mxu0
      %v3238 = vpop.f32.mrb[0].mxu0
      %v3239 = vadd.f32 %v3151, %v3238
      %v3240 = vpop.f32.mrb[0].mxu0
      %3241 = vdwg.mxu0
      %v3242 = vadd.f32 %v763, %v3236
      %v3243 = vadd.f32 %v764, %v3239
      %v3244 = vld [vmem:[%s727] sm:$0x1]
      %v3245 = vld [vmem:[%s730] sm:$0x1]
      %3246 = vadd.xlane.f32.xlu0 %v3242
      %v3247 = vpop.xlane.xlu0 %3246
      %3248 = vadd.xlane.f32.xlu0 %v3243
      %v3249 = vpop.xlane.xlu0 %3248
      %v3250 = vmul.f32 %v3247, %v773
      %v3251 = vmul.f32 %v3249, %v773
      %v3252 = vsub.f32 %v3242, %v3250
      %v3253 = vsub.f32 %v3243, %v3251
      %v3254 = vmul.f32 %v3252, %v3252
      %v3255 = vmul.f32 %v3253, %v3253
      %3256 = vadd.xlane.f32.xlu0 %v3254
      %v3257 = vpop.xlane.xlu0 %3256
      %3258 = vadd.xlane.f32.xlu0 %v3255
      %v3259 = vpop.xlane.xlu0 %3258
      %v3260 = vmul.f32 %v3257, %v773
      %v3261 = vmul.f32 %v3259, %v773
      %v3262 = vadd.f32 %v3260, 1e-12
      %v3263 = vadd.f32 %v3261, 1e-12
      %v3264 = vrsqrt.pop %v3262
      %v3265 = vrsqrt.pop %v3263
      %v3266 = vmul.f32 %v3252, %v3264
      %v3267 = vmul.f32 %v3253, %v3265
      %v3269 = vlaneseq
      %v3270 = vshrl.u32 %v3269, 7
      %v3271 = vsub.s32 0, %v3270
      %v3272 = vrot.slane %v3244, %v3271
      %v3274 = vmul.f32 %v3266, %v3272
      %v3275 = vmul.f32 %v3267, %v3272
      %v3277 = vlaneseq
      %v3278 = vshrl.u32 %v3277, 7
      %v3279 = vsub.s32 0, %v3278
      %v3280 = vrot.slane %v3245, %v3279
      %v3282 = vadd.f32 %v3274, %v3280
      %v3283 = vadd.f32 %v3275, %v3280
      %v3284 = vpack.c.bf16 %v3283, %v3282
      %v3285 = vld [vmem:[%s735] sm:$0xff]
      %v3286 = vld [vmem:[%s735 + $0x8] sm:$0xff]
      %v3287 = vld [vmem:[%s735 + $0x10] sm:$0xff]
      %v3288 = vld [vmem:[%s735 + $0x18] sm:$0xff]
      %v3289 = vld [vmem:[%s735 + $0x20] sm:$0xff]
      %v3290 = vld [vmem:[%s735 + $0x28] sm:$0xff]
      %v3291 = vld [vmem:[%s735 + $0x30] sm:$0xff]
      %v3292 = vld [vmem:[%s735 + $0x38] sm:$0xff]
      %v3293 = vld [vmem:[%s735 + $0x40] sm:$0xff]
      %v3294 = vld [vmem:[%s735 + $0x48] sm:$0xff]
      %v3295 = vld [vmem:[%s735 + $0x50] sm:$0xff]
      %v3296 = vld [vmem:[%s735 + $0x58] sm:$0xff]
      %v3297 = vld [vmem:[%s735 + $0x60] sm:$0xff]
      %v3298 = vld [vmem:[%s735 + $0x68] sm:$0xff]
      %v3299 = vld [vmem:[%s735 + $0x70] sm:$0xff]
      %v3300 = vld [vmem:[%s735 + $0x78] sm:$0xff]
      %v3301 = vld [vmem:[%s739] sm:$0x3]
      %v3303 = vlaneseq
      %v3304 = vshrl.u32 %v3303, 7
      %v3305 = vsub.s32 0, %v3304
      %v3306 = vrot.slane %v3301, %v3305
      %v3307 = vlaneseq
      %v3308 = vshrl.u32 %v3307, 7
      %v3309 = vsub.s32 1, %v3308
      %v3310 = vrot.slane %v3301, %v3309
      %v3329 = vunpack.c.l.b16 %v3285
      %v3330 = vunpack.c.h.b16 %v3285
      %v3331 = vunpack.c.l.b16 %v3286
      %v3332 = vunpack.c.h.b16 %v3286
      %v3333 = vunpack.c.l.b16 %v3287
      %v3334 = vunpack.c.h.b16 %v3287
      %v3335 = vunpack.c.l.b16 %v3288
      %v3336 = vunpack.c.h.b16 %v3288
      %v3337 = vunpack.c.l.b16 %v3289
      %v3338 = vunpack.c.h.b16 %v3289
      %v3339 = vunpack.c.l.b16 %v3290
      %v3340 = vunpack.c.h.b16 %v3290
      %v3341 = vunpack.c.l.b16 %v3291
      %v3342 = vunpack.c.h.b16 %v3291
      %v3343 = vunpack.c.l.b16 %v3292
      %v3344 = vunpack.c.h.b16 %v3292
      %v3345 = vunpack.c.l.b16 %v3293
      %v3346 = vunpack.c.h.b16 %v3293
      %v3347 = vunpack.c.l.b16 %v3294
      %v3348 = vunpack.c.h.b16 %v3294
      %v3349 = vunpack.c.l.b16 %v3295
      %v3350 = vunpack.c.h.b16 %v3295
      %v3351 = vunpack.c.l.b16 %v3296
      %v3352 = vunpack.c.h.b16 %v3296
      %v3353 = vunpack.c.l.b16 %v3297
      %v3354 = vunpack.c.h.b16 %v3297
      %v3355 = vunpack.c.l.b16 %v3298
      %v3356 = vunpack.c.h.b16 %v3298
      %v3357 = vunpack.c.l.b16 %v3299
      %v3358 = vunpack.c.h.b16 %v3299
      %v3359 = vunpack.c.l.b16 %v3300
      %v3360 = vunpack.c.h.b16 %v3300
      %v3361 = vpack.c.b16 %v3331, %v3329
      %v3362 = vpack.c.b16 %v3332, %v3330
      %v3363 = vpack.c.b16 %v3335, %v3333
      %v3364 = vpack.c.b16 %v3336, %v3334
      %v3365 = vpack.c.b16 %v3339, %v3337
      %v3366 = vpack.c.b16 %v3340, %v3338
      %v3367 = vpack.c.b16 %v3343, %v3341
      %v3368 = vpack.c.b16 %v3344, %v3342
      %v3369 = vpack.c.b16 %v3347, %v3345
      %v3370 = vpack.c.b16 %v3348, %v3346
      %v3371 = vpack.c.b16 %v3351, %v3349
      %v3372 = vpack.c.b16 %v3352, %v3350
      %v3373 = vpack.c.b16 %v3355, %v3353
      %v3374 = vpack.c.b16 %v3356, %v3354
      %v3375 = vpack.c.b16 %v3359, %v3357
      %v3376 = vpack.c.b16 %v3360, %v3358
      %3393 = vmatprep.subr.bf16.mxu0 %v3362
      %3394 = vmatpush1.bf16.msra.mxu0 %v3361
      %3395 = vmatprep.subr.bf16.mxu0 %v3364
      %3396 = vmatpush1.bf16.msra.mxu0 %v3363
      %3397 = vmatprep.subr.bf16.mxu0 %v3366
      %3398 = vmatpush1.bf16.msra.mxu0 %v3365
      %3399 = vmatprep.subr.bf16.mxu0 %v3368
      %3400 = vmatpush1.bf16.msra.mxu0 %v3367
      %3401 = vmatprep.subr.bf16.mxu0 %v3370
      %3402 = vmatpush1.bf16.msra.mxu0 %v3369
      %3403 = vmatprep.subr.bf16.mxu0 %v3372
      %3404 = vmatpush1.bf16.msra.mxu0 %v3371
      %3405 = vmatprep.subr.bf16.mxu0 %v3374
      %3406 = vmatpush1.bf16.msra.mxu0 %v3373
      %3407 = vmatprep.subr.bf16.mxu0 %v3376
      %3408 = vmatpush1.bf16.msra.mxu0 %v3375
      %3409 = vmatprep.subr.bf16.mxu0 0
      %3410 = vmatpush1.bf16.msra.mxu0 0
      %3411 = vmatprep.subr.bf16.mxu0 0
      %3412 = vmatpush1.bf16.msra.mxu0 0
      %3413 = vmatprep.subr.bf16.mxu0 0
      %3414 = vmatpush1.bf16.msra.mxu0 0
      %3415 = vmatprep.subr.bf16.mxu0 0
      %3416 = vmatpush1.bf16.msra.mxu0 0
      %3417 = vmatprep.subr.bf16.mxu0 0
      %3418 = vmatpush1.bf16.msra.mxu0 0
      %3419 = vmatprep.subr.bf16.mxu0 0
      %3420 = vmatpush1.bf16.msra.mxu0 0
      %3421 = vmatprep.subr.bf16.mxu0 0
      %3422 = vmatpush1.bf16.msra.mxu0 0
      %3423 = vmatprep.subr.bf16.mxu0 0
      %3424 = vmatpush1.bf16.msra.mxu0 0
      %3425 = vmatprep.mubr.bf16.mxu0 0
      %3426 = vmatmul.mubr.bf16.gmra.mrb[0].mxu0 %v3284
      %v3427 = vpop.f32.mrb[0].mxu0
      %v3428 = vadd.f32 %v3306, %v3427
      %v3429 = vpop.f32.mrb[0].mxu0
      %v3430 = vadd.f32 %v3310, %v3429
      %v3431 = vpop.f32.mrb[0].mxu0
      %v3432 = vadd.f32 %v3306, %v3431
      %v3433 = vpop.f32.mrb[0].mxu0
      %v3434 = vadd.f32 %v3310, %v3433
      %3435 = vdwg.mxu0
      %v3436 = vmax.f32 %v3428, 0.0
      %v3437 = vmax.f32 %v3430, 0.0
      %v3438 = vmax.f32 %v3432, 0.0
      %v3439 = vmax.f32 %v3434, 0.0
      %v3440 = vpack.c.bf16 %v3438, %v3436
      %v3441 = vpack.c.bf16 %v3439, %v3437
      %v3442 = vld [vmem:[%s744] sm:$0xf]
      %v3443 = vld [vmem:[%s744 + $0x4] sm:$0xf]
      %v3444 = vld [vmem:[%s744 + $0x8] sm:$0xf]
      %v3445 = vld [vmem:[%s744 + $0xc] sm:$0xf]
      %v3446 = vld [vmem:[%s744 + $0x10] sm:$0xf]
      %v3447 = vld [vmem:[%s744 + $0x14] sm:$0xf]
      %v3448 = vld [vmem:[%s744 + $0x18] sm:$0xf]
      %v3449 = vld [vmem:[%s744 + $0x1c] sm:$0xf]
      %v3450 = vld [vmem:[%s744 + $0x20] sm:$0xf]
      %v3451 = vld [vmem:[%s744 + $0x24] sm:$0xf]
      %v3452 = vld [vmem:[%s744 + $0x28] sm:$0xf]
      %v3453 = vld [vmem:[%s744 + $0x2c] sm:$0xf]
      %v3454 = vld [vmem:[%s744 + $0x30] sm:$0xf]
      %v3455 = vld [vmem:[%s744 + $0x34] sm:$0xf]
      %v3456 = vld [vmem:[%s744 + $0x38] sm:$0xf]
      %v3457 = vld [vmem:[%s744 + $0x3c] sm:$0xf]
      %v3458 = vld [vmem:[%s744 + $0x40] sm:$0xf]
      %v3459 = vld [vmem:[%s744 + $0x44] sm:$0xf]
      %v3460 = vld [vmem:[%s744 + $0x48] sm:$0xf]
      %v3461 = vld [vmem:[%s744 + $0x4c] sm:$0xf]
      %v3462 = vld [vmem:[%s744 + $0x50] sm:$0xf]
      %v3463 = vld [vmem:[%s744 + $0x54] sm:$0xf]
      %v3464 = vld [vmem:[%s744 + $0x58] sm:$0xf]
      %v3465 = vld [vmem:[%s744 + $0x5c] sm:$0xf]
      %v3466 = vld [vmem:[%s744 + $0x60] sm:$0xf]
      %v3467 = vld [vmem:[%s744 + $0x64] sm:$0xf]
      %v3468 = vld [vmem:[%s744 + $0x68] sm:$0xf]
      %v3469 = vld [vmem:[%s744 + $0x6c] sm:$0xf]
      %v3470 = vld [vmem:[%s744 + $0x70] sm:$0xf]
      %v3471 = vld [vmem:[%s744 + $0x74] sm:$0xf]
      %v3472 = vld [vmem:[%s744 + $0x78] sm:$0xf]
      %v3473 = vld [vmem:[%s744 + $0x7c] sm:$0xf]
      %v3474 = vld [vmem:[%s747] sm:$0x1]
      %v3476 = vlaneseq
      %v3477 = vshrl.u32 %v3476, 7
      %v3478 = vsub.s32 0, %v3477
      %v3479 = vrot.slane %v3474, %v3478
      %v3513 = vunpack.c.l.b16 %v3442
      %v3514 = vunpack.c.l.b16 %v3443
      %v3515 = vunpack.c.l.b16 %v3444
      %v3516 = vunpack.c.l.b16 %v3445
      %v3517 = vunpack.c.l.b16 %v3446
      %v3518 = vunpack.c.l.b16 %v3447
      %v3519 = vunpack.c.l.b16 %v3448
      %v3520 = vunpack.c.l.b16 %v3449
      %v3521 = vunpack.c.l.b16 %v3450
      %v3522 = vunpack.c.l.b16 %v3451
      %v3523 = vunpack.c.l.b16 %v3452
      %v3524 = vunpack.c.l.b16 %v3453
      %v3525 = vunpack.c.l.b16 %v3454
      %v3526 = vunpack.c.l.b16 %v3455
      %v3527 = vunpack.c.l.b16 %v3456
      %v3528 = vunpack.c.l.b16 %v3457
      %v3529 = vunpack.c.l.b16 %v3458
      %v3530 = vunpack.c.l.b16 %v3459
      %v3531 = vunpack.c.l.b16 %v3460
      %v3532 = vunpack.c.l.b16 %v3461
      %v3533 = vunpack.c.l.b16 %v3462
      %v3534 = vunpack.c.l.b16 %v3463
      %v3535 = vunpack.c.l.b16 %v3464
      %v3536 = vunpack.c.l.b16 %v3465
      %v3537 = vunpack.c.l.b16 %v3466
      %v3538 = vunpack.c.l.b16 %v3467
      %v3539 = vunpack.c.l.b16 %v3468
      %v3540 = vunpack.c.l.b16 %v3469
      %v3541 = vunpack.c.l.b16 %v3470
      %v3542 = vunpack.c.l.b16 %v3471
      %v3543 = vunpack.c.l.b16 %v3472
      %v3544 = vunpack.c.l.b16 %v3473
      %v3545 = vpack.c.b16 %v3514, %v3513
      %v3546 = vpack.c.b16 %v3516, %v3515
      %v3547 = vpack.c.b16 %v3518, %v3517
      %v3548 = vpack.c.b16 %v3520, %v3519
      %v3549 = vpack.c.b16 %v3522, %v3521
      %v3550 = vpack.c.b16 %v3524, %v3523
      %v3551 = vpack.c.b16 %v3526, %v3525
      %v3552 = vpack.c.b16 %v3528, %v3527
      %v3553 = vpack.c.b16 %v3530, %v3529
      %v3554 = vpack.c.b16 %v3532, %v3531
      %v3555 = vpack.c.b16 %v3534, %v3533
      %v3556 = vpack.c.b16 %v3536, %v3535
      %v3557 = vpack.c.b16 %v3538, %v3537
      %v3558 = vpack.c.b16 %v3540, %v3539
      %v3559 = vpack.c.b16 %v3542, %v3541
      %v3560 = vpack.c.b16 %v3544, %v3543
      %3577 = vmatprep.subr.bf16.mxu0 0
      %3578 = vmatpush1.bf16.msra.mxu0 %v3545
      %3579 = vmatprep.subr.bf16.mxu0 0
      %3580 = vmatpush1.bf16.msra.mxu0 %v3546
      %3581 = vmatprep.subr.bf16.mxu0 0
      %3582 = vmatpush1.bf16.msra.mxu0 %v3547
      %3583 = vmatprep.subr.bf16.mxu0 0
      %3584 = vmatpush1.bf16.msra.mxu0 %v3548
      %3585 = vmatprep.subr.bf16.mxu0 0
      %3586 = vmatpush1.bf16.msra.mxu0 %v3549
      %3587 = vmatprep.subr.bf16.mxu0 0
      %3588 = vmatpush1.bf16.msra.mxu0 %v3550
      %3589 = vmatprep.subr.bf16.mxu0 0
      %3590 = vmatpush1.bf16.msra.mxu0 %v3551
      %3591 = vmatprep.subr.bf16.mxu0 0
      %3592 = vmatpush1.bf16.msra.mxu0 %v3552
      %3593 = vmatprep.subr.bf16.mxu0 0
      %3594 = vmatpush1.bf16.msra.mxu0 %v3553
      %3595 = vmatprep.subr.bf16.mxu0 0
      %3596 = vmatpush1.bf16.msra.mxu0 %v3554
      %3597 = vmatprep.subr.bf16.mxu0 0
      %3598 = vmatpush1.bf16.msra.mxu0 %v3555
      %3599 = vmatprep.subr.bf16.mxu0 0
      %3600 = vmatpush1.bf16.msra.mxu0 %v3556
      %3601 = vmatprep.subr.bf16.mxu0 0
      %3602 = vmatpush1.bf16.msra.mxu0 %v3557
      %3603 = vmatprep.subr.bf16.mxu0 0
      %3604 = vmatpush1.bf16.msra.mxu0 %v3558
      %3605 = vmatprep.subr.bf16.mxu0 0
      %3606 = vmatpush1.bf16.msra.mxu0 %v3559
      %3607 = vmatprep.subr.bf16.mxu0 0
      %3608 = vmatpush1.bf16.msra.mxu0 %v3560
      %3609 = vmatprep.mubr.bf16.mxu0 %v3441
      %3610 = vmatmul.mubr.bf16.gmra.mrb[0].mxu0 %v3440
      %v3611 = vpop.f32.mrb[0].mxu0
      %v3612 = vadd.f32 %v3479, %v3611
      %v3613 = vpop.f32.mrb[0].mxu0
      %v3614 = vpop.f32.mrb[0].mxu0
      %v3615 = vadd.f32 %v3479, %v3614
      %v3616 = vpop.f32.mrb[0].mxu0
      %3617 = vdwg.mxu0
      %v3618 = vadd.f32 %v3242, %v3612
      %v3619 = vadd.f32 %v3243, %v3615
      %p3620 = scmp.lt.s32.totalorder %s32, 1
      // Predicated region
      $region89: #{encoder_forward.7} parent=83 // pred_check
        %p3621 = pneg %p3620
      $region90: #{encoder_forward.7} parent=83 // pred_check_branch
        %3623 = sbr.rel (%p3621) target = $region92
      $region91: #{encoder_forward.7} parent=83 // pred_region
        %3624 = vst [vmem:[%s752] sm:$0xff] %v3618
        %3625 = vst [vmem:[%s752 + $0x8] sm:$0xff] %v3619
      $region92: #{encoder_forward.7} parent=83 // pred_fallthru
        _
      %p3626 = scmp.eq.s32.totalorder %s32, 1
      // Predicated region
      $region93: #{encoder_forward.7} parent=83 // pred_check
        %p3627 = pneg %p3626
      $region94: #{encoder_forward.7} parent=83 // pred_check_branch
        %3629 = sbr.rel (%p3627) target = $region96
      $region95: #{encoder_forward.7} parent=83 // pred_region
        %v3630 = vld [vmem:[%s14] sm:$0x1]
        %v3631 = vld [vmem:[%s15] sm:$0x1]
        %3632 = vadd.xlane.f32.xlu0 %v3618
        %v3633 = vpop.xlane.xlu0 %3632
        %3634 = vadd.xlane.f32.xlu0 %v3619
        %v3635 = vpop.xlane.xlu0 %3634
        %v3636 = vmul.f32 %v3633, %v773
        %v3637 = vmul.f32 %v3635, %v773
        %v3638 = vsub.f32 %v3618, %v3636
        %v3639 = vsub.f32 %v3619, %v3637
        %v3640 = vmul.f32 %v3638, %v3638
        %v3641 = vmul.f32 %v3639, %v3639
        %3642 = vadd.xlane.f32.xlu0 %v3640
        %v3643 = vpop.xlane.xlu0 %3642
        %3644 = vadd.xlane.f32.xlu0 %v3641
        %v3645 = vpop.xlane.xlu0 %3644
        %v3646 = vmul.f32 %v3643, %v773
        %v3647 = vmul.f32 %v3645, %v773
        %v3648 = vadd.f32 %v3646, 1e-12
        %v3649 = vadd.f32 %v3647, 1e-12
        %v3650 = vrsqrt.pop %v3648
        %v3651 = vrsqrt.pop %v3649
        %v3652 = vmul.f32 %v3638, %v3650
        %v3653 = vmul.f32 %v3639, %v3651
        %v3655 = vlaneseq
        %v3656 = vshrl.u32 %v3655, 7
        %v3657 = vsub.s32 0, %v3656
        %v3658 = vrot.slane %v3630, %v3657
        %v3660 = vmul.f32 %v3652, %v3658
        %v3661 = vmul.f32 %v3653, %v3658
        %v3663 = vlaneseq
        %v3664 = vshrl.u32 %v3663, 7
        %v3665 = vsub.s32 0, %v3664
        %v3666 = vrot.slane %v3631, %v3665
        %v3668 = vadd.f32 %v3660, %v3666
        %v3669 = vadd.f32 %v3661, %v3666
        %3670 = vst [vmem:[%s752] sm:$0xff] %v3668
        %3671 = vst [vmem:[%s752 + $0x8] sm:$0xff] %v3669
      $region96: #{encoder_forward.7} parent=83 // pred_fallthru
        _
      %s3672 = smul.u32 2, %s31
      %p3673 = scmp.lt.s32.totalorder %s3672, 1
      %s3674 = scalar_select %p3673, %s3672, 1
      %s3675 = smul.addr %s3674, 8
      %s3676 = scalar_lea.vmem %s16, %s3675
      // Predicated region
      $region97: #{encoder_forward.7} parent=83 // pred_check
        %p3677 = pneg %p463
      $region98: #{encoder_forward.7} parent=83 // pred_check_branch
        %3679 = sbr.rel (%p3677) target = $region100
      $region99: #{encoder_forward.7} parent=83 // pred_region
        %s3680 = smul.u32 2, %s31
      $region100: #{encoder_forward.7} parent=83 // pred_fallthru
        _
      // Predicated region
      $region101: #{encoder_forward.7} parent=83 // pred_check
        %p3681 = pneg %p463
      $region102: #{encoder_forward.7} parent=83 // pred_check_branch
        %3683 = sbr.rel (%p3681) target = $region104
      $region103: #{encoder_forward.7} parent=83 // pred_region
        %s3684 = smul.u32 2, %s31
        %p3685 = scmp.lt.s32.totalorder %s3684, 1
        %s3686 = scalar_select %p3685, %s3684, 1
        %s3687 = smul.addr %s3686, 8
        %s3688 = scalar_lea.vmem %s16, %s3687
      $region104: #{encoder_forward.7} parent=83 // pred_fallthru
        _
    $region84: #{encoder_forward.7} parent=5 // pred_fallthru
      _
    %p3689 = scmp.le.s32.totalorder 2, %s22
    // Predicated region
    $region105: #{encoder_forward.7} parent=5 // pred_check
      %p3690 = pneg %p3689
    $region106: #{encoder_forward.7} parent=5 // pred_check_branch
      %3692 = sbr.rel (%p3690) target = $region108
    $region107: #{encoder_forward.7} parent=5 // pred_region
      %s3693 = ssub.s32 %s22, 2
    $region108: #{encoder_forward.7} parent=5 // pred_fallthru
      _
  $region6: #{encoder_forward.7} parent=0 // loop_footer
    %s26 = sadd.s32 1, %s22
  $region7: #{encoder_forward.7} parent=0 // loop_footer_branch
    %21 = sbr.rel target = $region3
  $region8: #{encoder_forward.7} parent=0 // loop_exit
    _

</llo_original>
